<compile_context>
chip_gen: v7x
topology: tpu7x:2x2x1
jax: 0.10.0
libtpu: 0.0.40
codegen_flags: <defaults>
</compile_context>

<pallas_src>
import functools

import jax
import jax.numpy as jnp
from jax.experimental import pallas as pl
from jax.experimental.pallas import tpu as pltpu


# ----------------------------------------------------------------------------
# Pallas kernel: one grid step == TT timesteps of the 2-layer GRU recurrence.
# The `hidden` output block is resident across the (sequential) time grid axis
# and carries the recurrent state; masking implements pack_padded_sequence
# semantics (state frozen / output zeroed past each sequence's length).
# ----------------------------------------------------------------------------
def _gru_block_kernel(
    gi0_ref,    # (TT, B, 3H)  precomputed x @ W_ih^0 + b_ih^0  (layer-0 input gates)
    mask_ref,   # (TT, B, 1)   1.0 if t < length[b] else 0.0
    whh0_ref,   # (H, 3H)
    b0rz_ref,   # (1, 2H)      b_hh^0 for r,z
    b0hn_ref,   # (1, H)       b_hh^0 for n
    wih1_ref,   # (H, 3H)
    whh1_ref,   # (H, 3H)
    b1rz_ref,   # (1, 2H)      (b_ih^1 + b_hh^1) for r,z
    b1in_ref,   # (1, H)       b_ih^1 for n
    b1hn_ref,   # (1, H)       b_hh^1 for n
    out_ref,    # (TT, B, H)   GRU output (top layer)
    hid_ref,    # (2, B, H)    carried hidden state (resident across grid)
    *,
    hidden_dim: int,   # H (already padded to a multiple of 128)
    steps: int,        # TT
):
    H = hidden_dim

    @pl.when(pl.program_id(0) == 0)
    def _():
        # hidden=None in the PyTorch module -> zero initial state.
        hid_ref[...] = jnp.zeros_like(hid_ref)

    # Weights/biases: loaded once per grid step (constant index_maps -> resident).
    whh0 = whh0_ref[...]
    wih1 = wih1_ref[...]
    whh1 = whh1_ref[...]
    b0rz = b0rz_ref[...]
    b0hn = b0hn_ref[...]
    b1rz = b1rz_ref[...]
    b1in = b1in_ref[...]
    b1hn = b1hn_ref[...]

    def step(i, carry):
        h0, h1 = carry
        gi0 = gi0_ref[i]        # (B, 3H) — already includes x @ W_ih^0 + b_ih^0
        m = mask_ref[i]         # (B, 1)

        # ---- layer 0 (recurrent part only; input projection was hoisted) ----
        gh0 = jnp.dot(h0, whh0, preferred_element_type=jnp.float32)
        rz0 = jax.nn.sigmoid(gi0[:, :2 * H] + gh0[:, :2 * H] + b0rz)
        r0 = rz0[:, :H]
        z0 = rz0[:, H:]
        n0 = jnp.tanh(gi0[:, 2 * H:] + r0 * (gh0[:, 2 * H:] + b0hn))
        h0n = (1.0 - z0) * n0 + z0 * h0

        # ---- layer 1 (inter-layer dropout is identity in eval mode) ----
        gi1 = jnp.dot(h0n, wih1, preferred_element_type=jnp.float32)
        gh1 = jnp.dot(h1, whh1, preferred_element_type=jnp.float32)
        rz1 = jax.nn.sigmoid(gi1[:, :2 * H] + gh1[:, :2 * H] + b1rz)
        r1 = rz1[:, :H]
        z1 = rz1[:, H:]
        n1 = jnp.tanh(gi1[:, 2 * H:] + b1in + r1 * (gh1[:, 2 * H:] + b1hn))
        h1n = (1.0 - z1) * n1 + z1 * h1

        # Packed-sequence semantics: freeze state and zero output past length.
        h0u = jnp.where(m > 0, h0n, h0)
        h1u = jnp.where(m > 0, h1n, h1)
        out_ref[i] = (h1n * m).astype(out_ref.dtype)
        return (h0u, h1u)

    h0, h1 = hid_ref[0], hid_ref[1]
    h0, h1 = jax.lax.fori_loop(0, steps, step, (h0, h1), unroll=True)
    hid_ref[0] = h0
    hid_ref[1] = h1


# ----------------------------------------------------------------------------
# Wrapper: padding, gate-aligned weight layout, hoisted GI0, pallas_call.
# ----------------------------------------------------------------------------
def _round_up(x, m):
    return (x + m - 1) // m * m


def _pad_gates(w, h, h_pad, in_pad=None):
    """(in_dim, 3h) -> (in_pad, 3*h_pad); each gate block starts at k*h_pad."""
    in_dim = w.shape[0]
    if in_pad is None:
        in_pad = in_dim
    out = jnp.zeros((in_pad, 3 * h_pad), w.dtype)
    for g in range(3):
        out = out.at[:in_dim, g * h_pad:g * h_pad + h].set(w[:, g * h:(g + 1) * h])
    return out


def encoder_forward(tokens, lengths, params, *, time_block=8):
    """tokens: (T, B) int32, lengths: (B,) int32 (sorted descending, matching
    pack_padded_sequence's default enforce_sorted=True).
    Returns (outputs (T, B, H), hidden (2, B, H))."""
    T, B = tokens.shape
    emb_tbl = params["embedding"]
    E = emb_tbl.shape[1]
    H = params["whh0"].shape[0]

    B_pad = _round_up(max(B, 8), 8)          # sublane multiple
    H_pad = _round_up(max(H, 128), 128)      # lane multiple -> aligned gate slices
    TT = time_block
    T_pad = _round_up(T, TT)

    # Gate-aligned padded weights/biases (zeros in padded rows/cols keep the
    # padded hidden lanes exactly zero through the recurrence).
    wih0 = _pad_gates(params["wih0"], H, H_pad)                 # (E, 3H_pad)
    whh0 = _pad_gates(params["whh0"], H, H_pad, H_pad)          # (H_pad, 3H_pad)
    wih1 = _pad_gates(params["wih1"], H, H_pad, H_pad)
    whh1 = _pad_gates(params["whh1"], H, H_pad, H_pad)
    bih0 = _pad_gates(params["bih0"], H, H_pad)                 # (1, 3H_pad)
    bhh0 = _pad_gates(params["bhh0"], H, H_pad)
    bih1 = _pad_gates(params["bih1"], H, H_pad)
    bhh1 = _pad_gates(params["bhh1"], H, H_pad)

    # Merged biases (b_ih^0 is folded into the hoisted GI0 below).
    b0_rz = bhh0[:, :2 * H_pad]
    b0_hn = bhh0[:, 2 * H_pad:]
    b1_rz = (bih1 + bhh1)[:, :2 * H_pad]
    b1_in = bih1[:, 2 * H_pad:]
    b1_hn = bhh1[:, 2 * H_pad:]

    # Pad tokens / lengths (padded batch rows get length 0 -> frozen zero state).
    tok_p = jnp.zeros((T_pad, B_pad), tokens.dtype).at[:T, :B].set(tokens)
    len_p = jnp.zeros((B_pad,), lengths.dtype).at[:B].set(lengths)

    # Hoisted layer-0 input projection: embedding gather + dropout(identity in
    # eval) + one big (T*B, E) x (E, 3H) matmul at full MXU utilization.
    emb = emb_tbl[tok_p]                                            # (T_pad, B_pad, E)
    gi0 = (emb.reshape(T_pad * B_pad, E) @ wih0 + bih0)
    gi0 = gi0.reshape(T_pad, B_pad, 3 * H_pad).astype(jnp.float32)

    # Validity mask (pack_padded_sequence semantics); padded T / B rows are 0.
    mask = (jnp.arange(T_pad, dtype=jnp.int32)[:, None] < len_p[None, :])
    mask = mask.astype(jnp.float32)[..., None]                       # (T_pad, B_pad, 1)

    kernel = functools.partial(_gru_block_kernel, hidden_dim=H_pad, steps=TT)
    const = lambda shape: pl.BlockSpec(shape, lambda t: (0,) * len(shape))

    outputs, hidden = pl.pallas_call(
        kernel,
        out_shape=(
            jax.ShapeDtypeStruct((T_pad, B_pad, H_pad), jnp.float32),
            jax.ShapeDtypeStruct((2, B_pad, H_pad), jnp.float32),
        ),
        grid_spec=pltpu.PrefetchScalarGridSpec(
            num_scalar_prefetch=0,
            grid=(T_pad // TT,),
            in_specs=[
                pl.BlockSpec((TT, B_pad, 3 * H_pad), lambda t: (t, 0, 0)),  # gi0[t-block]
                pl.BlockSpec((TT, B_pad, 1), lambda t: (t, 0, 0)),          # mask[t-block]
                const((H_pad, 3 * H_pad)),   # whh0  (resident)
                const((1, 2 * H_pad)),       # b0_rz
                const((1, H_pad)),           # b0_hn
                const((H_pad, 3 * H_pad)),   # wih1  (resident)
                const((H_pad, 3 * H_pad)),   # whh1  (resident)
                const((1, 2 * H_pad)),       # b1_rz
                const((1, H_pad)),           # b1_in
                const((1, H_pad)),           # b1_hn
            ],
            out_specs=(
                pl.BlockSpec((TT, B_pad, H_pad), lambda t: (t, 0, 0)),   # outputs
                pl.BlockSpec((2, B_pad, H_pad), lambda t: (0, 0, 0)),    # hidden (resident)
            ),
        ),
        compiler_params=pltpu.CompilerParams(
            dimension_semantics=("arbitrary",),       # time axis carries state
            vmem_limit_bytes=48 * 1024 * 1024,        # safe on v5e/v6e/v7x
        ),
    )(gi0, mask, whh0, b0_rz, b0_hn, wih1, whh1, b1_rz, b1_in, b1_hn)

    return outputs[:T, :B, :H], hidden[:, :B, :H]


# ----------------------------------------------------------------------------
# Pure-JAX reference (lax.scan) for correctness checking.
# ----------------------------------------------------------------------------
def encoder_reference(tokens, lengths, params):
    emb = params["embedding"][tokens]                             # (T, B, E)
    T, B, _ = emb.shape
    H = params["whh0"].shape[0]
    mask = (jnp.arange(T)[:, None] < lengths[None, :]).astype(jnp.float32)[..., None]

    def cell(x, h, wih, whh, bih, bhh):
        gi = x @ wih + bih
        gh = h @ whh + bhh
        i_r, i_z, i_n = jnp.split(gi, 3, axis=-1)
        h_r, h_z, h_n = jnp.split(gh, 3, axis=-1)
        r = jax.nn.sigmoid(i_r + h_r)
        z = jax.nn.sigmoid(i_z + h_z)
        n = jnp.tanh(i_n + r * h_n)
        return (1.0 - z) * n + z * h

    def step(carry, xm):
        h0, h1 = carry
        x, m = xm
        h0n = cell(x, h0, params["wih0"], params["whh0"], params["bih0"], params["bhh0"])
        h1n = cell(h0n, h1, params["wih1"], params["whh1"], params["bih1"], params["bhh1"])
        h0u = jnp.where(m > 0, h0n, h0)
        h1u = jnp.where(m > 0, h1n, h1)
        return (h0u, h1u), h1n * m

    init = (jnp.zeros((B, H), jnp.float32), jnp.zeros((B, H), jnp.float32))
    (h0f, h1f), outs = jax.lax.scan(step, init, (emb, mask))
    return outs, jnp.stack([h0f, h1f], axis=0)


if __name__ == "__main__":
    # Small deterministic problem: vocab=16, E=32, H=32, num_layers=2, T=8, B=4.
    INPUT_DIM, E, H = 16, 32, 32
    T, B = 8, 4

    key = jax.random.PRNGKey(0)
    keys = jax.random.split(key, 12)
    scale = 0.1

    params = {
        "embedding": scale * jax.random.normal(keys[0], (INPUT_DIM, E), jnp.float32),
        "wih0": scale * jax.random.normal(keys[1], (E, 3 * H), jnp.float32),
        "whh0": scale * jax.random.normal(keys[2], (H, 3 * H), jnp.float32),
        "bih0": scale * jax.random.normal(keys[3], (1, 3 * H), jnp.float32),
        "bhh0": scale * jax.random.normal(keys[4], (1, 3 * H), jnp.float32),
        "wih1": scale * jax.random.normal(keys[5], (H, 3 * H), jnp.float32),
        "whh1": scale * jax.random.normal(keys[6], (H, 3 * H), jnp.float32),
        "bih1": scale * jax.random.normal(keys[7], (1, 3 * H), jnp.float32),
        "bhh1": scale * jax.random.normal(keys[8], (1, 3 * H), jnp.float32),
    }

    tokens = jax.random.randint(keys[9], (T, B), 0, INPUT_DIM, dtype=jnp.int32)
    # pack_padded_sequence expects lengths sorted descending by default.
    lengths = jnp.array([8, 7, 5, 3], dtype=jnp.int32)

    outputs, hidden = jax.block_until_ready(encoder_forward(tokens, lengths, params))
    ref_out, ref_hid = jax.block_until_ready(encoder_reference(tokens, lengths, params))

    assert outputs.shape == (T, B, H) and hidden.shape == (2, B, H)
    assert jnp.allclose(outputs, ref_out, atol=1e-4), "outputs mismatch"
    assert jnp.allclose(hidden, ref_hid, atol=1e-4), "hidden mismatch"

    print("KERNEL_OK")
</pallas_src>

<mosaic_0001>
module attributes {stable_mosaic.version = 11 : i64} {
  func.func @_gru_block_kernel(%arg0: i32, %arg1: memref<8x8x384xf32, #tpu.memory_space<vmem>>, %arg2: memref<8x8x1xf32, #tpu.memory_space<vmem>>, %arg3: memref<128x384xf32, #tpu.memory_space<vmem>>, %arg4: memref<1x256xf32, #tpu.memory_space<vmem>>, %arg5: memref<1x128xf32, #tpu.memory_space<vmem>>, %arg6: memref<128x384xf32, #tpu.memory_space<vmem>>, %arg7: memref<128x384xf32, #tpu.memory_space<vmem>>, %arg8: memref<1x256xf32, #tpu.memory_space<vmem>>, %arg9: memref<1x128xf32, #tpu.memory_space<vmem>>, %arg10: memref<1x128xf32, #tpu.memory_space<vmem>>, %arg11: memref<8x8x128xf32, #tpu.memory_space<vmem>>, %arg12: memref<2x8x128xf32, #tpu.memory_space<vmem>>) attributes {dimension_semantics = [#tpu.dimension_semantics<arbitrary>], iteration_bounds = array<i64: 1>, scalar_prefetch = 0 : i64, scratch_operands = 0 : i64, tpu.core_type = #tpu.core_type<tc>, window_params = [{transform_indices = @transform_0, window_bounds = array<i64: 8, 8, 384>}, {transform_indices = @transform_1, window_bounds = array<i64: 8, 8, 1>}, {pipeline_mode = #tpu.pipeline_mode<synchronous>, transform_indices = @transform_2, window_bounds = array<i64: 128, 384>}, {pipeline_mode = #tpu.pipeline_mode<synchronous>, transform_indices = @transform_3, window_bounds = array<i64: 1, 256>}, {pipeline_mode = #tpu.pipeline_mode<synchronous>, transform_indices = @transform_4, window_bounds = array<i64: 1, 128>}, {pipeline_mode = #tpu.pipeline_mode<synchronous>, transform_indices = @transform_5, window_bounds = array<i64: 128, 384>}, {pipeline_mode = #tpu.pipeline_mode<synchronous>, transform_indices = @transform_6, window_bounds = array<i64: 128, 384>}, {pipeline_mode = #tpu.pipeline_mode<synchronous>, transform_indices = @transform_7, window_bounds = array<i64: 1, 256>}, {pipeline_mode = #tpu.pipeline_mode<synchronous>, transform_indices = @transform_8, window_bounds = array<i64: 1, 128>}, {pipeline_mode = #tpu.pipeline_mode<synchronous>, transform_indices = @transform_9, window_bounds = array<i64: 1, 128>}, {transform_indices = @transform_10, window_bounds = array<i64: 8, 8, 128>}, {pipeline_mode = #tpu.pipeline_mode<synchronous>, transform_indices = @transform_11, window_bounds = array<i64: 2, 8, 128>}]} {
    %c0_i32 = arith.constant 0 : i32
    %0 = arith.cmpi eq, %arg0, %c0_i32 : i32
    %1 = arith.extui %0 : i1 to i32
    %c0_i32_0 = arith.constant 0 : i32
    %2 = arith.cmpi ne, %1, %c0_i32_0 : i32
    scf.if %2 {
      %cst_147 = arith.constant 0.000000e+00 : f32
      %621 = vector.broadcast %cst_147 : f32 to vector<2x8x128xf32>
      %c0_148 = arith.constant 0 : index
      %c0_149 = arith.constant 0 : index
      %c0_150 = arith.constant 0 : index
      %622 = vector.load %arg12[%c0_148, %c0_149, %c0_150] : memref<2x8x128xf32, #tpu.memory_space<vmem>>, vector<2x8x128xf32>
      tpu.vector_store %arg12[%c0_148, %c0_149, %c0_150], %621 {strides = array<i32>} : memref<2x8x128xf32, #tpu.memory_space<vmem>>, vector<2x8x128xf32>,
    } else {
    }
    %c0 = arith.constant 0 : index
    %c0_1 = arith.constant 0 : index
    %3 = vector.load %arg3[%c0, %c0_1] : memref<128x384xf32, #tpu.memory_space<vmem>>, vector<128x384xf32>
    %c0_2 = arith.constant 0 : index
    %c0_3 = arith.constant 0 : index
    %4 = vector.load %arg6[%c0_2, %c0_3] : memref<128x384xf32, #tpu.memory_space<vmem>>, vector<128x384xf32>
    %c0_4 = arith.constant 0 : index
    %c0_5 = arith.constant 0 : index
    %5 = vector.load %arg7[%c0_4, %c0_5] : memref<128x384xf32, #tpu.memory_space<vmem>>, vector<128x384xf32>
    %c0_6 = arith.constant 0 : index
    %c0_7 = arith.constant 0 : index
    %6 = vector.load %arg4[%c0_6, %c0_7] : memref<1x256xf32, #tpu.memory_space<vmem>>, vector<1x256xf32>
    %c0_8 = arith.constant 0 : index
    %c0_9 = arith.constant 0 : index
    %7 = vector.load %arg5[%c0_8, %c0_9] : memref<1x128xf32, #tpu.memory_space<vmem>>, vector<1x128xf32>
    %c0_10 = arith.constant 0 : index
    %c0_11 = arith.constant 0 : index
    %8 = vector.load %arg8[%c0_10, %c0_11] : memref<1x256xf32, #tpu.memory_space<vmem>>, vector<1x256xf32>
    %c0_12 = arith.constant 0 : index
    %c0_13 = arith.constant 0 : index
    %9 = vector.load %arg9[%c0_12, %c0_13] : memref<1x128xf32, #tpu.memory_space<vmem>>, vector<1x128xf32>
    %c0_14 = arith.constant 0 : index
    %c0_15 = arith.constant 0 : index
    %10 = vector.load %arg10[%c0_14, %c0_15] : memref<1x128xf32, #tpu.memory_space<vmem>>, vector<1x128xf32>
    %c0_16 = arith.constant 0 : index
    %c0_17 = arith.constant 0 : index
    %c0_18 = arith.constant 0 : index
    %11 = vector.load %arg12[%c0_16, %c0_17, %c0_18] : memref<2x8x128xf32, #tpu.memory_space<vmem>>, vector<1x8x128xf32>
    %12 = vector.shape_cast %11 : vector<1x8x128xf32> to vector<8x128xf32>
    %c1 = arith.constant 1 : index
    %c0_19 = arith.constant 0 : index
    %c0_20 = arith.constant 0 : index
    %13 = vector.load %arg12[%c1, %c0_19, %c0_20] : memref<2x8x128xf32, #tpu.memory_space<vmem>>, vector<1x8x128xf32>
    %14 = vector.shape_cast %13 : vector<1x8x128xf32> to vector<8x128xf32>
    %c0_i32_21 = arith.constant 0 : i32
    %15 = arith.index_cast %c0_i32_21 : i32 to index
    %c0_22 = arith.constant 0 : index
    %c0_23 = arith.constant 0 : index
    %16 = vector.load %arg1[%15, %c0_22, %c0_23] : memref<8x8x384xf32, #tpu.memory_space<vmem>>, vector<1x8x384xf32>
    %17 = vector.shape_cast %16 : vector<1x8x384xf32> to vector<8x384xf32>
    %18 = arith.index_cast %c0_i32_21 : i32 to index
    %c0_24 = arith.constant 0 : index
    %c0_25 = arith.constant 0 : index
    %19 = vector.load %arg2[%18, %c0_24, %c0_25] : memref<8x8x1xf32, #tpu.memory_space<vmem>>, vector<1x8x1xf32>
    %20 = vector.shape_cast %19 : vector<1x8x1xf32> to vector<8x1xf32>
    %cst = arith.constant dense<0.000000e+00> : vector<8x384xf32>
    %21 = tpu.matmul %12, %3, %cst {dimension_numbers = #tpu.dot_dimension_numbers<[1], [0], [0], [1], [0, 0, 1, 1], [], []>} : vector<8x128xf32>, vector<128x384xf32>, vector<8x384xf32> -> vector<8x384xf32>
    %22 = vector.extract_strided_slice %17 {offsets = [0, 0], sizes = [8, 256], strides = [1, 1]} : vector<8x384xf32> to vector<8x256xf32>
    %23 = vector.extract_strided_slice %21 {offsets = [0, 0], sizes = [8, 256], strides = [1, 1]} : vector<8x384xf32> to vector<8x256xf32>
    %24 = arith.addf %22, %23 : vector<8x256xf32>
    %25 = vector.broadcast %6 : vector<1x256xf32> to vector<8x256xf32>
    %26 = arith.addf %24, %25 : vector<8x256xf32>
    %27 = arith.negf %26 : vector<8x256xf32>
    %28 = math.exp %27 : vector<8x256xf32>
    %cst_26 = arith.constant 1.000000e+00 : f32
    %29 = vector.broadcast %cst_26 : f32 to vector<8x256xf32>
    %30 = arith.addf %29, %28 : vector<8x256xf32>
    %31 = arith.divf %29, %30 : vector<8x256xf32>
    %32 = vector.extract_strided_slice %31 {offsets = [0, 0], sizes = [8, 128], strides = [1, 1]} : vector<8x256xf32> to vector<8x128xf32>
    %33 = vector.extract_strided_slice %31 {offsets = [0, 128], sizes = [8, 128], strides = [1, 1]} : vector<8x256xf32> to vector<8x128xf32>
    %34 = vector.extract_strided_slice %17 {offsets = [0, 256], sizes = [8, 128], strides = [1, 1]} : vector<8x384xf32> to vector<8x128xf32>
    %35 = vector.extract_strided_slice %21 {offsets = [0, 256], sizes = [8, 128], strides = [1, 1]} : vector<8x384xf32> to vector<8x128xf32>
    %36 = vector.broadcast %7 : vector<1x128xf32> to vector<8x128xf32>
    %37 = arith.addf %35, %36 : vector<8x128xf32>
    %38 = arith.mulf %32, %37 : vector<8x128xf32>
    %39 = arith.addf %34, %38 : vector<8x128xf32>
    %40 = math.tanh %39 : vector<8x128xf32>
    %cst_27 = arith.constant 1.000000e+00 : f32
    %41 = vector.broadcast %cst_27 : f32 to vector<8x128xf32>
    %42 = arith.subf %41, %33 : vector<8x128xf32>
    %43 = arith.mulf %42, %40 : vector<8x128xf32>
    %44 = arith.mulf %33, %12 : vector<8x128xf32>
    %45 = arith.addf %43, %44 : vector<8x128xf32>
    %cst_28 = arith.constant dense<0.000000e+00> : vector<8x384xf32>
    %46 = tpu.matmul %45, %4, %cst_28 {dimension_numbers = #tpu.dot_dimension_numbers<[1], [0], [0], [1], [0, 0, 1, 1], [], []>} : vector<8x128xf32>, vector<128x384xf32>, vector<8x384xf32> -> vector<8x384xf32>
    %cst_29 = arith.constant dense<0.000000e+00> : vector<8x384xf32>
    %47 = tpu.matmul %14, %5, %cst_29 {dimension_numbers = #tpu.dot_dimension_numbers<[1], [0], [0], [1], [0, 0, 1, 1], [], []>} : vector<8x128xf32>, vector<128x384xf32>, vector<8x384xf32> -> vector<8x384xf32>
    %48 = vector.extract_strided_slice %46 {offsets = [0, 0], sizes = [8, 256], strides = [1, 1]} : vector<8x384xf32> to vector<8x256xf32>
    %49 = vector.extract_strided_slice %47 {offsets = [0, 0], sizes = [8, 256], strides = [1, 1]} : vector<8x384xf32> to vector<8x256xf32>
    %50 = arith.addf %48, %49 : vector<8x256xf32>
    %51 = vector.broadcast %8 : vector<1x256xf32> to vector<8x256xf32>
    %52 = arith.addf %50, %51 : vector<8x256xf32>
    %53 = arith.negf %52 : vector<8x256xf32>
    %54 = math.exp %53 : vector<8x256xf32>
    %cst_30 = arith.constant 1.000000e+00 : f32
    %55 = vector.broadcast %cst_30 : f32 to vector<8x256xf32>
    %56 = arith.addf %55, %54 : vector<8x256xf32>
    %57 = arith.divf %55, %56 : vector<8x256xf32>
    %58 = vector.extract_strided_slice %57 {offsets = [0, 0], sizes = [8, 128], strides = [1, 1]} : vector<8x256xf32> to vector<8x128xf32>
    %59 = vector.extract_strided_slice %57 {offsets = [0, 128], sizes = [8, 128], strides = [1, 1]} : vector<8x256xf32> to vector<8x128xf32>
    %60 = vector.extract_strided_slice %46 {offsets = [0, 256], sizes = [8, 128], strides = [1, 1]} : vector<8x384xf32> to vector<8x128xf32>
    %61 = vector.broadcast %9 : vector<1x128xf32> to vector<8x128xf32>
    %62 = arith.addf %60, %61 : vector<8x128xf32>
    %63 = vector.extract_strided_slice %47 {offsets = [0, 256], sizes = [8, 128], strides = [1, 1]} : vector<8x384xf32> to vector<8x128xf32>
    %64 = vector.broadcast %10 : vector<1x128xf32> to vector<8x128xf32>
    %65 = arith.addf %63, %64 : vector<8x128xf32>
    %66 = arith.mulf %58, %65 : vector<8x128xf32>
    %67 = arith.addf %62, %66 : vector<8x128xf32>
    %68 = math.tanh %67 : vector<8x128xf32>
    %cst_31 = arith.constant 1.000000e+00 : f32
    %69 = vector.broadcast %cst_31 : f32 to vector<8x128xf32>
    %70 = arith.subf %69, %59 : vector<8x128xf32>
    %71 = arith.mulf %70, %68 : vector<8x128xf32>
    %72 = arith.mulf %59, %14 : vector<8x128xf32>
    %73 = arith.addf %71, %72 : vector<8x128xf32>
    %cst_32 = arith.constant 0.000000e+00 : f32
    %74 = vector.broadcast %cst_32 : f32 to vector<8x1xf32>
    %75 = arith.cmpf ogt, %20, %74 : vector<8x1xf32>
    %76 = vector.shape_cast %75 : vector<8x1xi1> to vector<8x1xi1>
    %77 = vector.broadcast %76 : vector<8x1xi1> to vector<8x128xi1>
    %78 = arith.select %77, %45, %12 : vector<8x128xi1>, vector<8x128xf32>
    %cst_33 = arith.constant 0.000000e+00 : f32
    %79 = vector.broadcast %cst_33 : f32 to vector<8x1xf32>
    %80 = arith.cmpf ogt, %20, %79 : vector<8x1xf32>
    %81 = vector.shape_cast %80 : vector<8x1xi1> to vector<8x1xi1>
    %82 = vector.broadcast %81 : vector<8x1xi1> to vector<8x128xi1>
    %83 = arith.select %82, %73, %14 : vector<8x128xi1>, vector<8x128xf32>
    %84 = vector.broadcast %20 : vector<8x1xf32> to vector<8x128xf32>
    %85 = arith.mulf %73, %84 : vector<8x128xf32>
    %86 = arith.index_cast %c0_i32_21 : i32 to index
    %c0_34 = arith.constant 0 : index
    %c0_35 = arith.constant 0 : index
    %87 = vector.load %arg11[%86, %c0_34, %c0_35] : memref<8x8x128xf32, #tpu.memory_space<vmem>>, vector<1x8x128xf32>
    %88 = vector.shape_cast %87 : vector<1x8x128xf32> to vector<8x128xf32>
    %89 = vector.shape_cast %85 : vector<8x128xf32> to vector<1x8x128xf32>
    tpu.vector_store %arg11[%86, %c0_34, %c0_35], %89 {strides = array<i32>} : memref<8x8x128xf32, #tpu.memory_space<vmem>>, vector<1x8x128xf32>,
    %c1_i32 = arith.constant 1 : i32
    %90 = arith.index_cast %c1_i32 : i32 to index
    %c0_36 = arith.constant 0 : index
    %c0_37 = arith.constant 0 : index
    %91 = vector.load %arg1[%90, %c0_36, %c0_37] : memref<8x8x384xf32, #tpu.memory_space<vmem>>, vector<1x8x384xf32>
    %92 = vector.shape_cast %91 : vector<1x8x384xf32> to vector<8x384xf32>
    %93 = arith.index_cast %c1_i32 : i32 to index
    %c0_38 = arith.constant 0 : index
    %c0_39 = arith.constant 0 : index
    %94 = vector.load %arg2[%93, %c0_38, %c0_39] : memref<8x8x1xf32, #tpu.memory_space<vmem>>, vector<1x8x1xf32>
    %95 = vector.shape_cast %94 : vector<1x8x1xf32> to vector<8x1xf32>
    %cst_40 = arith.constant dense<0.000000e+00> : vector<8x384xf32>
    %96 = tpu.matmul %78, %3, %cst_40 {dimension_numbers = #tpu.dot_dimension_numbers<[1], [0], [0], [1], [0, 0, 1, 1], [], []>} : vector<8x128xf32>, vector<128x384xf32>, vector<8x384xf32> -> vector<8x384xf32>
    %97 = vector.extract_strided_slice %92 {offsets = [0, 0], sizes = [8, 256], strides = [1, 1]} : vector<8x384xf32> to vector<8x256xf32>
    %98 = vector.extract_strided_slice %96 {offsets = [0, 0], sizes = [8, 256], strides = [1, 1]} : vector<8x384xf32> to vector<8x256xf32>
    %99 = arith.addf %97, %98 : vector<8x256xf32>
    %100 = vector.broadcast %6 : vector<1x256xf32> to vector<8x256xf32>
    %101 = arith.addf %99, %100 : vector<8x256xf32>
    %102 = arith.negf %101 : vector<8x256xf32>
    %103 = math.exp %102 : vector<8x256xf32>
    %cst_41 = arith.constant 1.000000e+00 : f32
    %104 = vector.broadcast %cst_41 : f32 to vector<8x256xf32>
    %105 = arith.addf %104, %103 : vector<8x256xf32>
    %106 = arith.divf %104, %105 : vector<8x256xf32>
    %107 = vector.extract_strided_slice %106 {offsets = [0, 0], sizes = [8, 128], strides = [1, 1]} : vector<8x256xf32> to vector<8x128xf32>
    %108 = vector.extract_strided_slice %106 {offsets = [0, 128], sizes = [8, 128], strides = [1, 1]} : vector<8x256xf32> to vector<8x128xf32>
    %109 = vector.extract_strided_slice %92 {offsets = [0, 256], sizes = [8, 128], strides = [1, 1]} : vector<8x384xf32> to vector<8x128xf32>
    %110 = vector.extract_strided_slice %96 {offsets = [0, 256], sizes = [8, 128], strides = [1, 1]} : vector<8x384xf32> to vector<8x128xf32>
    %111 = vector.broadcast %7 : vector<1x128xf32> to vector<8x128xf32>
    %112 = arith.addf %110, %111 : vector<8x128xf32>
    %113 = arith.mulf %107, %112 : vector<8x128xf32>
    %114 = arith.addf %109, %113 : vector<8x128xf32>
    %115 = math.tanh %114 : vector<8x128xf32>
    %cst_42 = arith.constant 1.000000e+00 : f32
    %116 = vector.broadcast %cst_42 : f32 to vector<8x128xf32>
    %117 = arith.subf %116, %108 : vector<8x128xf32>
    %118 = arith.mulf %117, %115 : vector<8x128xf32>
    %119 = arith.mulf %108, %78 : vector<8x128xf32>
    %120 = arith.addf %118, %119 : vector<8x128xf32>
    %cst_43 = arith.constant dense<0.000000e+00> : vector<8x384xf32>
    %121 = tpu.matmul %120, %4, %cst_43 {dimension_numbers = #tpu.dot_dimension_numbers<[1], [0], [0], [1], [0, 0, 1, 1], [], []>} : vector<8x128xf32>, vector<128x384xf32>, vector<8x384xf32> -> vector<8x384xf32>
    %cst_44 = arith.constant dense<0.000000e+00> : vector<8x384xf32>
    %122 = tpu.matmul %83, %5, %cst_44 {dimension_numbers = #tpu.dot_dimension_numbers<[1], [0], [0], [1], [0, 0, 1, 1], [], []>} : vector<8x128xf32>, vector<128x384xf32>, vector<8x384xf32> -> vector<8x384xf32>
    %123 = vector.extract_strided_slice %121 {offsets = [0, 0], sizes = [8, 256], strides = [1, 1]} : vector<8x384xf32> to vector<8x256xf32>
    %124 = vector.extract_strided_slice %122 {offsets = [0, 0], sizes = [8, 256], strides = [1, 1]} : vector<8x384xf32> to vector<8x256xf32>
    %125 = arith.addf %123, %124 : vector<8x256xf32>
    %126 = vector.broadcast %8 : vector<1x256xf32> to vector<8x256xf32>
    %127 = arith.addf %125, %126 : vector<8x256xf32>
    %128 = arith.negf %127 : vector<8x256xf32>
    %129 = math.exp %128 : vector<8x256xf32>
    %cst_45 = arith.constant 1.000000e+00 : f32
    %130 = vector.broadcast %cst_45 : f32 to vector<8x256xf32>
    %131 = arith.addf %130, %129 : vector<8x256xf32>
    %132 = arith.divf %130, %131 : vector<8x256xf32>
    %133 = vector.extract_strided_slice %132 {offsets = [0, 0], sizes = [8, 128], strides = [1, 1]} : vector<8x256xf32> to vector<8x128xf32>
    %134 = vector.extract_strided_slice %132 {offsets = [0, 128], sizes = [8, 128], strides = [1, 1]} : vector<8x256xf32> to vector<8x128xf32>
    %135 = vector.extract_strided_slice %121 {offsets = [0, 256], sizes = [8, 128], strides = [1, 1]} : vector<8x384xf32> to vector<8x128xf32>
    %136 = vector.broadcast %9 : vector<1x128xf32> to vector<8x128xf32>
    %137 = arith.addf %135, %136 : vector<8x128xf32>
    %138 = vector.extract_strided_slice %122 {offsets = [0, 256], sizes = [8, 128], strides = [1, 1]} : vector<8x384xf32> to vector<8x128xf32>
    %139 = vector.broadcast %10 : vector<1x128xf32> to vector<8x128xf32>
    %140 = arith.addf %138, %139 : vector<8x128xf32>
    %141 = arith.mulf %133, %140 : vector<8x128xf32>
    %142 = arith.addf %137, %141 : vector<8x128xf32>
    %143 = math.tanh %142 : vector<8x128xf32>
    %cst_46 = arith.constant 1.000000e+00 : f32
    %144 = vector.broadcast %cst_46 : f32 to vector<8x128xf32>
    %145 = arith.subf %144, %134 : vector<8x128xf32>
    %146 = arith.mulf %145, %143 : vector<8x128xf32>
    %147 = arith.mulf %134, %83 : vector<8x128xf32>
    %148 = arith.addf %146, %147 : vector<8x128xf32>
    %cst_47 = arith.constant 0.000000e+00 : f32
    %149 = vector.broadcast %cst_47 : f32 to vector<8x1xf32>
    %150 = arith.cmpf ogt, %95, %149 : vector<8x1xf32>
    %151 = vector.shape_cast %150 : vector<8x1xi1> to vector<8x1xi1>
    %152 = vector.broadcast %151 : vector<8x1xi1> to vector<8x128xi1>
    %153 = arith.select %152, %120, %78 : vector<8x128xi1>, vector<8x128xf32>
    %cst_48 = arith.constant 0.000000e+00 : f32
    %154 = vector.broadcast %cst_48 : f32 to vector<8x1xf32>
    %155 = arith.cmpf ogt, %95, %154 : vector<8x1xf32>
    %156 = vector.shape_cast %155 : vector<8x1xi1> to vector<8x1xi1>
    %157 = vector.broadcast %156 : vector<8x1xi1> to vector<8x128xi1>
    %158 = arith.select %157, %148, %83 : vector<8x128xi1>, vector<8x128xf32>
    %159 = vector.broadcast %95 : vector<8x1xf32> to vector<8x128xf32>
    %160 = arith.mulf %148, %159 : vector<8x128xf32>
    %161 = arith.index_cast %c1_i32 : i32 to index
    %c0_49 = arith.constant 0 : index
    %c0_50 = arith.constant 0 : index
    %162 = vector.load %arg11[%161, %c0_49, %c0_50] : memref<8x8x128xf32, #tpu.memory_space<vmem>>, vector<1x8x128xf32>
    %163 = vector.shape_cast %162 : vector<1x8x128xf32> to vector<8x128xf32>
    %164 = vector.shape_cast %160 : vector<8x128xf32> to vector<1x8x128xf32>
    tpu.vector_store %arg11[%161, %c0_49, %c0_50], %164 {strides = array<i32>} : memref<8x8x128xf32, #tpu.memory_space<vmem>>, vector<1x8x128xf32>,
    %c2_i32 = arith.constant 2 : i32
    %165 = arith.index_cast %c2_i32 : i32 to index
    %c0_51 = arith.constant 0 : index
    %c0_52 = arith.constant 0 : index
    %166 = vector.load %arg1[%165, %c0_51, %c0_52] : memref<8x8x384xf32, #tpu.memory_space<vmem>>, vector<1x8x384xf32>
    %167 = vector.shape_cast %166 : vector<1x8x384xf32> to vector<8x384xf32>
    %168 = arith.index_cast %c2_i32 : i32 to index
    %c0_53 = arith.constant 0 : index
    %c0_54 = arith.constant 0 : index
    %169 = vector.load %arg2[%168, %c0_53, %c0_54] : memref<8x8x1xf32, #tpu.memory_space<vmem>>, vector<1x8x1xf32>
    %170 = vector.shape_cast %169 : vector<1x8x1xf32> to vector<8x1xf32>
    %cst_55 = arith.constant dense<0.000000e+00> : vector<8x384xf32>
    %171 = tpu.matmul %153, %3, %cst_55 {dimension_numbers = #tpu.dot_dimension_numbers<[1], [0], [0], [1], [0, 0, 1, 1], [], []>} : vector<8x128xf32>, vector<128x384xf32>, vector<8x384xf32> -> vector<8x384xf32>
    %172 = vector.extract_strided_slice %167 {offsets = [0, 0], sizes = [8, 256], strides = [1, 1]} : vector<8x384xf32> to vector<8x256xf32>
    %173 = vector.extract_strided_slice %171 {offsets = [0, 0], sizes = [8, 256], strides = [1, 1]} : vector<8x384xf32> to vector<8x256xf32>
    %174 = arith.addf %172, %173 : vector<8x256xf32>
    %175 = vector.broadcast %6 : vector<1x256xf32> to vector<8x256xf32>
    %176 = arith.addf %174, %175 : vector<8x256xf32>
    %177 = arith.negf %176 : vector<8x256xf32>
    %178 = math.exp %177 : vector<8x256xf32>
    %cst_56 = arith.constant 1.000000e+00 : f32
    %179 = vector.broadcast %cst_56 : f32 to vector<8x256xf32>
    %180 = arith.addf %179, %178 : vector<8x256xf32>
    %181 = arith.divf %179, %180 : vector<8x256xf32>
    %182 = vector.extract_strided_slice %181 {offsets = [0, 0], sizes = [8, 128], strides = [1, 1]} : vector<8x256xf32> to vector<8x128xf32>
    %183 = vector.extract_strided_slice %181 {offsets = [0, 128], sizes = [8, 128], strides = [1, 1]} : vector<8x256xf32> to vector<8x128xf32>
    %184 = vector.extract_strided_slice %167 {offsets = [0, 256], sizes = [8, 128], strides = [1, 1]} : vector<8x384xf32> to vector<8x128xf32>
    %185 = vector.extract_strided_slice %171 {offsets = [0, 256], sizes = [8, 128], strides = [1, 1]} : vector<8x384xf32> to vector<8x128xf32>
    %186 = vector.broadcast %7 : vector<1x128xf32> to vector<8x128xf32>
    %187 = arith.addf %185, %186 : vector<8x128xf32>
    %188 = arith.mulf %182, %187 : vector<8x128xf32>
    %189 = arith.addf %184, %188 : vector<8x128xf32>
    %190 = math.tanh %189 : vector<8x128xf32>
    %cst_57 = arith.constant 1.000000e+00 : f32
    %191 = vector.broadcast %cst_57 : f32 to vector<8x128xf32>
    %192 = arith.subf %191, %183 : vector<8x128xf32>
    %193 = arith.mulf %192, %190 : vector<8x128xf32>
    %194 = arith.mulf %183, %153 : vector<8x128xf32>
    %195 = arith.addf %193, %194 : vector<8x128xf32>
    %cst_58 = arith.constant dense<0.000000e+00> : vector<8x384xf32>
    %196 = tpu.matmul %195, %4, %cst_58 {dimension_numbers = #tpu.dot_dimension_numbers<[1], [0], [0], [1], [0, 0, 1, 1], [], []>} : vector<8x128xf32>, vector<128x384xf32>, vector<8x384xf32> -> vector<8x384xf32>
    %cst_59 = arith.constant dense<0.000000e+00> : vector<8x384xf32>
    %197 = tpu.matmul %158, %5, %cst_59 {dimension_numbers = #tpu.dot_dimension_numbers<[1], [0], [0], [1], [0, 0, 1, 1], [], []>} : vector<8x128xf32>, vector<128x384xf32>, vector<8x384xf32> -> vector<8x384xf32>
    %198 = vector.extract_strided_slice %196 {offsets = [0, 0], sizes = [8, 256], strides = [1, 1]} : vector<8x384xf32> to vector<8x256xf32>
    %199 = vector.extract_strided_slice %197 {offsets = [0, 0], sizes = [8, 256], strides = [1, 1]} : vector<8x384xf32> to vector<8x256xf32>
    %200 = arith.addf %198, %199 : vector<8x256xf32>
    %201 = vector.broadcast %8 : vector<1x256xf32> to vector<8x256xf32>
    %202 = arith.addf %200, %201 : vector<8x256xf32>
    %203 = arith.negf %202 : vector<8x256xf32>
    %204 = math.exp %203 : vector<8x256xf32>
    %cst_60 = arith.constant 1.000000e+00 : f32
    %205 = vector.broadcast %cst_60 : f32 to vector<8x256xf32>
    %206 = arith.addf %205, %204 : vector<8x256xf32>
    %207 = arith.divf %205, %206 : vector<8x256xf32>
    %208 = vector.extract_strided_slice %207 {offsets = [0, 0], sizes = [8, 128], strides = [1, 1]} : vector<8x256xf32> to vector<8x128xf32>
    %209 = vector.extract_strided_slice %207 {offsets = [0, 128], sizes = [8, 128], strides = [1, 1]} : vector<8x256xf32> to vector<8x128xf32>
    %210 = vector.extract_strided_slice %196 {offsets = [0, 256], sizes = [8, 128], strides = [1, 1]} : vector<8x384xf32> to vector<8x128xf32>
    %211 = vector.broadcast %9 : vector<1x128xf32> to vector<8x128xf32>
    %212 = arith.addf %210, %211 : vector<8x128xf32>
    %213 = vector.extract_strided_slice %197 {offsets = [0, 256], sizes = [8, 128], strides = [1, 1]} : vector<8x384xf32> to vector<8x128xf32>
    %214 = vector.broadcast %10 : vector<1x128xf32> to vector<8x128xf32>
    %215 = arith.addf %213, %214 : vector<8x128xf32>
    %216 = arith.mulf %208, %215 : vector<8x128xf32>
    %217 = arith.addf %212, %216 : vector<8x128xf32>
    %218 = math.tanh %217 : vector<8x128xf32>
    %cst_61 = arith.constant 1.000000e+00 : f32
    %219 = vector.broadcast %cst_61 : f32 to vector<8x128xf32>
    %220 = arith.subf %219, %209 : vector<8x128xf32>
    %221 = arith.mulf %220, %218 : vector<8x128xf32>
    %222 = arith.mulf %209, %158 : vector<8x128xf32>
    %223 = arith.addf %221, %222 : vector<8x128xf32>
    %cst_62 = arith.constant 0.000000e+00 : f32
    %224 = vector.broadcast %cst_62 : f32 to vector<8x1xf32>
    %225 = arith.cmpf ogt, %170, %224 : vector<8x1xf32>
    %226 = vector.shape_cast %225 : vector<8x1xi1> to vector<8x1xi1>
    %227 = vector.broadcast %226 : vector<8x1xi1> to vector<8x128xi1>
    %228 = arith.select %227, %195, %153 : vector<8x128xi1>, vector<8x128xf32>
    %cst_63 = arith.constant 0.000000e+00 : f32
    %229 = vector.broadcast %cst_63 : f32 to vector<8x1xf32>
    %230 = arith.cmpf ogt, %170, %229 : vector<8x1xf32>
    %231 = vector.shape_cast %230 : vector<8x1xi1> to vector<8x1xi1>
    %232 = vector.broadcast %231 : vector<8x1xi1> to vector<8x128xi1>
    %233 = arith.select %232, %223, %158 : vector<8x128xi1>, vector<8x128xf32>
    %234 = vector.broadcast %170 : vector<8x1xf32> to vector<8x128xf32>
    %235 = arith.mulf %223, %234 : vector<8x128xf32>
    %236 = arith.index_cast %c2_i32 : i32 to index
    %c0_64 = arith.constant 0 : index
    %c0_65 = arith.constant 0 : index
    %237 = vector.load %arg11[%236, %c0_64, %c0_65] : memref<8x8x128xf32, #tpu.memory_space<vmem>>, vector<1x8x128xf32>
    %238 = vector.shape_cast %237 : vector<1x8x128xf32> to vector<8x128xf32>
    %239 = vector.shape_cast %235 : vector<8x128xf32> to vector<1x8x128xf32>
    tpu.vector_store %arg11[%236, %c0_64, %c0_65], %239 {strides = array<i32>} : memref<8x8x128xf32, #tpu.memory_space<vmem>>, vector<1x8x128xf32>,
    %c3_i32 = arith.constant 3 : i32
    %240 = arith.index_cast %c3_i32 : i32 to index
    %c0_66 = arith.constant 0 : index
    %c0_67 = arith.constant 0 : index
    %241 = vector.load %arg1[%240, %c0_66, %c0_67] : memref<8x8x384xf32, #tpu.memory_space<vmem>>, vector<1x8x384xf32>
    %242 = vector.shape_cast %241 : vector<1x8x384xf32> to vector<8x384xf32>
    %243 = arith.index_cast %c3_i32 : i32 to index
    %c0_68 = arith.constant 0 : index
    %c0_69 = arith.constant 0 : index
    %244 = vector.load %arg2[%243, %c0_68, %c0_69] : memref<8x8x1xf32, #tpu.memory_space<vmem>>, vector<1x8x1xf32>
    %245 = vector.shape_cast %244 : vector<1x8x1xf32> to vector<8x1xf32>
    %cst_70 = arith.constant dense<0.000000e+00> : vector<8x384xf32>
    %246 = tpu.matmul %228, %3, %cst_70 {dimension_numbers = #tpu.dot_dimension_numbers<[1], [0], [0], [1], [0, 0, 1, 1], [], []>} : vector<8x128xf32>, vector<128x384xf32>, vector<8x384xf32> -> vector<8x384xf32>
    %247 = vector.extract_strided_slice %242 {offsets = [0, 0], sizes = [8, 256], strides = [1, 1]} : vector<8x384xf32> to vector<8x256xf32>
    %248 = vector.extract_strided_slice %246 {offsets = [0, 0], sizes = [8, 256], strides = [1, 1]} : vector<8x384xf32> to vector<8x256xf32>
    %249 = arith.addf %247, %248 : vector<8x256xf32>
    %250 = vector.broadcast %6 : vector<1x256xf32> to vector<8x256xf32>
    %251 = arith.addf %249, %250 : vector<8x256xf32>
    %252 = arith.negf %251 : vector<8x256xf32>
    %253 = math.exp %252 : vector<8x256xf32>
    %cst_71 = arith.constant 1.000000e+00 : f32
    %254 = vector.broadcast %cst_71 : f32 to vector<8x256xf32>
    %255 = arith.addf %254, %253 : vector<8x256xf32>
    %256 = arith.divf %254, %255 : vector<8x256xf32>
    %257 = vector.extract_strided_slice %256 {offsets = [0, 0], sizes = [8, 128], strides = [1, 1]} : vector<8x256xf32> to vector<8x128xf32>
    %258 = vector.extract_strided_slice %256 {offsets = [0, 128], sizes = [8, 128], strides = [1, 1]} : vector<8x256xf32> to vector<8x128xf32>
    %259 = vector.extract_strided_slice %242 {offsets = [0, 256], sizes = [8, 128], strides = [1, 1]} : vector<8x384xf32> to vector<8x128xf32>
    %260 = vector.extract_strided_slice %246 {offsets = [0, 256], sizes = [8, 128], strides = [1, 1]} : vector<8x384xf32> to vector<8x128xf32>
    %261 = vector.broadcast %7 : vector<1x128xf32> to vector<8x128xf32>
    %262 = arith.addf %260, %261 : vector<8x128xf32>
    %263 = arith.mulf %257, %262 : vector<8x128xf32>
    %264 = arith.addf %259, %263 : vector<8x128xf32>
    %265 = math.tanh %264 : vector<8x128xf32>
    %cst_72 = arith.constant 1.000000e+00 : f32
    %266 = vector.broadcast %cst_72 : f32 to vector<8x128xf32>
    %267 = arith.subf %266, %258 : vector<8x128xf32>
    %268 = arith.mulf %267, %265 : vector<8x128xf32>
    %269 = arith.mulf %258, %228 : vector<8x128xf32>
    %270 = arith.addf %268, %269 : vector<8x128xf32>
    %cst_73 = arith.constant dense<0.000000e+00> : vector<8x384xf32>
    %271 = tpu.matmul %270, %4, %cst_73 {dimension_numbers = #tpu.dot_dimension_numbers<[1], [0], [0], [1], [0, 0, 1, 1], [], []>} : vector<8x128xf32>, vector<128x384xf32>, vector<8x384xf32> -> vector<8x384xf32>
    %cst_74 = arith.constant dense<0.000000e+00> : vector<8x384xf32>
    %272 = tpu.matmul %233, %5, %cst_74 {dimension_numbers = #tpu.dot_dimension_numbers<[1], [0], [0], [1], [0, 0, 1, 1], [], []>} : vector<8x128xf32>, vector<128x384xf32>, vector<8x384xf32> -> vector<8x384xf32>
    %273 = vector.extract_strided_slice %271 {offsets = [0, 0], sizes = [8, 256], strides = [1, 1]} : vector<8x384xf32> to vector<8x256xf32>
    %274 = vector.extract_strided_slice %272 {offsets = [0, 0], sizes = [8, 256], strides = [1, 1]} : vector<8x384xf32> to vector<8x256xf32>
    %275 = arith.addf %273, %274 : vector<8x256xf32>
    %276 = vector.broadcast %8 : vector<1x256xf32> to vector<8x256xf32>
    %277 = arith.addf %275, %276 : vector<8x256xf32>
    %278 = arith.negf %277 : vector<8x256xf32>
    %279 = math.exp %278 : vector<8x256xf32>
    %cst_75 = arith.constant 1.000000e+00 : f32
    %280 = vector.broadcast %cst_75 : f32 to vector<8x256xf32>
    %281 = arith.addf %280, %279 : vector<8x256xf32>
    %282 = arith.divf %280, %281 : vector<8x256xf32>
    %283 = vector.extract_strided_slice %282 {offsets = [0, 0], sizes = [8, 128], strides = [1, 1]} : vector<8x256xf32> to vector<8x128xf32>
    %284 = vector.extract_strided_slice %282 {offsets = [0, 128], sizes = [8, 128], strides = [1, 1]} : vector<8x256xf32> to vector<8x128xf32>
    %285 = vector.extract_strided_slice %271 {offsets = [0, 256], sizes = [8, 128], strides = [1, 1]} : vector<8x384xf32> to vector<8x128xf32>
    %286 = vector.broadcast %9 : vector<1x128xf32> to vector<8x128xf32>
    %287 = arith.addf %285, %286 : vector<8x128xf32>
    %288 = vector.extract_strided_slice %272 {offsets = [0, 256], sizes = [8, 128], strides = [1, 1]} : vector<8x384xf32> to vector<8x128xf32>
    %289 = vector.broadcast %10 : vector<1x128xf32> to vector<8x128xf32>
    %290 = arith.addf %288, %289 : vector<8x128xf32>
    %291 = arith.mulf %283, %290 : vector<8x128xf32>
    %292 = arith.addf %287, %291 : vector<8x128xf32>
    %293 = math.tanh %292 : vector<8x128xf32>
    %cst_76 = arith.constant 1.000000e+00 : f32
    %294 = vector.broadcast %cst_76 : f32 to vector<8x128xf32>
    %295 = arith.subf %294, %284 : vector<8x128xf32>
    %296 = arith.mulf %295, %293 : vector<8x128xf32>
    %297 = arith.mulf %284, %233 : vector<8x128xf32>
    %298 = arith.addf %296, %297 : vector<8x128xf32>
    %cst_77 = arith.constant 0.000000e+00 : f32
    %299 = vector.broadcast %cst_77 : f32 to vector<8x1xf32>
    %300 = arith.cmpf ogt, %245, %299 : vector<8x1xf32>
    %301 = vector.shape_cast %300 : vector<8x1xi1> to vector<8x1xi1>
    %302 = vector.broadcast %301 : vector<8x1xi1> to vector<8x128xi1>
    %303 = arith.select %302, %270, %228 : vector<8x128xi1>, vector<8x128xf32>
    %cst_78 = arith.constant 0.000000e+00 : f32
    %304 = vector.broadcast %cst_78 : f32 to vector<8x1xf32>
    %305 = arith.cmpf ogt, %245, %304 : vector<8x1xf32>
    %306 = vector.shape_cast %305 : vector<8x1xi1> to vector<8x1xi1>
    %307 = vector.broadcast %306 : vector<8x1xi1> to vector<8x128xi1>
    %308 = arith.select %307, %298, %233 : vector<8x128xi1>, vector<8x128xf32>
    %309 = vector.broadcast %245 : vector<8x1xf32> to vector<8x128xf32>
    %310 = arith.mulf %298, %309 : vector<8x128xf32>
    %311 = arith.index_cast %c3_i32 : i32 to index
    %c0_79 = arith.constant 0 : index
    %c0_80 = arith.constant 0 : index
    %312 = vector.load %arg11[%311, %c0_79, %c0_80] : memref<8x8x128xf32, #tpu.memory_space<vmem>>, vector<1x8x128xf32>
    %313 = vector.shape_cast %312 : vector<1x8x128xf32> to vector<8x128xf32>
    %314 = vector.shape_cast %310 : vector<8x128xf32> to vector<1x8x128xf32>
    tpu.vector_store %arg11[%311, %c0_79, %c0_80], %314 {strides = array<i32>} : memref<8x8x128xf32, #tpu.memory_space<vmem>>, vector<1x8x128xf32>,
    %c4_i32 = arith.constant 4 : i32
    %315 = arith.index_cast %c4_i32 : i32 to index
    %c0_81 = arith.constant 0 : index
    %c0_82 = arith.constant 0 : index
    %316 = vector.load %arg1[%315, %c0_81, %c0_82] : memref<8x8x384xf32, #tpu.memory_space<vmem>>, vector<1x8x384xf32>
    %317 = vector.shape_cast %316 : vector<1x8x384xf32> to vector<8x384xf32>
    %318 = arith.index_cast %c4_i32 : i32 to index
    %c0_83 = arith.constant 0 : index
    %c0_84 = arith.constant 0 : index
    %319 = vector.load %arg2[%318, %c0_83, %c0_84] : memref<8x8x1xf32, #tpu.memory_space<vmem>>, vector<1x8x1xf32>
    %320 = vector.shape_cast %319 : vector<1x8x1xf32> to vector<8x1xf32>
    %cst_85 = arith.constant dense<0.000000e+00> : vector<8x384xf32>
    %321 = tpu.matmul %303, %3, %cst_85 {dimension_numbers = #tpu.dot_dimension_numbers<[1], [0], [0], [1], [0, 0, 1, 1], [], []>} : vector<8x128xf32>, vector<128x384xf32>, vector<8x384xf32> -> vector<8x384xf32>
    %322 = vector.extract_strided_slice %317 {offsets = [0, 0], sizes = [8, 256], strides = [1, 1]} : vector<8x384xf32> to vector<8x256xf32>
    %323 = vector.extract_strided_slice %321 {offsets = [0, 0], sizes = [8, 256], strides = [1, 1]} : vector<8x384xf32> to vector<8x256xf32>
    %324 = arith.addf %322, %323 : vector<8x256xf32>
    %325 = vector.broadcast %6 : vector<1x256xf32> to vector<8x256xf32>
    %326 = arith.addf %324, %325 : vector<8x256xf32>
    %327 = arith.negf %326 : vector<8x256xf32>
    %328 = math.exp %327 : vector<8x256xf32>
    %cst_86 = arith.constant 1.000000e+00 : f32
    %329 = vector.broadcast %cst_86 : f32 to vector<8x256xf32>
    %330 = arith.addf %329, %328 : vector<8x256xf32>
    %331 = arith.divf %329, %330 : vector<8x256xf32>
    %332 = vector.extract_strided_slice %331 {offsets = [0, 0], sizes = [8, 128], strides = [1, 1]} : vector<8x256xf32> to vector<8x128xf32>
    %333 = vector.extract_strided_slice %331 {offsets = [0, 128], sizes = [8, 128], strides = [1, 1]} : vector<8x256xf32> to vector<8x128xf32>
    %334 = vector.extract_strided_slice %317 {offsets = [0, 256], sizes = [8, 128], strides = [1, 1]} : vector<8x384xf32> to vector<8x128xf32>
    %335 = vector.extract_strided_slice %321 {offsets = [0, 256], sizes = [8, 128], strides = [1, 1]} : vector<8x384xf32> to vector<8x128xf32>
    %336 = vector.broadcast %7 : vector<1x128xf32> to vector<8x128xf32>
    %337 = arith.addf %335, %336 : vector<8x128xf32>
    %338 = arith.mulf %332, %337 : vector<8x128xf32>
    %339 = arith.addf %334, %338 : vector<8x128xf32>
    %340 = math.tanh %339 : vector<8x128xf32>
    %cst_87 = arith.constant 1.000000e+00 : f32
    %341 = vector.broadcast %cst_87 : f32 to vector<8x128xf32>
    %342 = arith.subf %341, %333 : vector<8x128xf32>
    %343 = arith.mulf %342, %340 : vector<8x128xf32>
    %344 = arith.mulf %333, %303 : vector<8x128xf32>
    %345 = arith.addf %343, %344 : vector<8x128xf32>
    %cst_88 = arith.constant dense<0.000000e+00> : vector<8x384xf32>
    %346 = tpu.matmul %345, %4, %cst_88 {dimension_numbers = #tpu.dot_dimension_numbers<[1], [0], [0], [1], [0, 0, 1, 1], [], []>} : vector<8x128xf32>, vector<128x384xf32>, vector<8x384xf32> -> vector<8x384xf32>
    %cst_89 = arith.constant dense<0.000000e+00> : vector<8x384xf32>
    %347 = tpu.matmul %308, %5, %cst_89 {dimension_numbers = #tpu.dot_dimension_numbers<[1], [0], [0], [1], [0, 0, 1, 1], [], []>} : vector<8x128xf32>, vector<128x384xf32>, vector<8x384xf32> -> vector<8x384xf32>
    %348 = vector.extract_strided_slice %346 {offsets = [0, 0], sizes = [8, 256], strides = [1, 1]} : vector<8x384xf32> to vector<8x256xf32>
    %349 = vector.extract_strided_slice %347 {offsets = [0, 0], sizes = [8, 256], strides = [1, 1]} : vector<8x384xf32> to vector<8x256xf32>
    %350 = arith.addf %348, %349 : vector<8x256xf32>
    %351 = vector.broadcast %8 : vector<1x256xf32> to vector<8x256xf32>
    %352 = arith.addf %350, %351 : vector<8x256xf32>
    %353 = arith.negf %352 : vector<8x256xf32>
    %354 = math.exp %353 : vector<8x256xf32>
    %cst_90 = arith.constant 1.000000e+00 : f32
    %355 = vector.broadcast %cst_90 : f32 to vector<8x256xf32>
    %356 = arith.addf %355, %354 : vector<8x256xf32>
    %357 = arith.divf %355, %356 : vector<8x256xf32>
    %358 = vector.extract_strided_slice %357 {offsets = [0, 0], sizes = [8, 128], strides = [1, 1]} : vector<8x256xf32> to vector<8x128xf32>
    %359 = vector.extract_strided_slice %357 {offsets = [0, 128], sizes = [8, 128], strides = [1, 1]} : vector<8x256xf32> to vector<8x128xf32>
    %360 = vector.extract_strided_slice %346 {offsets = [0, 256], sizes = [8, 128], strides = [1, 1]} : vector<8x384xf32> to vector<8x128xf32>
    %361 = vector.broadcast %9 : vector<1x128xf32> to vector<8x128xf32>
    %362 = arith.addf %360, %361 : vector<8x128xf32>
    %363 = vector.extract_strided_slice %347 {offsets = [0, 256], sizes = [8, 128], strides = [1, 1]} : vector<8x384xf32> to vector<8x128xf32>
    %364 = vector.broadcast %10 : vector<1x128xf32> to vector<8x128xf32>
    %365 = arith.addf %363, %364 : vector<8x128xf32>
    %366 = arith.mulf %358, %365 : vector<8x128xf32>
    %367 = arith.addf %362, %366 : vector<8x128xf32>
    %368 = math.tanh %367 : vector<8x128xf32>
    %cst_91 = arith.constant 1.000000e+00 : f32
    %369 = vector.broadcast %cst_91 : f32 to vector<8x128xf32>
    %370 = arith.subf %369, %359 : vector<8x128xf32>
    %371 = arith.mulf %370, %368 : vector<8x128xf32>
    %372 = arith.mulf %359, %308 : vector<8x128xf32>
    %373 = arith.addf %371, %372 : vector<8x128xf32>
    %cst_92 = arith.constant 0.000000e+00 : f32
    %374 = vector.broadcast %cst_92 : f32 to vector<8x1xf32>
    %375 = arith.cmpf ogt, %320, %374 : vector<8x1xf32>
    %376 = vector.shape_cast %375 : vector<8x1xi1> to vector<8x1xi1>
    %377 = vector.broadcast %376 : vector<8x1xi1> to vector<8x128xi1>
    %378 = arith.select %377, %345, %303 : vector<8x128xi1>, vector<8x128xf32>
    %cst_93 = arith.constant 0.000000e+00 : f32
    %379 = vector.broadcast %cst_93 : f32 to vector<8x1xf32>
    %380 = arith.cmpf ogt, %320, %379 : vector<8x1xf32>
    %381 = vector.shape_cast %380 : vector<8x1xi1> to vector<8x1xi1>
    %382 = vector.broadcast %381 : vector<8x1xi1> to vector<8x128xi1>
    %383 = arith.select %382, %373, %308 : vector<8x128xi1>, vector<8x128xf32>
    %384 = vector.broadcast %320 : vector<8x1xf32> to vector<8x128xf32>
    %385 = arith.mulf %373, %384 : vector<8x128xf32>
    %386 = arith.index_cast %c4_i32 : i32 to index
    %c0_94 = arith.constant 0 : index
    %c0_95 = arith.constant 0 : index
    %387 = vector.load %arg11[%386, %c0_94, %c0_95] : memref<8x8x128xf32, #tpu.memory_space<vmem>>, vector<1x8x128xf32>
    %388 = vector.shape_cast %387 : vector<1x8x128xf32> to vector<8x128xf32>
    %389 = vector.shape_cast %385 : vector<8x128xf32> to vector<1x8x128xf32>
    tpu.vector_store %arg11[%386, %c0_94, %c0_95], %389 {strides = array<i32>} : memref<8x8x128xf32, #tpu.memory_space<vmem>>, vector<1x8x128xf32>,
    %c5_i32 = arith.constant 5 : i32
    %390 = arith.index_cast %c5_i32 : i32 to index
    %c0_96 = arith.constant 0 : index
    %c0_97 = arith.constant 0 : index
    %391 = vector.load %arg1[%390, %c0_96, %c0_97] : memref<8x8x384xf32, #tpu.memory_space<vmem>>, vector<1x8x384xf32>
    %392 = vector.shape_cast %391 : vector<1x8x384xf32> to vector<8x384xf32>
    %393 = arith.index_cast %c5_i32 : i32 to index
    %c0_98 = arith.constant 0 : index
    %c0_99 = arith.constant 0 : index
    %394 = vector.load %arg2[%393, %c0_98, %c0_99] : memref<8x8x1xf32, #tpu.memory_space<vmem>>, vector<1x8x1xf32>
    %395 = vector.shape_cast %394 : vector<1x8x1xf32> to vector<8x1xf32>
    %cst_100 = arith.constant dense<0.000000e+00> : vector<8x384xf32>
    %396 = tpu.matmul %378, %3, %cst_100 {dimension_numbers = #tpu.dot_dimension_numbers<[1], [0], [0], [1], [0, 0, 1, 1], [], []>} : vector<8x128xf32>, vector<128x384xf32>, vector<8x384xf32> -> vector<8x384xf32>
    %397 = vector.extract_strided_slice %392 {offsets = [0, 0], sizes = [8, 256], strides = [1, 1]} : vector<8x384xf32> to vector<8x256xf32>
    %398 = vector.extract_strided_slice %396 {offsets = [0, 0], sizes = [8, 256], strides = [1, 1]} : vector<8x384xf32> to vector<8x256xf32>
    %399 = arith.addf %397, %398 : vector<8x256xf32>
    %400 = vector.broadcast %6 : vector<1x256xf32> to vector<8x256xf32>
    %401 = arith.addf %399, %400 : vector<8x256xf32>
    %402 = arith.negf %401 : vector<8x256xf32>
    %403 = math.exp %402 : vector<8x256xf32>
    %cst_101 = arith.constant 1.000000e+00 : f32
    %404 = vector.broadcast %cst_101 : f32 to vector<8x256xf32>
    %405 = arith.addf %404, %403 : vector<8x256xf32>
    %406 = arith.divf %404, %405 : vector<8x256xf32>
    %407 = vector.extract_strided_slice %406 {offsets = [0, 0], sizes = [8, 128], strides = [1, 1]} : vector<8x256xf32> to vector<8x128xf32>
    %408 = vector.extract_strided_slice %406 {offsets = [0, 128], sizes = [8, 128], strides = [1, 1]} : vector<8x256xf32> to vector<8x128xf32>
    %409 = vector.extract_strided_slice %392 {offsets = [0, 256], sizes = [8, 128], strides = [1, 1]} : vector<8x384xf32> to vector<8x128xf32>
    %410 = vector.extract_strided_slice %396 {offsets = [0, 256], sizes = [8, 128], strides = [1, 1]} : vector<8x384xf32> to vector<8x128xf32>
    %411 = vector.broadcast %7 : vector<1x128xf32> to vector<8x128xf32>
    %412 = arith.addf %410, %411 : vector<8x128xf32>
    %413 = arith.mulf %407, %412 : vector<8x128xf32>
    %414 = arith.addf %409, %413 : vector<8x128xf32>
    %415 = math.tanh %414 : vector<8x128xf32>
    %cst_102 = arith.constant 1.000000e+00 : f32
    %416 = vector.broadcast %cst_102 : f32 to vector<8x128xf32>
    %417 = arith.subf %416, %408 : vector<8x128xf32>
    %418 = arith.mulf %417, %415 : vector<8x128xf32>
    %419 = arith.mulf %408, %378 : vector<8x128xf32>
    %420 = arith.addf %418, %419 : vector<8x128xf32>
    %cst_103 = arith.constant dense<0.000000e+00> : vector<8x384xf32>
    %421 = tpu.matmul %420, %4, %cst_103 {dimension_numbers = #tpu.dot_dimension_numbers<[1], [0], [0], [1], [0, 0, 1, 1], [], []>} : vector<8x128xf32>, vector<128x384xf32>, vector<8x384xf32> -> vector<8x384xf32>
    %cst_104 = arith.constant dense<0.000000e+00> : vector<8x384xf32>
    %422 = tpu.matmul %383, %5, %cst_104 {dimension_numbers = #tpu.dot_dimension_numbers<[1], [0], [0], [1], [0, 0, 1, 1], [], []>} : vector<8x128xf32>, vector<128x384xf32>, vector<8x384xf32> -> vector<8x384xf32>
    %423 = vector.extract_strided_slice %421 {offsets = [0, 0], sizes = [8, 256], strides = [1, 1]} : vector<8x384xf32> to vector<8x256xf32>
    %424 = vector.extract_strided_slice %422 {offsets = [0, 0], sizes = [8, 256], strides = [1, 1]} : vector<8x384xf32> to vector<8x256xf32>
    %425 = arith.addf %423, %424 : vector<8x256xf32>
    %426 = vector.broadcast %8 : vector<1x256xf32> to vector<8x256xf32>
    %427 = arith.addf %425, %426 : vector<8x256xf32>
    %428 = arith.negf %427 : vector<8x256xf32>
    %429 = math.exp %428 : vector<8x256xf32>
    %cst_105 = arith.constant 1.000000e+00 : f32
    %430 = vector.broadcast %cst_105 : f32 to vector<8x256xf32>
    %431 = arith.addf %430, %429 : vector<8x256xf32>
    %432 = arith.divf %430, %431 : vector<8x256xf32>
    %433 = vector.extract_strided_slice %432 {offsets = [0, 0], sizes = [8, 128], strides = [1, 1]} : vector<8x256xf32> to vector<8x128xf32>
    %434 = vector.extract_strided_slice %432 {offsets = [0, 128], sizes = [8, 128], strides = [1, 1]} : vector<8x256xf32> to vector<8x128xf32>
    %435 = vector.extract_strided_slice %421 {offsets = [0, 256], sizes = [8, 128], strides = [1, 1]} : vector<8x384xf32> to vector<8x128xf32>
    %436 = vector.broadcast %9 : vector<1x128xf32> to vector<8x128xf32>
    %437 = arith.addf %435, %436 : vector<8x128xf32>
    %438 = vector.extract_strided_slice %422 {offsets = [0, 256], sizes = [8, 128], strides = [1, 1]} : vector<8x384xf32> to vector<8x128xf32>
    %439 = vector.broadcast %10 : vector<1x128xf32> to vector<8x128xf32>
    %440 = arith.addf %438, %439 : vector<8x128xf32>
    %441 = arith.mulf %433, %440 : vector<8x128xf32>
    %442 = arith.addf %437, %441 : vector<8x128xf32>
    %443 = math.tanh %442 : vector<8x128xf32>
    %cst_106 = arith.constant 1.000000e+00 : f32
    %444 = vector.broadcast %cst_106 : f32 to vector<8x128xf32>
    %445 = arith.subf %444, %434 : vector<8x128xf32>
    %446 = arith.mulf %445, %443 : vector<8x128xf32>
    %447 = arith.mulf %434, %383 : vector<8x128xf32>
    %448 = arith.addf %446, %447 : vector<8x128xf32>
    %cst_107 = arith.constant 0.000000e+00 : f32
    %449 = vector.broadcast %cst_107 : f32 to vector<8x1xf32>
    %450 = arith.cmpf ogt, %395, %449 : vector<8x1xf32>
    %451 = vector.shape_cast %450 : vector<8x1xi1> to vector<8x1xi1>
    %452 = vector.broadcast %451 : vector<8x1xi1> to vector<8x128xi1>
    %453 = arith.select %452, %420, %378 : vector<8x128xi1>, vector<8x128xf32>
    %cst_108 = arith.constant 0.000000e+00 : f32
    %454 = vector.broadcast %cst_108 : f32 to vector<8x1xf32>
    %455 = arith.cmpf ogt, %395, %454 : vector<8x1xf32>
    %456 = vector.shape_cast %455 : vector<8x1xi1> to vector<8x1xi1>
    %457 = vector.broadcast %456 : vector<8x1xi1> to vector<8x128xi1>
    %458 = arith.select %457, %448, %383 : vector<8x128xi1>, vector<8x128xf32>
    %459 = vector.broadcast %395 : vector<8x1xf32> to vector<8x128xf32>
    %460 = arith.mulf %448, %459 : vector<8x128xf32>
    %461 = arith.index_cast %c5_i32 : i32 to index
    %c0_109 = arith.constant 0 : index
    %c0_110 = arith.constant 0 : index
    %462 = vector.load %arg11[%461, %c0_109, %c0_110] : memref<8x8x128xf32, #tpu.memory_space<vmem>>, vector<1x8x128xf32>
    %463 = vector.shape_cast %462 : vector<1x8x128xf32> to vector<8x128xf32>
    %464 = vector.shape_cast %460 : vector<8x128xf32> to vector<1x8x128xf32>
    tpu.vector_store %arg11[%461, %c0_109, %c0_110], %464 {strides = array<i32>} : memref<8x8x128xf32, #tpu.memory_space<vmem>>, vector<1x8x128xf32>,
    %c6_i32 = arith.constant 6 : i32
    %465 = arith.index_cast %c6_i32 : i32 to index
    %c0_111 = arith.constant 0 : index
    %c0_112 = arith.constant 0 : index
    %466 = vector.load %arg1[%465, %c0_111, %c0_112] : memref<8x8x384xf32, #tpu.memory_space<vmem>>, vector<1x8x384xf32>
    %467 = vector.shape_cast %466 : vector<1x8x384xf32> to vector<8x384xf32>
    %468 = arith.index_cast %c6_i32 : i32 to index
    %c0_113 = arith.constant 0 : index
    %c0_114 = arith.constant 0 : index
    %469 = vector.load %arg2[%468, %c0_113, %c0_114] : memref<8x8x1xf32, #tpu.memory_space<vmem>>, vector<1x8x1xf32>
    %470 = vector.shape_cast %469 : vector<1x8x1xf32> to vector<8x1xf32>
    %cst_115 = arith.constant dense<0.000000e+00> : vector<8x384xf32>
    %471 = tpu.matmul %453, %3, %cst_115 {dimension_numbers = #tpu.dot_dimension_numbers<[1], [0], [0], [1], [0, 0, 1, 1], [], []>} : vector<8x128xf32>, vector<128x384xf32>, vector<8x384xf32> -> vector<8x384xf32>
    %472 = vector.extract_strided_slice %467 {offsets = [0, 0], sizes = [8, 256], strides = [1, 1]} : vector<8x384xf32> to vector<8x256xf32>
    %473 = vector.extract_strided_slice %471 {offsets = [0, 0], sizes = [8, 256], strides = [1, 1]} : vector<8x384xf32> to vector<8x256xf32>
    %474 = arith.addf %472, %473 : vector<8x256xf32>
    %475 = vector.broadcast %6 : vector<1x256xf32> to vector<8x256xf32>
    %476 = arith.addf %474, %475 : vector<8x256xf32>
    %477 = arith.negf %476 : vector<8x256xf32>
    %478 = math.exp %477 : vector<8x256xf32>
    %cst_116 = arith.constant 1.000000e+00 : f32
    %479 = vector.broadcast %cst_116 : f32 to vector<8x256xf32>
    %480 = arith.addf %479, %478 : vector<8x256xf32>
    %481 = arith.divf %479, %480 : vector<8x256xf32>
    %482 = vector.extract_strided_slice %481 {offsets = [0, 0], sizes = [8, 128], strides = [1, 1]} : vector<8x256xf32> to vector<8x128xf32>
    %483 = vector.extract_strided_slice %481 {offsets = [0, 128], sizes = [8, 128], strides = [1, 1]} : vector<8x256xf32> to vector<8x128xf32>
    %484 = vector.extract_strided_slice %467 {offsets = [0, 256], sizes = [8, 128], strides = [1, 1]} : vector<8x384xf32> to vector<8x128xf32>
    %485 = vector.extract_strided_slice %471 {offsets = [0, 256], sizes = [8, 128], strides = [1, 1]} : vector<8x384xf32> to vector<8x128xf32>
    %486 = vector.broadcast %7 : vector<1x128xf32> to vector<8x128xf32>
    %487 = arith.addf %485, %486 : vector<8x128xf32>
    %488 = arith.mulf %482, %487 : vector<8x128xf32>
    %489 = arith.addf %484, %488 : vector<8x128xf32>
    %490 = math.tanh %489 : vector<8x128xf32>
    %cst_117 = arith.constant 1.000000e+00 : f32
    %491 = vector.broadcast %cst_117 : f32 to vector<8x128xf32>
    %492 = arith.subf %491, %483 : vector<8x128xf32>
    %493 = arith.mulf %492, %490 : vector<8x128xf32>
    %494 = arith.mulf %483, %453 : vector<8x128xf32>
    %495 = arith.addf %493, %494 : vector<8x128xf32>
    %cst_118 = arith.constant dense<0.000000e+00> : vector<8x384xf32>
    %496 = tpu.matmul %495, %4, %cst_118 {dimension_numbers = #tpu.dot_dimension_numbers<[1], [0], [0], [1], [0, 0, 1, 1], [], []>} : vector<8x128xf32>, vector<128x384xf32>, vector<8x384xf32> -> vector<8x384xf32>
    %cst_119 = arith.constant dense<0.000000e+00> : vector<8x384xf32>
    %497 = tpu.matmul %458, %5, %cst_119 {dimension_numbers = #tpu.dot_dimension_numbers<[1], [0], [0], [1], [0, 0, 1, 1], [], []>} : vector<8x128xf32>, vector<128x384xf32>, vector<8x384xf32> -> vector<8x384xf32>
    %498 = vector.extract_strided_slice %496 {offsets = [0, 0], sizes = [8, 256], strides = [1, 1]} : vector<8x384xf32> to vector<8x256xf32>
    %499 = vector.extract_strided_slice %497 {offsets = [0, 0], sizes = [8, 256], strides = [1, 1]} : vector<8x384xf32> to vector<8x256xf32>
    %500 = arith.addf %498, %499 : vector<8x256xf32>
    %501 = vector.broadcast %8 : vector<1x256xf32> to vector<8x256xf32>
    %502 = arith.addf %500, %501 : vector<8x256xf32>
    %503 = arith.negf %502 : vector<8x256xf32>
    %504 = math.exp %503 : vector<8x256xf32>
    %cst_120 = arith.constant 1.000000e+00 : f32
    %505 = vector.broadcast %cst_120 : f32 to vector<8x256xf32>
    %506 = arith.addf %505, %504 : vector<8x256xf32>
    %507 = arith.divf %505, %506 : vector<8x256xf32>
    %508 = vector.extract_strided_slice %507 {offsets = [0, 0], sizes = [8, 128], strides = [1, 1]} : vector<8x256xf32> to vector<8x128xf32>
    %509 = vector.extract_strided_slice %507 {offsets = [0, 128], sizes = [8, 128], strides = [1, 1]} : vector<8x256xf32> to vector<8x128xf32>
    %510 = vector.extract_strided_slice %496 {offsets = [0, 256], sizes = [8, 128], strides = [1, 1]} : vector<8x384xf32> to vector<8x128xf32>
    %511 = vector.broadcast %9 : vector<1x128xf32> to vector<8x128xf32>
    %512 = arith.addf %510, %511 : vector<8x128xf32>
    %513 = vector.extract_strided_slice %497 {offsets = [0, 256], sizes = [8, 128], strides = [1, 1]} : vector<8x384xf32> to vector<8x128xf32>
    %514 = vector.broadcast %10 : vector<1x128xf32> to vector<8x128xf32>
    %515 = arith.addf %513, %514 : vector<8x128xf32>
    %516 = arith.mulf %508, %515 : vector<8x128xf32>
    %517 = arith.addf %512, %516 : vector<8x128xf32>
    %518 = math.tanh %517 : vector<8x128xf32>
    %cst_121 = arith.constant 1.000000e+00 : f32
    %519 = vector.broadcast %cst_121 : f32 to vector<8x128xf32>
    %520 = arith.subf %519, %509 : vector<8x128xf32>
    %521 = arith.mulf %520, %518 : vector<8x128xf32>
    %522 = arith.mulf %509, %458 : vector<8x128xf32>
    %523 = arith.addf %521, %522 : vector<8x128xf32>
    %cst_122 = arith.constant 0.000000e+00 : f32
    %524 = vector.broadcast %cst_122 : f32 to vector<8x1xf32>
    %525 = arith.cmpf ogt, %470, %524 : vector<8x1xf32>
    %526 = vector.shape_cast %525 : vector<8x1xi1> to vector<8x1xi1>
    %527 = vector.broadcast %526 : vector<8x1xi1> to vector<8x128xi1>
    %528 = arith.select %527, %495, %453 : vector<8x128xi1>, vector<8x128xf32>
    %cst_123 = arith.constant 0.000000e+00 : f32
    %529 = vector.broadcast %cst_123 : f32 to vector<8x1xf32>
    %530 = arith.cmpf ogt, %470, %529 : vector<8x1xf32>
    %531 = vector.shape_cast %530 : vector<8x1xi1> to vector<8x1xi1>
    %532 = vector.broadcast %531 : vector<8x1xi1> to vector<8x128xi1>
    %533 = arith.select %532, %523, %458 : vector<8x128xi1>, vector<8x128xf32>
    %534 = vector.broadcast %470 : vector<8x1xf32> to vector<8x128xf32>
    %535 = arith.mulf %523, %534 : vector<8x128xf32>
    %536 = arith.index_cast %c6_i32 : i32 to index
    %c0_124 = arith.constant 0 : index
    %c0_125 = arith.constant 0 : index
    %537 = vector.load %arg11[%536, %c0_124, %c0_125] : memref<8x8x128xf32, #tpu.memory_space<vmem>>, vector<1x8x128xf32>
    %538 = vector.shape_cast %537 : vector<1x8x128xf32> to vector<8x128xf32>
    %539 = vector.shape_cast %535 : vector<8x128xf32> to vector<1x8x128xf32>
    tpu.vector_store %arg11[%536, %c0_124, %c0_125], %539 {strides = array<i32>} : memref<8x8x128xf32, #tpu.memory_space<vmem>>, vector<1x8x128xf32>,
    %c7_i32 = arith.constant 7 : i32
    %540 = arith.index_cast %c7_i32 : i32 to index
    %c0_126 = arith.constant 0 : index
    %c0_127 = arith.constant 0 : index
    %541 = vector.load %arg1[%540, %c0_126, %c0_127] : memref<8x8x384xf32, #tpu.memory_space<vmem>>, vector<1x8x384xf32>
    %542 = vector.shape_cast %541 : vector<1x8x384xf32> to vector<8x384xf32>
    %543 = arith.index_cast %c7_i32 : i32 to index
    %c0_128 = arith.constant 0 : index
    %c0_129 = arith.constant 0 : index
    %544 = vector.load %arg2[%543, %c0_128, %c0_129] : memref<8x8x1xf32, #tpu.memory_space<vmem>>, vector<1x8x1xf32>
    %545 = vector.shape_cast %544 : vector<1x8x1xf32> to vector<8x1xf32>
    %cst_130 = arith.constant dense<0.000000e+00> : vector<8x384xf32>
    %546 = tpu.matmul %528, %3, %cst_130 {dimension_numbers = #tpu.dot_dimension_numbers<[1], [0], [0], [1], [0, 0, 1, 1], [], []>} : vector<8x128xf32>, vector<128x384xf32>, vector<8x384xf32> -> vector<8x384xf32>
    %547 = vector.extract_strided_slice %542 {offsets = [0, 0], sizes = [8, 256], strides = [1, 1]} : vector<8x384xf32> to vector<8x256xf32>
    %548 = vector.extract_strided_slice %546 {offsets = [0, 0], sizes = [8, 256], strides = [1, 1]} : vector<8x384xf32> to vector<8x256xf32>
    %549 = arith.addf %547, %548 : vector<8x256xf32>
    %550 = vector.broadcast %6 : vector<1x256xf32> to vector<8x256xf32>
    %551 = arith.addf %549, %550 : vector<8x256xf32>
    %552 = arith.negf %551 : vector<8x256xf32>
    %553 = math.exp %552 : vector<8x256xf32>
    %cst_131 = arith.constant 1.000000e+00 : f32
    %554 = vector.broadcast %cst_131 : f32 to vector<8x256xf32>
    %555 = arith.addf %554, %553 : vector<8x256xf32>
    %556 = arith.divf %554, %555 : vector<8x256xf32>
    %557 = vector.extract_strided_slice %556 {offsets = [0, 0], sizes = [8, 128], strides = [1, 1]} : vector<8x256xf32> to vector<8x128xf32>
    %558 = vector.extract_strided_slice %556 {offsets = [0, 128], sizes = [8, 128], strides = [1, 1]} : vector<8x256xf32> to vector<8x128xf32>
    %559 = vector.extract_strided_slice %542 {offsets = [0, 256], sizes = [8, 128], strides = [1, 1]} : vector<8x384xf32> to vector<8x128xf32>
    %560 = vector.extract_strided_slice %546 {offsets = [0, 256], sizes = [8, 128], strides = [1, 1]} : vector<8x384xf32> to vector<8x128xf32>
    %561 = vector.broadcast %7 : vector<1x128xf32> to vector<8x128xf32>
    %562 = arith.addf %560, %561 : vector<8x128xf32>
    %563 = arith.mulf %557, %562 : vector<8x128xf32>
    %564 = arith.addf %559, %563 : vector<8x128xf32>
    %565 = math.tanh %564 : vector<8x128xf32>
    %cst_132 = arith.constant 1.000000e+00 : f32
    %566 = vector.broadcast %cst_132 : f32 to vector<8x128xf32>
    %567 = arith.subf %566, %558 : vector<8x128xf32>
    %568 = arith.mulf %567, %565 : vector<8x128xf32>
    %569 = arith.mulf %558, %528 : vector<8x128xf32>
    %570 = arith.addf %568, %569 : vector<8x128xf32>
    %cst_133 = arith.constant dense<0.000000e+00> : vector<8x384xf32>
    %571 = tpu.matmul %570, %4, %cst_133 {dimension_numbers = #tpu.dot_dimension_numbers<[1], [0], [0], [1], [0, 0, 1, 1], [], []>} : vector<8x128xf32>, vector<128x384xf32>, vector<8x384xf32> -> vector<8x384xf32>
    %cst_134 = arith.constant dense<0.000000e+00> : vector<8x384xf32>
    %572 = tpu.matmul %533, %5, %cst_134 {dimension_numbers = #tpu.dot_dimension_numbers<[1], [0], [0], [1], [0, 0, 1, 1], [], []>} : vector<8x128xf32>, vector<128x384xf32>, vector<8x384xf32> -> vector<8x384xf32>
    %573 = vector.extract_strided_slice %571 {offsets = [0, 0], sizes = [8, 256], strides = [1, 1]} : vector<8x384xf32> to vector<8x256xf32>
    %574 = vector.extract_strided_slice %572 {offsets = [0, 0], sizes = [8, 256], strides = [1, 1]} : vector<8x384xf32> to vector<8x256xf32>
    %575 = arith.addf %573, %574 : vector<8x256xf32>
    %576 = vector.broadcast %8 : vector<1x256xf32> to vector<8x256xf32>
    %577 = arith.addf %575, %576 : vector<8x256xf32>
    %578 = arith.negf %577 : vector<8x256xf32>
    %579 = math.exp %578 : vector<8x256xf32>
    %cst_135 = arith.constant 1.000000e+00 : f32
    %580 = vector.broadcast %cst_135 : f32 to vector<8x256xf32>
    %581 = arith.addf %580, %579 : vector<8x256xf32>
    %582 = arith.divf %580, %581 : vector<8x256xf32>
    %583 = vector.extract_strided_slice %582 {offsets = [0, 0], sizes = [8, 128], strides = [1, 1]} : vector<8x256xf32> to vector<8x128xf32>
    %584 = vector.extract_strided_slice %582 {offsets = [0, 128], sizes = [8, 128], strides = [1, 1]} : vector<8x256xf32> to vector<8x128xf32>
    %585 = vector.extract_strided_slice %571 {offsets = [0, 256], sizes = [8, 128], strides = [1, 1]} : vector<8x384xf32> to vector<8x128xf32>
    %586 = vector.broadcast %9 : vector<1x128xf32> to vector<8x128xf32>
    %587 = arith.addf %585, %586 : vector<8x128xf32>
    %588 = vector.extract_strided_slice %572 {offsets = [0, 256], sizes = [8, 128], strides = [1, 1]} : vector<8x384xf32> to vector<8x128xf32>
    %589 = vector.broadcast %10 : vector<1x128xf32> to vector<8x128xf32>
    %590 = arith.addf %588, %589 : vector<8x128xf32>
    %591 = arith.mulf %583, %590 : vector<8x128xf32>
    %592 = arith.addf %587, %591 : vector<8x128xf32>
    %593 = math.tanh %592 : vector<8x128xf32>
    %cst_136 = arith.constant 1.000000e+00 : f32
    %594 = vector.broadcast %cst_136 : f32 to vector<8x128xf32>
    %595 = arith.subf %594, %584 : vector<8x128xf32>
    %596 = arith.mulf %595, %593 : vector<8x128xf32>
    %597 = arith.mulf %584, %533 : vector<8x128xf32>
    %598 = arith.addf %596, %597 : vector<8x128xf32>
    %cst_137 = arith.constant 0.000000e+00 : f32
    %599 = vector.broadcast %cst_137 : f32 to vector<8x1xf32>
    %600 = arith.cmpf ogt, %545, %599 : vector<8x1xf32>
    %601 = vector.shape_cast %600 : vector<8x1xi1> to vector<8x1xi1>
    %602 = vector.broadcast %601 : vector<8x1xi1> to vector<8x128xi1>
    %603 = arith.select %602, %570, %528 : vector<8x128xi1>, vector<8x128xf32>
    %cst_138 = arith.constant 0.000000e+00 : f32
    %604 = vector.broadcast %cst_138 : f32 to vector<8x1xf32>
    %605 = arith.cmpf ogt, %545, %604 : vector<8x1xf32>
    %606 = vector.shape_cast %605 : vector<8x1xi1> to vector<8x1xi1>
    %607 = vector.broadcast %606 : vector<8x1xi1> to vector<8x128xi1>
    %608 = arith.select %607, %598, %533 : vector<8x128xi1>, vector<8x128xf32>
    %609 = vector.broadcast %545 : vector<8x1xf32> to vector<8x128xf32>
    %610 = arith.mulf %598, %609 : vector<8x128xf32>
    %611 = arith.index_cast %c7_i32 : i32 to index
    %c0_139 = arith.constant 0 : index
    %c0_140 = arith.constant 0 : index
    %612 = vector.load %arg11[%611, %c0_139, %c0_140] : memref<8x8x128xf32, #tpu.memory_space<vmem>>, vector<1x8x128xf32>
    %613 = vector.shape_cast %612 : vector<1x8x128xf32> to vector<8x128xf32>
    %614 = vector.shape_cast %610 : vector<8x128xf32> to vector<1x8x128xf32>
    tpu.vector_store %arg11[%611, %c0_139, %c0_140], %614 {strides = array<i32>} : memref<8x8x128xf32, #tpu.memory_space<vmem>>, vector<1x8x128xf32>,
    %c8_i32 = arith.constant 8 : i32
    %c0_141 = arith.constant 0 : index
    %c0_142 = arith.constant 0 : index
    %c0_143 = arith.constant 0 : index
    %615 = vector.load %arg12[%c0_141, %c0_142, %c0_143] : memref<2x8x128xf32, #tpu.memory_space<vmem>>, vector<1x8x128xf32>
    %616 = vector.shape_cast %615 : vector<1x8x128xf32> to vector<8x128xf32>
    %617 = vector.shape_cast %603 : vector<8x128xf32> to vector<1x8x128xf32>
    tpu.vector_store %arg12[%c0_141, %c0_142, %c0_143], %617 {strides = array<i32>} : memref<2x8x128xf32, #tpu.memory_space<vmem>>, vector<1x8x128xf32>,
    %c1_144 = arith.constant 1 : index
    %c0_145 = arith.constant 0 : index
    %c0_146 = arith.constant 0 : index
    %618 = vector.load %arg12[%c1_144, %c0_145, %c0_146] : memref<2x8x128xf32, #tpu.memory_space<vmem>>, vector<1x8x128xf32>
    %619 = vector.shape_cast %618 : vector<1x8x128xf32> to vector<8x128xf32>
    %620 = vector.shape_cast %608 : vector<8x128xf32> to vector<1x8x128xf32>
    tpu.vector_store %arg12[%c1_144, %c0_145, %c0_146], %620 {strides = array<i32>} : memref<2x8x128xf32, #tpu.memory_space<vmem>>, vector<1x8x128xf32>,
    return
  }
  func.func @transform_0(%arg0: i32) -> (i32, i32, i32) {
    %c0_i32 = arith.constant 0 : i32
    %c0_i32_0 = arith.constant 0 : i32
    %c0_i32_1 = arith.constant 0 : i32
    return %arg0, %c0_i32, %c0_i32_0 : i32, i32, i32
  }
  func.func @transform_1(%arg0: i32) -> (i32, i32, i32) {
    %c0_i32 = arith.constant 0 : i32
    %c0_i32_0 = arith.constant 0 : i32
    %c0_i32_1 = arith.constant 0 : i32
    return %arg0, %c0_i32, %c0_i32_0 : i32, i32, i32
  }
  func.func @transform_2(%arg0: i32) -> (i32, i32) {
    %c0_i32 = arith.constant 0 : i32
    %c0_i32_0 = arith.constant 0 : i32
    %c0_i32_1 = arith.constant 0 : i32
    return %c0_i32, %c0_i32_0 : i32, i32
  }
  func.func @transform_3(%arg0: i32) -> (i32, i32) {
    %c0_i32 = arith.constant 0 : i32
    %c0_i32_0 = arith.constant 0 : i32
    %c0_i32_1 = arith.constant 0 : i32
    return %c0_i32, %c0_i32_0 : i32, i32
  }
  func.func @transform_4(%arg0: i32) -> (i32, i32) {
    %c0_i32 = arith.constant 0 : i32
    %c0_i32_0 = arith.constant 0 : i32
    %c0_i32_1 = arith.constant 0 : i32
    return %c0_i32, %c0_i32_0 : i32, i32
  }
  func.func @transform_5(%arg0: i32) -> (i32, i32) {
    %c0_i32 = arith.constant 0 : i32
    %c0_i32_0 = arith.constant 0 : i32
    %c0_i32_1 = arith.constant 0 : i32
    return %c0_i32, %c0_i32_0 : i32, i32
  }
  func.func @transform_6(%arg0: i32) -> (i32, i32) {
    %c0_i32 = arith.constant 0 : i32
    %c0_i32_0 = arith.constant 0 : i32
    %c0_i32_1 = arith.constant 0 : i32
    return %c0_i32, %c0_i32_0 : i32, i32
  }
  func.func @transform_7(%arg0: i32) -> (i32, i32) {
    %c0_i32 = arith.constant 0 : i32
    %c0_i32_0 = arith.constant 0 : i32
    %c0_i32_1 = arith.constant 0 : i32
    return %c0_i32, %c0_i32_0 : i32, i32
  }
  func.func @transform_8(%arg0: i32) -> (i32, i32) {
    %c0_i32 = arith.constant 0 : i32
    %c0_i32_0 = arith.constant 0 : i32
    %c0_i32_1 = arith.constant 0 : i32
    return %c0_i32, %c0_i32_0 : i32, i32
  }
  func.func @transform_9(%arg0: i32) -> (i32, i32) {
    %c0_i32 = arith.constant 0 : i32
    %c0_i32_0 = arith.constant 0 : i32
    %c0_i32_1 = arith.constant 0 : i32
    return %c0_i32, %c0_i32_0 : i32, i32
  }
  func.func @transform_10(%arg0: i32) -> (i32, i32, i32) {
    %c0_i32 = arith.constant 0 : i32
    %c0_i32_0 = arith.constant 0 : i32
    %c0_i32_1 = arith.constant 0 : i32
    return %arg0, %c0_i32, %c0_i32_0 : i32, i32, i32
  }
  func.func @transform_11(%arg0: i32) -> (i32, i32, i32) {
    %c0_i32 = arith.constant 0 : i32
    %c0_i32_0 = arith.constant 0 : i32
    %c0_i32_1 = arith.constant 0 : i32
    %c0_i32_2 = arith.constant 0 : i32
    return %c0_i32, %c0_i32_0, %c0_i32_1 : i32, i32, i32
  }
}

</mosaic_0001>

<llo_original>
// kernel: tpu_custom_call.1
$region0: #{tpu_custom_call.1}
  #allocation0 [shape = 'u32[]', space=smem, size = 0x4, offset = 0x4, fixed_abs, tag = 'smem constant byte address 0x4 - core index']
  #allocation1 [shape = 'u32[144,128]{1,0:T(1,128)}', space=vmem, size = 0x12000, scoped, tag = 'internal scratch']
  %s0 = inlined_call_operand.hbm [shape: f32[8,8,384], index: 0, kind: input, shape index: {}]
  %s1 = inlined_call_operand.vmem [shape: f32[8,8,1], index: 1, kind: input, shape index: {}]
  %s2 = inlined_call_operand.hbm [shape: f32[128,384], index: 2, kind: input, shape index: {}]
  %s3 = inlined_call_operand.vmem [shape: f32[1,256], index: 3, kind: input, shape index: {}]
  %s4 = inlined_call_operand.vmem [shape: f32[1,128], index: 4, kind: input, shape index: {}]
  %s5 = inlined_call_operand.hbm [shape: f32[128,384], index: 5, kind: input, shape index: {}]
  %s6 = inlined_call_operand.hbm [shape: f32[128,384], index: 6, kind: input, shape index: {}]
  %s7 = inlined_call_operand.vmem [shape: f32[1,256], index: 7, kind: input, shape index: {}]
  %s8 = inlined_call_operand.vmem [shape: f32[1,128], index: 8, kind: input, shape index: {}]
  %s9 = inlined_call_operand.vmem [shape: f32[1,128], index: 9, kind: input, shape index: {}]
  %s10 = inlined_call_operand.hbm [shape: f32[8,8,128], index: 10, kind: output, shape index: {0}]
  %s11 = inlined_call_operand.hbm [shape: f32[2,8,128], index: 11, kind: output, shape index: {1}]
  %12 = xla_tuple %s10, %s11
  %s13 = sld [smem:[#allocation0]]
  $region78: #{tpu_custom_call.1} parent=0
    _
  %s15 = ssub.s32 1, %s13
  %s16 = scalar_select 0, %s15, %s13
  $region1: #{tpu_custom_call.1} parent=0
    #allocation2 [shape = 'u8[98304]{0}', space=vmem, size = 0x18000, scoped, tag = 'input window, operand 0, single buffered']
    #allocation3 [shape = 's32[1]{0}', space=sflag, size = 0x4, scoped, tag = 'scoped memory for tpu_custom_call.1']
    #allocation4 [shape = 's32[1]{0}', space=sflag, size = 0x4, scoped, tag = 'scoped memory for tpu_custom_call.1']
    #allocation5 [shape = 'u8[196608]{0}', space=vmem, size = 0x30000, scoped, tag = 'input window, operand 2, single buffered']
    #allocation6 [shape = 's32[1]{0}', space=sflag, size = 0x4, scoped, tag = 'scoped memory for tpu_custom_call.1']
    #allocation7 [shape = 'u8[196608]{0}', space=vmem, size = 0x30000, scoped, tag = 'input window, operand 5, single buffered']
    #allocation8 [shape = 'u8[196608]{0}', space=vmem, size = 0x30000, scoped, tag = 'input window, operand 6, single buffered']
    #allocation9 [shape = 's32[1]{0}', space=sflag, size = 0x4, scoped, tag = 'scoped memory for tpu_custom_call.1']
    #allocation10 [shape = 'u8[32768]{0}', space=vmem, size = 0x8000, scoped, tag = 'output window, operand 0, single buffered']
    #allocation11 [shape = 'u8[8192]{0}', space=vmem, size = 0x2000, scoped, tag = 'output window, operand 1, single buffered']
    #allocation12 [shape = 's32[1]{0}', space=sflag, size = 0x4, scoped, tag = 'scoped memory for tpu_custom_call.1']
    %17 = vsyncpa [#allocation3], 0
    %18 = vsyncpa [#allocation6], 0
    %19 = vsyncpa [#allocation9], 0
    %20 = vsyncpa [#allocation4], 0
    %21 = vsyncpa [#allocation12], 0
    // Predicated region
    $region2: #{tpu_custom_call.1} parent=1 // pred_check
      _
    $region3: #{tpu_custom_call.1} parent=1 // pred_check_branch
      %23 = sbr.rel (0) target = $region5
    $region4: #{tpu_custom_call.1} parent=1 // pred_region
      %s25 = ssub.s32 3072, 3072
      %26 = vsyncadd [#allocation3], %s25
      %s27 = sshll.u32 [#allocation2], 4
      %s28 = int_to_ptr.vmem [resolvable:$true] %s27
      %33 = dma.hbm_to_vmem [thread:$0]  %s0, 3072, %s28, [#allocation3], 384, 384, 24
    $region5: #{tpu_custom_call.1} parent=1 // pred_fallthru
      _
    // Predicated region
    $region6: #{tpu_custom_call.1} parent=1 // pred_check
      _
    $region7: #{tpu_custom_call.1} parent=1 // pred_check_branch
      %35 = sbr.rel (0) target = $region9
    $region8: #{tpu_custom_call.1} parent=1 // pred_region
      _
    $region9: #{tpu_custom_call.1} parent=1 // pred_fallthru
      _
    // Predicated region
    $region10: #{tpu_custom_call.1} parent=1 // pred_check
      _
    $region11: #{tpu_custom_call.1} parent=1 // pred_check_branch
      %37 = sbr.rel (0) target = $region13
    $region12: #{tpu_custom_call.1} parent=1 // pred_region
      %s39 = ssub.s32 6144, 6144
      %40 = vsyncadd [#allocation6], %s39
      %s41 = sshll.u32 [#allocation5], 4
      %s42 = int_to_ptr.vmem [resolvable:$true] %s41
      %47 = dma.hbm_to_vmem [thread:$0]  %s2, 6144, %s42, [#allocation6], 384, 384, 24
    $region13: #{tpu_custom_call.1} parent=1 // pred_fallthru
      _
    // Predicated region
    $region14: #{tpu_custom_call.1} parent=1 // pred_check
      _
    $region15: #{tpu_custom_call.1} parent=1 // pred_check_branch
      %49 = sbr.rel (0) target = $region17
    $region16: #{tpu_custom_call.1} parent=1 // pred_region
      _
    $region17: #{tpu_custom_call.1} parent=1 // pred_fallthru
      _
    // Predicated region
    $region18: #{tpu_custom_call.1} parent=1 // pred_check
      _
    $region19: #{tpu_custom_call.1} parent=1 // pred_check_branch
      %51 = sbr.rel (0) target = $region21
    $region20: #{tpu_custom_call.1} parent=1 // pred_region
      _
    $region21: #{tpu_custom_call.1} parent=1 // pred_fallthru
      _
    // Predicated region
    $region22: #{tpu_custom_call.1} parent=1 // pred_check
      _
    $region23: #{tpu_custom_call.1} parent=1 // pred_check_branch
      %53 = sbr.rel (0) target = $region25
    $region24: #{tpu_custom_call.1} parent=1 // pred_region
      %s55 = ssub.s32 6144, 6144
      %56 = vsyncadd [#allocation6], %s55
      %s57 = sshll.u32 [#allocation7], 4
      %s58 = int_to_ptr.vmem [resolvable:$true] %s57
      %63 = dma.hbm_to_vmem [thread:$0]  %s5, 6144, %s58, [#allocation6], 384, 384, 24
    $region25: #{tpu_custom_call.1} parent=1 // pred_fallthru
      _
    // Predicated region
    $region26: #{tpu_custom_call.1} parent=1 // pred_check
      _
    $region27: #{tpu_custom_call.1} parent=1 // pred_check_branch
      %65 = sbr.rel (0) target = $region29
    $region28: #{tpu_custom_call.1} parent=1 // pred_region
      %s67 = ssub.s32 6144, 6144
      %68 = vsyncadd [#allocation9], %s67
      %s69 = sshll.u32 [#allocation8], 4
      %s70 = int_to_ptr.vmem [resolvable:$true] %s69
      %75 = dma.hbm_to_vmem [thread:$0]  %s6, 6144, %s70, [#allocation9], 384, 384, 24
    $region29: #{tpu_custom_call.1} parent=1 // pred_fallthru
      _
    // Predicated region
    $region30: #{tpu_custom_call.1} parent=1 // pred_check
      _
    $region31: #{tpu_custom_call.1} parent=1 // pred_check_branch
      %77 = sbr.rel (0) target = $region33
    $region32: #{tpu_custom_call.1} parent=1 // pred_region
      _
    $region33: #{tpu_custom_call.1} parent=1 // pred_fallthru
      _
    // Predicated region
    $region34: #{tpu_custom_call.1} parent=1 // pred_check
      _
    $region35: #{tpu_custom_call.1} parent=1 // pred_check_branch
      %79 = sbr.rel (0) target = $region37
    $region36: #{tpu_custom_call.1} parent=1 // pred_region
      _
    $region37: #{tpu_custom_call.1} parent=1 // pred_fallthru
      _
    // Predicated region
    $region38: #{tpu_custom_call.1} parent=1 // pred_check
      _
    $region39: #{tpu_custom_call.1} parent=1 // pred_check_branch
      %81 = sbr.rel (0) target = $region41
    $region40: #{tpu_custom_call.1} parent=1 // pred_region
      _
    $region41: #{tpu_custom_call.1} parent=1 // pred_fallthru
      _
    // Predicated region
    $region42: #{tpu_custom_call.1} parent=1 // pred_check
      _
    $region43: #{tpu_custom_call.1} parent=1 // pred_check_branch
      %83 = sbr.rel (0) target = $region45
    $region44: #{tpu_custom_call.1} parent=1 // pred_region
      %84 = dma.done [#allocation3], 3072
    $region45: #{tpu_custom_call.1} parent=1 // pred_fallthru
      _
    // Predicated region
    $region46: #{tpu_custom_call.1} parent=1 // pred_check
      _
    $region47: #{tpu_custom_call.1} parent=1 // pred_check_branch
      %86 = sbr.rel (0) target = $region49
    $region48: #{tpu_custom_call.1} parent=1 // pred_region
      %87 = dma.done [#allocation6], 6144
    $region49: #{tpu_custom_call.1} parent=1 // pred_fallthru
      _
    // Predicated region
    $region50: #{tpu_custom_call.1} parent=1 // pred_check
      _
    $region51: #{tpu_custom_call.1} parent=1 // pred_check_branch
      %89 = sbr.rel (0) target = $region53
    $region52: #{tpu_custom_call.1} parent=1 // pred_region
      %90 = dma.done [#allocation6], 6144
    $region53: #{tpu_custom_call.1} parent=1 // pred_fallthru
      _
    // Predicated region
    $region54: #{tpu_custom_call.1} parent=1 // pred_check
      _
    $region55: #{tpu_custom_call.1} parent=1 // pred_check_branch
      %92 = sbr.rel (0) target = $region57
    $region56: #{tpu_custom_call.1} parent=1 // pred_region
      %93 = dma.done [#allocation9], 6144
    $region57: #{tpu_custom_call.1} parent=1 // pred_fallthru
      _
    %p94 = scmp.eq.s32.totalorder 0, 0
    // Predicated region
    $region58: #{tpu_custom_call.1} parent=1 // pred_check
      %p95 = pneg %p94
    $region59: #{tpu_custom_call.1} parent=1 // pred_check_branch
      %97 = sbr.rel (%p95) target = $region61
    $region60: #{tpu_custom_call.1} parent=1 // pred_region
      %98 = vst [vmem:[#allocation11] sm:$0xff] 0.0
      %99 = vst [vmem:[#allocation11 + $0x8] sm:$0xff] 0.0
    $region61: #{tpu_custom_call.1} parent=1 // pred_fallthru
      _
    %v100 = vld [vmem:[#allocation5] sm:$0xff]
    %v101 = vld [vmem:[#allocation5 + $0x8] sm:$0xff]
    %v102 = vld [vmem:[#allocation5 + $0x10] sm:$0xff]
    %v103 = vld [vmem:[#allocation5 + $0x18] sm:$0xff]
    %v104 = vld [vmem:[#allocation5 + $0x20] sm:$0xff]
    %v105 = vld [vmem:[#allocation5 + $0x28] sm:$0xff]
    %v106 = vld [vmem:[#allocation5 + $0x30] sm:$0xff]
    %v107 = vld [vmem:[#allocation5 + $0x38] sm:$0xff]
    %v108 = vld [vmem:[#allocation5 + $0x40] sm:$0xff]
    %v109 = vld [vmem:[#allocation5 + $0x48] sm:$0xff]
    %v110 = vld [vmem:[#allocation5 + $0x50] sm:$0xff]
    %v111 = vld [vmem:[#allocation5 + $0x58] sm:$0xff]
    %v112 = vld [vmem:[#allocation5 + $0x60] sm:$0xff]
    %v113 = vld [vmem:[#allocation5 + $0x68] sm:$0xff]
    %v114 = vld [vmem:[#allocation5 + $0x70] sm:$0xff]
    %v115 = vld [vmem:[#allocation5 + $0x78] sm:$0xff]
    %v116 = vld [vmem:[#allocation5 + $0x80] sm:$0xff]
    %v117 = vld [vmem:[#allocation5 + $0x88] sm:$0xff]
    %v118 = vld [vmem:[#allocation5 + $0x90] sm:$0xff]
    %v119 = vld [vmem:[#allocation5 + $0x98] sm:$0xff]
    %v120 = vld [vmem:[#allocation5 + $0xa0] sm:$0xff]
    %v121 = vld [vmem:[#allocation5 + $0xa8] sm:$0xff]
    %v122 = vld [vmem:[#allocation5 + $0xb0] sm:$0xff]
    %v123 = vld [vmem:[#allocation5 + $0xb8] sm:$0xff]
    %v124 = vld [vmem:[#allocation5 + $0xc0] sm:$0xff]
    %v125 = vld [vmem:[#allocation5 + $0xc8] sm:$0xff]
    %v126 = vld [vmem:[#allocation5 + $0xd0] sm:$0xff]
    %v127 = vld [vmem:[#allocation5 + $0xd8] sm:$0xff]
    %v128 = vld [vmem:[#allocation5 + $0xe0] sm:$0xff]
    %v129 = vld [vmem:[#allocation5 + $0xe8] sm:$0xff]
    %v130 = vld [vmem:[#allocation5 + $0xf0] sm:$0xff]
    %v131 = vld [vmem:[#allocation5 + $0xf8] sm:$0xff]
    %v132 = vld [vmem:[#allocation5 + $0x100] sm:$0xff]
    %v133 = vld [vmem:[#allocation5 + $0x108] sm:$0xff]
    %v134 = vld [vmem:[#allocation5 + $0x110] sm:$0xff]
    %v135 = vld [vmem:[#allocation5 + $0x118] sm:$0xff]
    %v136 = vld [vmem:[#allocation5 + $0x120] sm:$0xff]
    %v137 = vld [vmem:[#allocation5 + $0x128] sm:$0xff]
    %v138 = vld [vmem:[#allocation5 + $0x130] sm:$0xff]
    %v139 = vld [vmem:[#allocation5 + $0x138] sm:$0xff]
    %v140 = vld [vmem:[#allocation5 + $0x140] sm:$0xff]
    %v141 = vld [vmem:[#allocation5 + $0x148] sm:$0xff]
    %v142 = vld [vmem:[#allocation5 + $0x150] sm:$0xff]
    %v143 = vld [vmem:[#allocation5 + $0x158] sm:$0xff]
    %v144 = vld [vmem:[#allocation5 + $0x160] sm:$0xff]
    %v145 = vld [vmem:[#allocation5 + $0x168] sm:$0xff]
    %v146 = vld [vmem:[#allocation5 + $0x170] sm:$0xff]
    %v147 = vld [vmem:[#allocation5 + $0x178] sm:$0xff]
    %v148 = vld [vmem:[#allocation7] sm:$0xff]
    %v149 = vld [vmem:[#allocation7 + $0x8] sm:$0xff]
    %v150 = vld [vmem:[#allocation7 + $0x10] sm:$0xff]
    %v151 = vld [vmem:[#allocation7 + $0x18] sm:$0xff]
    %v152 = vld [vmem:[#allocation7 + $0x20] sm:$0xff]
    %v153 = vld [vmem:[#allocation7 + $0x28] sm:$0xff]
    %v154 = vld [vmem:[#allocation7 + $0x30] sm:$0xff]
    %v155 = vld [vmem:[#allocation7 + $0x38] sm:$0xff]
    %v156 = vld [vmem:[#allocation7 + $0x40] sm:$0xff]
    %v157 = vld [vmem:[#allocation7 + $0x48] sm:$0xff]
    %v158 = vld [vmem:[#allocation7 + $0x50] sm:$0xff]
    %v159 = vld [vmem:[#allocation7 + $0x58] sm:$0xff]
    %v160 = vld [vmem:[#allocation7 + $0x60] sm:$0xff]
    %v161 = vld [vmem:[#allocation7 + $0x68] sm:$0xff]
    %v162 = vld [vmem:[#allocation7 + $0x70] sm:$0xff]
    %v163 = vld [vmem:[#allocation7 + $0x78] sm:$0xff]
    %v164 = vld [vmem:[#allocation7 + $0x80] sm:$0xff]
    %v165 = vld [vmem:[#allocation7 + $0x88] sm:$0xff]
    %v166 = vld [vmem:[#allocation7 + $0x90] sm:$0xff]
    %v167 = vld [vmem:[#allocation7 + $0x98] sm:$0xff]
    %v168 = vld [vmem:[#allocation7 + $0xa0] sm:$0xff]
    %v169 = vld [vmem:[#allocation7 + $0xa8] sm:$0xff]
    %v170 = vld [vmem:[#allocation7 + $0xb0] sm:$0xff]
    %v171 = vld [vmem:[#allocation7 + $0xb8] sm:$0xff]
    %v172 = vld [vmem:[#allocation7 + $0xc0] sm:$0xff]
    %v173 = vld [vmem:[#allocation7 + $0xc8] sm:$0xff]
    %v174 = vld [vmem:[#allocation7 + $0xd0] sm:$0xff]
    %v175 = vld [vmem:[#allocation7 + $0xd8] sm:$0xff]
    %v176 = vld [vmem:[#allocation7 + $0xe0] sm:$0xff]
    %v177 = vld [vmem:[#allocation7 + $0xe8] sm:$0xff]
    %v178 = vld [vmem:[#allocation7 + $0xf0] sm:$0xff]
    %v179 = vld [vmem:[#allocation7 + $0xf8] sm:$0xff]
    %v180 = vld [vmem:[#allocation7 + $0x100] sm:$0xff]
    %v181 = vld [vmem:[#allocation7 + $0x108] sm:$0xff]
    %v182 = vld [vmem:[#allocation7 + $0x110] sm:$0xff]
    %v183 = vld [vmem:[#allocation7 + $0x118] sm:$0xff]
    %v184 = vld [vmem:[#allocation7 + $0x120] sm:$0xff]
    %v185 = vld [vmem:[#allocation7 + $0x128] sm:$0xff]
    %v186 = vld [vmem:[#allocation7 + $0x130] sm:$0xff]
    %v187 = vld [vmem:[#allocation7 + $0x138] sm:$0xff]
    %v188 = vld [vmem:[#allocation7 + $0x140] sm:$0xff]
    %v189 = vld [vmem:[#allocation7 + $0x148] sm:$0xff]
    %v190 = vld [vmem:[#allocation7 + $0x150] sm:$0xff]
    %v191 = vld [vmem:[#allocation7 + $0x158] sm:$0xff]
    %v192 = vld [vmem:[#allocation7 + $0x160] sm:$0xff]
    %v193 = vld [vmem:[#allocation7 + $0x168] sm:$0xff]
    %v194 = vld [vmem:[#allocation7 + $0x170] sm:$0xff]
    %v195 = vld [vmem:[#allocation7 + $0x178] sm:$0xff]
    %v196 = vld [vmem:[#allocation8] sm:$0xff]
    %v197 = vld [vmem:[#allocation8 + $0x8] sm:$0xff]
    %v198 = vld [vmem:[#allocation8 + $0x10] sm:$0xff]
    %v199 = vld [vmem:[#allocation8 + $0x18] sm:$0xff]
    %v200 = vld [vmem:[#allocation8 + $0x20] sm:$0xff]
    %v201 = vld [vmem:[#allocation8 + $0x28] sm:$0xff]
    %v202 = vld [vmem:[#allocation8 + $0x30] sm:$0xff]
    %v203 = vld [vmem:[#allocation8 + $0x38] sm:$0xff]
    %v204 = vld [vmem:[#allocation8 + $0x40] sm:$0xff]
    %v205 = vld [vmem:[#allocation8 + $0x48] sm:$0xff]
    %v206 = vld [vmem:[#allocation8 + $0x50] sm:$0xff]
    %v207 = vld [vmem:[#allocation8 + $0x58] sm:$0xff]
    %v208 = vld [vmem:[#allocation8 + $0x60] sm:$0xff]
    %v209 = vld [vmem:[#allocation8 + $0x68] sm:$0xff]
    %v210 = vld [vmem:[#allocation8 + $0x70] sm:$0xff]
    %v211 = vld [vmem:[#allocation8 + $0x78] sm:$0xff]
    %v212 = vld [vmem:[#allocation8 + $0x80] sm:$0xff]
    %v213 = vld [vmem:[#allocation8 + $0x88] sm:$0xff]
    %v214 = vld [vmem:[#allocation8 + $0x90] sm:$0xff]
    %v215 = vld [vmem:[#allocation8 + $0x98] sm:$0xff]
    %v216 = vld [vmem:[#allocation8 + $0xa0] sm:$0xff]
    %v217 = vld [vmem:[#allocation8 + $0xa8] sm:$0xff]
    %v218 = vld [vmem:[#allocation8 + $0xb0] sm:$0xff]
    %v219 = vld [vmem:[#allocation8 + $0xb8] sm:$0xff]
    %v220 = vld [vmem:[#allocation8 + $0xc0] sm:$0xff]
    %v221 = vld [vmem:[#allocation8 + $0xc8] sm:$0xff]
    %v222 = vld [vmem:[#allocation8 + $0xd0] sm:$0xff]
    %v223 = vld [vmem:[#allocation8 + $0xd8] sm:$0xff]
    %v224 = vld [vmem:[#allocation8 + $0xe0] sm:$0xff]
    %v225 = vld [vmem:[#allocation8 + $0xe8] sm:$0xff]
    %v226 = vld [vmem:[#allocation8 + $0xf0] sm:$0xff]
    %v227 = vld [vmem:[#allocation8 + $0xf8] sm:$0xff]
    %v228 = vld [vmem:[#allocation8 + $0x100] sm:$0xff]
    %v229 = vld [vmem:[#allocation8 + $0x108] sm:$0xff]
    %v230 = vld [vmem:[#allocation8 + $0x110] sm:$0xff]
    %v231 = vld [vmem:[#allocation8 + $0x118] sm:$0xff]
    %v232 = vld [vmem:[#allocation8 + $0x120] sm:$0xff]
    %v233 = vld [vmem:[#allocation8 + $0x128] sm:$0xff]
    %v234 = vld [vmem:[#allocation8 + $0x130] sm:$0xff]
    %v235 = vld [vmem:[#allocation8 + $0x138] sm:$0xff]
    %v236 = vld [vmem:[#allocation8 + $0x140] sm:$0xff]
    %v237 = vld [vmem:[#allocation8 + $0x148] sm:$0xff]
    %v238 = vld [vmem:[#allocation8 + $0x150] sm:$0xff]
    %v239 = vld [vmem:[#allocation8 + $0x158] sm:$0xff]
    %v240 = vld [vmem:[#allocation8 + $0x160] sm:$0xff]
    %v241 = vld [vmem:[#allocation8 + $0x168] sm:$0xff]
    %v242 = vld [vmem:[#allocation8 + $0x170] sm:$0xff]
    %v243 = vld [vmem:[#allocation8 + $0x178] sm:$0xff]
    %v244 = vld [vmem:[%s3] sm:$0x3]
    %v245 = vld [vmem:[%s4] sm:$0x1]
    %v246 = vld [vmem:[%s7] sm:$0x3]
    %v247 = vld [vmem:[%s8] sm:$0x1]
    %v248 = vld [vmem:[%s9] sm:$0x1]
    %v249 = vld [vmem:[#allocation11] sm:$0xff]
    %s250 = scalar_lea.vmem [#allocation11], 8
    %v251 = vld [vmem:[%s250] sm:$0xff]
    %v252 = vld [vmem:[#allocation2] sm:$0xff]
    %v253 = vld [vmem:[#allocation2 + $0x8] sm:$0xff]
    %v254 = vld [vmem:[#allocation2 + $0x10] sm:$0xff]
    %v255 = vld [vmem:[%s1] sm:$0xff]
    %256 = vmatprep.subr.mxu0 %v101
    %257 = vmatpush1.msra.mxu0 %v100
    %258 = vmatprep.subr.mxu0 %v104
    %259 = vmatpush1.msra.mxu0 %v103
    %260 = vmatprep.subr.mxu0 %v107
    %261 = vmatpush1.msra.mxu0 %v106
    %262 = vmatprep.subr.mxu0 %v110
    %263 = vmatpush1.msra.mxu0 %v109
    %264 = vmatprep.subr.mxu0 %v113
    %265 = vmatpush1.msra.mxu0 %v112
    %266 = vmatprep.subr.mxu0 %v116
    %267 = vmatpush1.msra.mxu0 %v115
    %268 = vmatprep.subr.mxu0 %v119
    %269 = vmatpush1.msra.mxu0 %v118
    %270 = vmatprep.subr.mxu0 %v122
    %271 = vmatpush1.msra.mxu0 %v121
    %272 = vmatprep.subr.mxu0 %v125
    %273 = vmatpush1.msra.mxu0 %v124
    %274 = vmatprep.subr.mxu0 %v128
    %275 = vmatpush1.msra.mxu0 %v127
    %276 = vmatprep.subr.mxu0 %v131
    %277 = vmatpush1.msra.mxu0 %v130
    %278 = vmatprep.subr.mxu0 %v134
    %279 = vmatpush1.msra.mxu0 %v133
    %280 = vmatprep.subr.mxu0 %v137
    %281 = vmatpush1.msra.mxu0 %v136
    %282 = vmatprep.subr.mxu0 %v140
    %283 = vmatpush1.msra.mxu0 %v139
    %284 = vmatprep.subr.mxu0 %v143
    %285 = vmatpush1.msra.mxu0 %v142
    %286 = vmatprep.subr.mxu0 %v146
    %287 = vmatpush1.msra.mxu0 %v145
    %288 = vmatprep.subr.mxu0 0.0
    %289 = vmatpush1.msra.mxu0 0.0
    %290 = vmatprep.subr.mxu0 0.0
    %291 = vmatpush1.msra.mxu0 0.0
    %292 = vmatprep.subr.mxu0 0.0
    %293 = vmatpush1.msra.mxu0 0.0
    %294 = vmatprep.subr.mxu0 0.0
    %295 = vmatpush1.msra.mxu0 0.0
    %296 = vmatprep.subr.mxu0 0.0
    %297 = vmatpush1.msra.mxu0 0.0
    %298 = vmatprep.subr.mxu0 0.0
    %299 = vmatpush1.msra.mxu0 0.0
    %300 = vmatprep.subr.mxu0 0.0
    %301 = vmatpush1.msra.mxu0 0.0
    %302 = vmatprep.subr.mxu0 0.0
    %303 = vmatpush1.msra.mxu0 0.0
    %304 = vmatprep.subr.mxu0 0.0
    %305 = vmatpush1.msra.mxu0 0.0
    %306 = vmatprep.subr.mxu0 0.0
    %307 = vmatpush1.msra.mxu0 0.0
    %308 = vmatprep.subr.mxu0 0.0
    %309 = vmatpush1.msra.mxu0 0.0
    %310 = vmatprep.subr.mxu0 0.0
    %311 = vmatpush1.msra.mxu0 0.0
    %312 = vmatprep.subr.mxu0 0.0
    %313 = vmatpush1.msra.mxu0 0.0
    %314 = vmatprep.subr.mxu0 0.0
    %315 = vmatpush1.msra.mxu0 0.0
    %316 = vmatprep.subr.mxu0 0.0
    %317 = vmatpush1.msra.mxu0 0.0
    %318 = vmatprep.subr.mxu0 0.0
    %319 = vmatpush1.msra.mxu0 0.0
    %320 = vmatprep.mubr.f32.mxu0 0.0
    %321 = vmatmul.mubr.f32.gmra.mrb[0].mxu0 %v249
    %v322 = vpop.f32.mrb[0].mxu0
    %v323 = vadd.f32 0.0, %v322
    %v324 = vpop.f32.mrb[0].mxu0
    %v325 = vadd.f32 0.0, %v324
    %326 = vdwg.mxu0
    %327 = vmatprep.subr.mxu0 0.0
    %328 = vmatpush1.msra.mxu0 %v102
    %329 = vmatprep.subr.mxu0 0.0
    %330 = vmatpush1.msra.mxu0 %v105
    %331 = vmatprep.subr.mxu0 0.0
    %332 = vmatpush1.msra.mxu0 %v108
    %333 = vmatprep.subr.mxu0 0.0
    %334 = vmatpush1.msra.mxu0 %v111
    %335 = vmatprep.subr.mxu0 0.0
    %336 = vmatpush1.msra.mxu0 %v114
    %337 = vmatprep.subr.mxu0 0.0
    %338 = vmatpush1.msra.mxu0 %v117
    %339 = vmatprep.subr.mxu0 0.0
    %340 = vmatpush1.msra.mxu0 %v120
    %341 = vmatprep.subr.mxu0 0.0
    %342 = vmatpush1.msra.mxu0 %v123
    %343 = vmatprep.subr.mxu0 0.0
    %344 = vmatpush1.msra.mxu0 %v126
    %345 = vmatprep.subr.mxu0 0.0
    %346 = vmatpush1.msra.mxu0 %v129
    %347 = vmatprep.subr.mxu0 0.0
    %348 = vmatpush1.msra.mxu0 %v132
    %349 = vmatprep.subr.mxu0 0.0
    %350 = vmatpush1.msra.mxu0 %v135
    %351 = vmatprep.subr.mxu0 0.0
    %352 = vmatpush1.msra.mxu0 %v138
    %353 = vmatprep.subr.mxu0 0.0
    %354 = vmatpush1.msra.mxu0 %v141
    %355 = vmatprep.subr.mxu0 0.0
    %356 = vmatpush1.msra.mxu0 %v144
    %357 = vmatprep.subr.mxu0 0.0
    %358 = vmatpush1.msra.mxu0 %v147
    %359 = vmatprep.subr.mxu0 0.0
    %360 = vmatpush1.msra.mxu0 0.0
    %361 = vmatprep.subr.mxu0 0.0
    %362 = vmatpush1.msra.mxu0 0.0
    %363 = vmatprep.subr.mxu0 0.0
    %364 = vmatpush1.msra.mxu0 0.0
    %365 = vmatprep.subr.mxu0 0.0
    %366 = vmatpush1.msra.mxu0 0.0
    %367 = vmatprep.subr.mxu0 0.0
    %368 = vmatpush1.msra.mxu0 0.0
    %369 = vmatprep.subr.mxu0 0.0
    %370 = vmatpush1.msra.mxu0 0.0
    %371 = vmatprep.subr.mxu0 0.0
    %372 = vmatpush1.msra.mxu0 0.0
    %373 = vmatprep.subr.mxu0 0.0
    %374 = vmatpush1.msra.mxu0 0.0
    %375 = vmatprep.subr.mxu0 0.0
    %376 = vmatpush1.msra.mxu0 0.0
    %377 = vmatprep.subr.mxu0 0.0
    %378 = vmatpush1.msra.mxu0 0.0
    %379 = vmatprep.subr.mxu0 0.0
    %380 = vmatpush1.msra.mxu0 0.0
    %381 = vmatprep.subr.mxu0 0.0
    %382 = vmatpush1.msra.mxu0 0.0
    %383 = vmatprep.subr.mxu0 0.0
    %384 = vmatpush1.msra.mxu0 0.0
    %385 = vmatprep.subr.mxu0 0.0
    %386 = vmatpush1.msra.mxu0 0.0
    %387 = vmatprep.subr.mxu0 0.0
    %388 = vmatpush1.msra.mxu0 0.0
    %389 = vmatprep.subr.mxu0 0.0
    %390 = vmatpush1.msra.mxu0 0.0
    %391 = vmatprep.mubr.f32.mxu0 0.0
    %392 = vmatmul.mubr.f32.gmra.mrb[0].mxu0 %v249
    %v393 = vpop.f32.mrb[0].mxu0
    %v394 = vadd.f32 0.0, %v393
    %v395 = vpop.f32.mrb[0].mxu0
    %396 = vdwg.mxu0
    %v397 = vadd.f32 %v252, %v323
    %v398 = vadd.f32 %v253, %v325
    %v400 = vlaneseq
    %v401 = vshrl.u32 %v400, 7
    %v402 = vsub.s32 0, %v401
    %v403 = vrot.slane %v244, %v402
    %v404 = vlaneseq
    %v405 = vshrl.u32 %v404, 7
    %v406 = vsub.s32 1, %v405
    %v407 = vrot.slane %v244, %v406
    %v410 = vadd.f32 %v397, %v403
    %v411 = vadd.f32 %v398, %v407
    %v412 = vxor.u32 %v410, 2147483648
    %v413 = vxor.u32 %v411, 2147483648
    %v414 = vmul.f32 %v412, 1.442695
    %v415 = vpow.pop %v414
    %v416 = vmul.f32 %v413, 1.442695
    %v417 = vpow.pop %v416
    %v418 = vadd.f32 %v415, 1.0
    %v419 = vadd.f32 %v417, 1.0
    %v420 = vrcp.pop %v418
    %v421 = vmul.f32 1.0, %v420
    %v422 = vrcp.pop %v419
    %v423 = vmul.f32 1.0, %v422
    %v425 = vlaneseq
    %v426 = vshrl.u32 %v425, 7
    %v427 = vsub.s32 0, %v426
    %v428 = vrot.slane %v245, %v427
    %v430 = vadd.f32 %v394, %v428
    %v431 = vmul.f32 %v421, %v430
    %v432 = vadd.f32 %v254, %v431
    %v433 = vtanh.pop %v432
    %v434 = vsub.f32 1.0, %v423
    %v435 = vmul.f32 %v434, %v433
    %v436 = vmul.f32 %v423, %v249
    %v437 = vadd.f32 %v435, %v436
    %438 = vmatprep.subr.mxu0 %v149
    %439 = vmatpush1.msra.mxu0 %v148
    %440 = vmatprep.subr.mxu0 %v152
    %441 = vmatpush1.msra.mxu0 %v151
    %442 = vmatprep.subr.mxu0 %v155
    %443 = vmatpush1.msra.mxu0 %v154
    %444 = vmatprep.subr.mxu0 %v158
    %445 = vmatpush1.msra.mxu0 %v157
    %446 = vmatprep.subr.mxu0 %v161
    %447 = vmatpush1.msra.mxu0 %v160
    %448 = vmatprep.subr.mxu0 %v164
    %449 = vmatpush1.msra.mxu0 %v163
    %450 = vmatprep.subr.mxu0 %v167
    %451 = vmatpush1.msra.mxu0 %v166
    %452 = vmatprep.subr.mxu0 %v170
    %453 = vmatpush1.msra.mxu0 %v169
    %454 = vmatprep.subr.mxu0 %v173
    %455 = vmatpush1.msra.mxu0 %v172
    %456 = vmatprep.subr.mxu0 %v176
    %457 = vmatpush1.msra.mxu0 %v175
    %458 = vmatprep.subr.mxu0 %v179
    %459 = vmatpush1.msra.mxu0 %v178
    %460 = vmatprep.subr.mxu0 %v182
    %461 = vmatpush1.msra.mxu0 %v181
    %462 = vmatprep.subr.mxu0 %v185
    %463 = vmatpush1.msra.mxu0 %v184
    %464 = vmatprep.subr.mxu0 %v188
    %465 = vmatpush1.msra.mxu0 %v187
    %466 = vmatprep.subr.mxu0 %v191
    %467 = vmatpush1.msra.mxu0 %v190
    %468 = vmatprep.subr.mxu0 %v194
    %469 = vmatpush1.msra.mxu0 %v193
    %470 = vmatprep.subr.mxu0 0.0
    %471 = vmatpush1.msra.mxu0 0.0
    %472 = vmatprep.subr.mxu0 0.0
    %473 = vmatpush1.msra.mxu0 0.0
    %474 = vmatprep.subr.mxu0 0.0
    %475 = vmatpush1.msra.mxu0 0.0
    %476 = vmatprep.subr.mxu0 0.0
    %477 = vmatpush1.msra.mxu0 0.0
    %478 = vmatprep.subr.mxu0 0.0
    %479 = vmatpush1.msra.mxu0 0.0
    %480 = vmatprep.subr.mxu0 0.0
    %481 = vmatpush1.msra.mxu0 0.0
    %482 = vmatprep.subr.mxu0 0.0
    %483 = vmatpush1.msra.mxu0 0.0
    %484 = vmatprep.subr.mxu0 0.0
    %485 = vmatpush1.msra.mxu0 0.0
    %486 = vmatprep.subr.mxu0 0.0
    %487 = vmatpush1.msra.mxu0 0.0
    %488 = vmatprep.subr.mxu0 0.0
    %489 = vmatpush1.msra.mxu0 0.0
    %490 = vmatprep.subr.mxu0 0.0
    %491 = vmatpush1.msra.mxu0 0.0
    %492 = vmatprep.subr.mxu0 0.0
    %493 = vmatpush1.msra.mxu0 0.0
    %494 = vmatprep.subr.mxu0 0.0
    %495 = vmatpush1.msra.mxu0 0.0
    %496 = vmatprep.subr.mxu0 0.0
    %497 = vmatpush1.msra.mxu0 0.0
    %498 = vmatprep.subr.mxu0 0.0
    %499 = vmatpush1.msra.mxu0 0.0
    %500 = vmatprep.subr.mxu0 0.0
    %501 = vmatpush1.msra.mxu0 0.0
    %502 = vmatprep.mubr.f32.mxu0 0.0
    %503 = vmatmul.mubr.f32.gmra.mrb[0].mxu0 %v437
    %v504 = vpop.f32.mrb[0].mxu0
    %v505 = vadd.f32 0.0, %v504
    %v506 = vpop.f32.mrb[0].mxu0
    %v507 = vadd.f32 0.0, %v506
    %508 = vdwg.mxu0
    %509 = vmatprep.subr.mxu0 0.0
    %510 = vmatpush1.msra.mxu0 %v150
    %511 = vmatprep.subr.mxu0 0.0
    %512 = vmatpush1.msra.mxu0 %v153
    %513 = vmatprep.subr.mxu0 0.0
    %514 = vmatpush1.msra.mxu0 %v156
    %515 = vmatprep.subr.mxu0 0.0
    %516 = vmatpush1.msra.mxu0 %v159
    %517 = vmatprep.subr.mxu0 0.0
    %518 = vmatpush1.msra.mxu0 %v162
    %519 = vmatprep.subr.mxu0 0.0
    %520 = vmatpush1.msra.mxu0 %v165
    %521 = vmatprep.subr.mxu0 0.0
    %522 = vmatpush1.msra.mxu0 %v168
    %523 = vmatprep.subr.mxu0 0.0
    %524 = vmatpush1.msra.mxu0 %v171
    %525 = vmatprep.subr.mxu0 0.0
    %526 = vmatpush1.msra.mxu0 %v174
    %527 = vmatprep.subr.mxu0 0.0
    %528 = vmatpush1.msra.mxu0 %v177
    %529 = vmatprep.subr.mxu0 0.0
    %530 = vmatpush1.msra.mxu0 %v180
    %531 = vmatprep.subr.mxu0 0.0
    %532 = vmatpush1.msra.mxu0 %v183
    %533 = vmatprep.subr.mxu0 0.0
    %534 = vmatpush1.msra.mxu0 %v186
    %535 = vmatprep.subr.mxu0 0.0
    %536 = vmatpush1.msra.mxu0 %v189
    %537 = vmatprep.subr.mxu0 0.0
    %538 = vmatpush1.msra.mxu0 %v192
    %539 = vmatprep.subr.mxu0 0.0
    %540 = vmatpush1.msra.mxu0 %v195
    %541 = vmatprep.subr.mxu0 0.0
    %542 = vmatpush1.msra.mxu0 0.0
    %543 = vmatprep.subr.mxu0 0.0
    %544 = vmatpush1.msra.mxu0 0.0
    %545 = vmatprep.subr.mxu0 0.0
    %546 = vmatpush1.msra.mxu0 0.0
    %547 = vmatprep.subr.mxu0 0.0
    %548 = vmatpush1.msra.mxu0 0.0
    %549 = vmatprep.subr.mxu0 0.0
    %550 = vmatpush1.msra.mxu0 0.0
    %551 = vmatprep.subr.mxu0 0.0
    %552 = vmatpush1.msra.mxu0 0.0
    %553 = vmatprep.subr.mxu0 0.0
    %554 = vmatpush1.msra.mxu0 0.0
    %555 = vmatprep.subr.mxu0 0.0
    %556 = vmatpush1.msra.mxu0 0.0
    %557 = vmatprep.subr.mxu0 0.0
    %558 = vmatpush1.msra.mxu0 0.0
    %559 = vmatprep.subr.mxu0 0.0
    %560 = vmatpush1.msra.mxu0 0.0
    %561 = vmatprep.subr.mxu0 0.0
    %562 = vmatpush1.msra.mxu0 0.0
    %563 = vmatprep.subr.mxu0 0.0
    %564 = vmatpush1.msra.mxu0 0.0
    %565 = vmatprep.subr.mxu0 0.0
    %566 = vmatpush1.msra.mxu0 0.0
    %567 = vmatprep.subr.mxu0 0.0
    %568 = vmatpush1.msra.mxu0 0.0
    %569 = vmatprep.subr.mxu0 0.0
    %570 = vmatpush1.msra.mxu0 0.0
    %571 = vmatprep.subr.mxu0 0.0
    %572 = vmatpush1.msra.mxu0 0.0
    %573 = vmatprep.mubr.f32.mxu0 0.0
    %574 = vmatmul.mubr.f32.gmra.mrb[0].mxu0 %v437
    %v575 = vpop.f32.mrb[0].mxu0
    %v576 = vadd.f32 0.0, %v575
    %v577 = vpop.f32.mrb[0].mxu0
    %578 = vdwg.mxu0
    %579 = vmatprep.subr.mxu0 %v197
    %580 = vmatpush1.msra.mxu0 %v196
    %581 = vmatprep.subr.mxu0 %v200
    %582 = vmatpush1.msra.mxu0 %v199
    %583 = vmatprep.subr.mxu0 %v203
    %584 = vmatpush1.msra.mxu0 %v202
    %585 = vmatprep.subr.mxu0 %v206
    %586 = vmatpush1.msra.mxu0 %v205
    %587 = vmatprep.subr.mxu0 %v209
    %588 = vmatpush1.msra.mxu0 %v208
    %589 = vmatprep.subr.mxu0 %v212
    %590 = vmatpush1.msra.mxu0 %v211
    %591 = vmatprep.subr.mxu0 %v215
    %592 = vmatpush1.msra.mxu0 %v214
    %593 = vmatprep.subr.mxu0 %v218
    %594 = vmatpush1.msra.mxu0 %v217
    %595 = vmatprep.subr.mxu0 %v221
    %596 = vmatpush1.msra.mxu0 %v220
    %597 = vmatprep.subr.mxu0 %v224
    %598 = vmatpush1.msra.mxu0 %v223
    %599 = vmatprep.subr.mxu0 %v227
    %600 = vmatpush1.msra.mxu0 %v226
    %601 = vmatprep.subr.mxu0 %v230
    %602 = vmatpush1.msra.mxu0 %v229
    %603 = vmatprep.subr.mxu0 %v233
    %604 = vmatpush1.msra.mxu0 %v232
    %605 = vmatprep.subr.mxu0 %v236
    %606 = vmatpush1.msra.mxu0 %v235
    %607 = vmatprep.subr.mxu0 %v239
    %608 = vmatpush1.msra.mxu0 %v238
    %609 = vmatprep.subr.mxu0 %v242
    %610 = vmatpush1.msra.mxu0 %v241
    %611 = vmatprep.subr.mxu0 0.0
    %612 = vmatpush1.msra.mxu0 0.0
    %613 = vmatprep.subr.mxu0 0.0
    %614 = vmatpush1.msra.mxu0 0.0
    %615 = vmatprep.subr.mxu0 0.0
    %616 = vmatpush1.msra.mxu0 0.0
    %617 = vmatprep.subr.mxu0 0.0
    %618 = vmatpush1.msra.mxu0 0.0
    %619 = vmatprep.subr.mxu0 0.0
    %620 = vmatpush1.msra.mxu0 0.0
    %621 = vmatprep.subr.mxu0 0.0
    %622 = vmatpush1.msra.mxu0 0.0
    %623 = vmatprep.subr.mxu0 0.0
    %624 = vmatpush1.msra.mxu0 0.0
    %625 = vmatprep.subr.mxu0 0.0
    %626 = vmatpush1.msra.mxu0 0.0
    %627 = vmatprep.subr.mxu0 0.0
    %628 = vmatpush1.msra.mxu0 0.0
    %629 = vmatprep.subr.mxu0 0.0
    %630 = vmatpush1.msra.mxu0 0.0
    %631 = vmatprep.subr.mxu0 0.0
    %632 = vmatpush1.msra.mxu0 0.0
    %633 = vmatprep.subr.mxu0 0.0
    %634 = vmatpush1.msra.mxu0 0.0
    %635 = vmatprep.subr.mxu0 0.0
    %636 = vmatpush1.msra.mxu0 0.0
    %637 = vmatprep.subr.mxu0 0.0
    %638 = vmatpush1.msra.mxu0 0.0
    %639 = vmatprep.subr.mxu0 0.0
    %640 = vmatpush1.msra.mxu0 0.0
    %641 = vmatprep.subr.mxu0 0.0
    %642 = vmatpush1.msra.mxu0 0.0
    %643 = vmatprep.mubr.f32.mxu0 0.0
    %644 = vmatmul.mubr.f32.gmra.mrb[0].mxu0 %v251
    %v645 = vpop.f32.mrb[0].mxu0
    %v646 = vadd.f32 0.0, %v645
    %v647 = vpop.f32.mrb[0].mxu0
    %v648 = vadd.f32 0.0, %v647
    %649 = vdwg.mxu0
    %650 = vmatprep.subr.mxu0 0.0
    %651 = vmatpush1.msra.mxu0 %v198
    %652 = vmatprep.subr.mxu0 0.0
    %653 = vmatpush1.msra.mxu0 %v201
    %654 = vmatprep.subr.mxu0 0.0
    %655 = vmatpush1.msra.mxu0 %v204
    %656 = vmatprep.subr.mxu0 0.0
    %657 = vmatpush1.msra.mxu0 %v207
    %658 = vmatprep.subr.mxu0 0.0
    %659 = vmatpush1.msra.mxu0 %v210
    %660 = vmatprep.subr.mxu0 0.0
    %661 = vmatpush1.msra.mxu0 %v213
    %662 = vmatprep.subr.mxu0 0.0
    %663 = vmatpush1.msra.mxu0 %v216
    %664 = vmatprep.subr.mxu0 0.0
    %665 = vmatpush1.msra.mxu0 %v219
    %666 = vmatprep.subr.mxu0 0.0
    %667 = vmatpush1.msra.mxu0 %v222
    %668 = vmatprep.subr.mxu0 0.0
    %669 = vmatpush1.msra.mxu0 %v225
    %670 = vmatprep.subr.mxu0 0.0
    %671 = vmatpush1.msra.mxu0 %v228
    %672 = vmatprep.subr.mxu0 0.0
    %673 = vmatpush1.msra.mxu0 %v231
    %674 = vmatprep.subr.mxu0 0.0
    %675 = vmatpush1.msra.mxu0 %v234
    %676 = vmatprep.subr.mxu0 0.0
    %677 = vmatpush1.msra.mxu0 %v237
    %678 = vmatprep.subr.mxu0 0.0
    %679 = vmatpush1.msra.mxu0 %v240
    %680 = vmatprep.subr.mxu0 0.0
    %681 = vmatpush1.msra.mxu0 %v243
    %682 = vmatprep.subr.mxu0 0.0
    %683 = vmatpush1.msra.mxu0 0.0
    %684 = vmatprep.subr.mxu0 0.0
    %685 = vmatpush1.msra.mxu0 0.0
    %686 = vmatprep.subr.mxu0 0.0
    %687 = vmatpush1.msra.mxu0 0.0
    %688 = vmatprep.subr.mxu0 0.0
    %689 = vmatpush1.msra.mxu0 0.0
    %690 = vmatprep.subr.mxu0 0.0
    %691 = vmatpush1.msra.mxu0 0.0
    %692 = vmatprep.subr.mxu0 0.0
    %693 = vmatpush1.msra.mxu0 0.0
    %694 = vmatprep.subr.mxu0 0.0
    %695 = vmatpush1.msra.mxu0 0.0
    %696 = vmatprep.subr.mxu0 0.0
    %697 = vmatpush1.msra.mxu0 0.0
    %698 = vmatprep.subr.mxu0 0.0
    %699 = vmatpush1.msra.mxu0 0.0
    %700 = vmatprep.subr.mxu0 0.0
    %701 = vmatpush1.msra.mxu0 0.0
    %702 = vmatprep.subr.mxu0 0.0
    %703 = vmatpush1.msra.mxu0 0.0
    %704 = vmatprep.subr.mxu0 0.0
    %705 = vmatpush1.msra.mxu0 0.0
    %706 = vmatprep.subr.mxu0 0.0
    %707 = vmatpush1.msra.mxu0 0.0
    %708 = vmatprep.subr.mxu0 0.0
    %709 = vmatpush1.msra.mxu0 0.0
    %710 = vmatprep.subr.mxu0 0.0
    %711 = vmatpush1.msra.mxu0 0.0
    %712 = vmatprep.subr.mxu0 0.0
    %713 = vmatpush1.msra.mxu0 0.0
    %714 = vmatprep.mubr.f32.mxu0 0.0
    %715 = vmatmul.mubr.f32.gmra.mrb[0].mxu0 %v251
    %v716 = vpop.f32.mrb[0].mxu0
    %v717 = vadd.f32 0.0, %v716
    %v718 = vpop.f32.mrb[0].mxu0
    %719 = vdwg.mxu0
    %v720 = vadd.f32 %v505, %v646
    %v721 = vadd.f32 %v507, %v648
    %v723 = vlaneseq
    %v724 = vshrl.u32 %v723, 7
    %v725 = vsub.s32 0, %v724
    %v726 = vrot.slane %v246, %v725
    %v727 = vlaneseq
    %v728 = vshrl.u32 %v727, 7
    %v729 = vsub.s32 1, %v728
    %v730 = vrot.slane %v246, %v729
    %v733 = vadd.f32 %v720, %v726
    %v734 = vadd.f32 %v721, %v730
    %v735 = vxor.u32 %v733, 2147483648
    %v736 = vxor.u32 %v734, 2147483648
    %v737 = vmul.f32 %v735, 1.442695
    %v738 = vpow.pop %v737
    %v739 = vmul.f32 %v736, 1.442695
    %v740 = vpow.pop %v739
    %v741 = vadd.f32 %v738, 1.0
    %v742 = vadd.f32 %v740, 1.0
    %v743 = vrcp.pop %v741
    %v744 = vmul.f32 1.0, %v743
    %v745 = vrcp.pop %v742
    %v746 = vmul.f32 1.0, %v745
    %v748 = vlaneseq
    %v749 = vshrl.u32 %v748, 7
    %v750 = vsub.s32 0, %v749
    %v751 = vrot.slane %v247, %v750
    %v753 = vadd.f32 %v576, %v751
    %v755 = vlaneseq
    %v756 = vshrl.u32 %v755, 7
    %v757 = vsub.s32 0, %v756
    %v758 = vrot.slane %v248, %v757
    %v760 = vadd.f32 %v717, %v758
    %v761 = vmul.f32 %v744, %v760
    %v762 = vadd.f32 %v753, %v761
    %v763 = vtanh.pop %v762
    %v764 = vsub.f32 1.0, %v746
    %v765 = vmul.f32 %v764, %v763
    %v766 = vmul.f32 %v746, %v251
    %v767 = vadd.f32 %v765, %v766
    %vm768 = vcmp.gt.f32.partialorder %v255, 0.0
    %v769 = vsel %vm768, 1, 0
    %770 = vset.pattern.permute.xlu0 0
    %771 = vperm.xlu0 %770, %v769
    %v772 = vpop.permute.xlu0 %771
    %vm773 = vcmp.eq.s32.totalorder %v772, 1
    %v774 = vsel %vm773, %v437, %v249
    %v775 = vsel %vm773, %v767, %v251
    %777 = vset.pattern.permute.xlu0 0
    %778 = vperm.xlu0 %777, %v255
    %v779 = vpop.permute.xlu0 %778
    %v781 = vmul.f32 %v767, %v779
    %782 = vst [vmem:[#allocation10] sm:$0xff] %v781
    %s783 = scalar_lea.vmem [#allocation2], 24
    %v784 = vld [vmem:[%s783] sm:$0xff]
    %v785 = vld [vmem:[%s783 + $0x8] sm:$0xff]
    %v786 = vld [vmem:[%s783 + $0x10] sm:$0xff]
    %s787 = scalar_lea.vmem %s1, 8
    %v788 = vld [vmem:[%s787] sm:$0xff]
    %789 = vmatprep.subr.mxu0 %v101
    %790 = vmatpush1.msra.mxu0 %v100
    %791 = vmatprep.subr.mxu0 %v104
    %792 = vmatpush1.msra.mxu0 %v103
    %793 = vmatprep.subr.mxu0 %v107
    %794 = vmatpush1.msra.mxu0 %v106
    %795 = vmatprep.subr.mxu0 %v110
    %796 = vmatpush1.msra.mxu0 %v109
    %797 = vmatprep.subr.mxu0 %v113
    %798 = vmatpush1.msra.mxu0 %v112
    %799 = vmatprep.subr.mxu0 %v116
    %800 = vmatpush1.msra.mxu0 %v115
    %801 = vmatprep.subr.mxu0 %v119
    %802 = vmatpush1.msra.mxu0 %v118
    %803 = vmatprep.subr.mxu0 %v122
    %804 = vmatpush1.msra.mxu0 %v121
    %805 = vmatprep.subr.mxu0 %v125
    %806 = vmatpush1.msra.mxu0 %v124
    %807 = vmatprep.subr.mxu0 %v128
    %808 = vmatpush1.msra.mxu0 %v127
    %809 = vmatprep.subr.mxu0 %v131
    %810 = vmatpush1.msra.mxu0 %v130
    %811 = vmatprep.subr.mxu0 %v134
    %812 = vmatpush1.msra.mxu0 %v133
    %813 = vmatprep.subr.mxu0 %v137
    %814 = vmatpush1.msra.mxu0 %v136
    %815 = vmatprep.subr.mxu0 %v140
    %816 = vmatpush1.msra.mxu0 %v139
    %817 = vmatprep.subr.mxu0 %v143
    %818 = vmatpush1.msra.mxu0 %v142
    %819 = vmatprep.subr.mxu0 %v146
    %820 = vmatpush1.msra.mxu0 %v145
    %821 = vmatprep.subr.mxu0 0.0
    %822 = vmatpush1.msra.mxu0 0.0
    %823 = vmatprep.subr.mxu0 0.0
    %824 = vmatpush1.msra.mxu0 0.0
    %825 = vmatprep.subr.mxu0 0.0
    %826 = vmatpush1.msra.mxu0 0.0
    %827 = vmatprep.subr.mxu0 0.0
    %828 = vmatpush1.msra.mxu0 0.0
    %829 = vmatprep.subr.mxu0 0.0
    %830 = vmatpush1.msra.mxu0 0.0
    %831 = vmatprep.subr.mxu0 0.0
    %832 = vmatpush1.msra.mxu0 0.0
    %833 = vmatprep.subr.mxu0 0.0
    %834 = vmatpush1.msra.mxu0 0.0
    %835 = vmatprep.subr.mxu0 0.0
    %836 = vmatpush1.msra.mxu0 0.0
    %837 = vmatprep.subr.mxu0 0.0
    %838 = vmatpush1.msra.mxu0 0.0
    %839 = vmatprep.subr.mxu0 0.0
    %840 = vmatpush1.msra.mxu0 0.0
    %841 = vmatprep.subr.mxu0 0.0
    %842 = vmatpush1.msra.mxu0 0.0
    %843 = vmatprep.subr.mxu0 0.0
    %844 = vmatpush1.msra.mxu0 0.0
    %845 = vmatprep.subr.mxu0 0.0
    %846 = vmatpush1.msra.mxu0 0.0
    %847 = vmatprep.subr.mxu0 0.0
    %848 = vmatpush1.msra.mxu0 0.0
    %849 = vmatprep.subr.mxu0 0.0
    %850 = vmatpush1.msra.mxu0 0.0
    %851 = vmatprep.subr.mxu0 0.0
    %852 = vmatpush1.msra.mxu0 0.0
    %853 = vmatprep.mubr.f32.mxu0 0.0
    %854 = vmatmul.mubr.f32.gmra.mrb[0].mxu0 %v774
    %v855 = vpop.f32.mrb[0].mxu0
    %v856 = vadd.f32 0.0, %v855
    %v857 = vpop.f32.mrb[0].mxu0
    %v858 = vadd.f32 0.0, %v857
    %859 = vdwg.mxu0
    %860 = vmatprep.subr.mxu0 0.0
    %861 = vmatpush1.msra.mxu0 %v102
    %862 = vmatprep.subr.mxu0 0.0
    %863 = vmatpush1.msra.mxu0 %v105
    %864 = vmatprep.subr.mxu0 0.0
    %865 = vmatpush1.msra.mxu0 %v108
    %866 = vmatprep.subr.mxu0 0.0
    %867 = vmatpush1.msra.mxu0 %v111
    %868 = vmatprep.subr.mxu0 0.0
    %869 = vmatpush1.msra.mxu0 %v114
    %870 = vmatprep.subr.mxu0 0.0
    %871 = vmatpush1.msra.mxu0 %v117
    %872 = vmatprep.subr.mxu0 0.0
    %873 = vmatpush1.msra.mxu0 %v120
    %874 = vmatprep.subr.mxu0 0.0
    %875 = vmatpush1.msra.mxu0 %v123
    %876 = vmatprep.subr.mxu0 0.0
    %877 = vmatpush1.msra.mxu0 %v126
    %878 = vmatprep.subr.mxu0 0.0
    %879 = vmatpush1.msra.mxu0 %v129
    %880 = vmatprep.subr.mxu0 0.0
    %881 = vmatpush1.msra.mxu0 %v132
    %882 = vmatprep.subr.mxu0 0.0
    %883 = vmatpush1.msra.mxu0 %v135
    %884 = vmatprep.subr.mxu0 0.0
    %885 = vmatpush1.msra.mxu0 %v138
    %886 = vmatprep.subr.mxu0 0.0
    %887 = vmatpush1.msra.mxu0 %v141
    %888 = vmatprep.subr.mxu0 0.0
    %889 = vmatpush1.msra.mxu0 %v144
    %890 = vmatprep.subr.mxu0 0.0
    %891 = vmatpush1.msra.mxu0 %v147
    %892 = vmatprep.subr.mxu0 0.0
    %893 = vmatpush1.msra.mxu0 0.0
    %894 = vmatprep.subr.mxu0 0.0
    %895 = vmatpush1.msra.mxu0 0.0
    %896 = vmatprep.subr.mxu0 0.0
    %897 = vmatpush1.msra.mxu0 0.0
    %898 = vmatprep.subr.mxu0 0.0
    %899 = vmatpush1.msra.mxu0 0.0
    %900 = vmatprep.subr.mxu0 0.0
    %901 = vmatpush1.msra.mxu0 0.0
    %902 = vmatprep.subr.mxu0 0.0
    %903 = vmatpush1.msra.mxu0 0.0
    %904 = vmatprep.subr.mxu0 0.0
    %905 = vmatpush1.msra.mxu0 0.0
    %906 = vmatprep.subr.mxu0 0.0
    %907 = vmatpush1.msra.mxu0 0.0
    %908 = vmatprep.subr.mxu0 0.0
    %909 = vmatpush1.msra.mxu0 0.0
    %910 = vmatprep.subr.mxu0 0.0
    %911 = vmatpush1.msra.mxu0 0.0
    %912 = vmatprep.subr.mxu0 0.0
    %913 = vmatpush1.msra.mxu0 0.0
    %914 = vmatprep.subr.mxu0 0.0
    %915 = vmatpush1.msra.mxu0 0.0
    %916 = vmatprep.subr.mxu0 0.0
    %917 = vmatpush1.msra.mxu0 0.0
    %918 = vmatprep.subr.mxu0 0.0
    %919 = vmatpush1.msra.mxu0 0.0
    %920 = vmatprep.subr.mxu0 0.0
    %921 = vmatpush1.msra.mxu0 0.0
    %922 = vmatprep.subr.mxu0 0.0
    %923 = vmatpush1.msra.mxu0 0.0
    %924 = vmatprep.mubr.f32.mxu0 0.0
    %925 = vmatmul.mubr.f32.gmra.mrb[0].mxu0 %v774
    %v926 = vpop.f32.mrb[0].mxu0
    %v927 = vadd.f32 0.0, %v926
    %v928 = vpop.f32.mrb[0].mxu0
    %929 = vdwg.mxu0
    %v930 = vadd.f32 %v784, %v856
    %v931 = vadd.f32 %v785, %v858
    %v932 = vadd.f32 %v930, %v403
    %v933 = vadd.f32 %v931, %v407
    %v934 = vxor.u32 %v932, 2147483648
    %v935 = vxor.u32 %v933, 2147483648
    %v936 = vmul.f32 %v934, 1.442695
    %v937 = vpow.pop %v936
    %v938 = vmul.f32 %v935, 1.442695
    %v939 = vpow.pop %v938
    %v940 = vadd.f32 %v937, 1.0
    %v941 = vadd.f32 %v939, 1.0
    %v942 = vrcp.pop %v940
    %v943 = vmul.f32 1.0, %v942
    %v944 = vrcp.pop %v941
    %v945 = vmul.f32 1.0, %v944
    %v946 = vadd.f32 %v927, %v428
    %v947 = vmul.f32 %v943, %v946
    %v948 = vadd.f32 %v786, %v947
    %v949 = vtanh.pop %v948
    %v950 = vsub.f32 1.0, %v945
    %v951 = vmul.f32 %v950, %v949
    %v952 = vmul.f32 %v945, %v774
    %v953 = vadd.f32 %v951, %v952
    %954 = vmatprep.subr.mxu0 %v149
    %955 = vmatpush1.msra.mxu0 %v148
    %956 = vmatprep.subr.mxu0 %v152
    %957 = vmatpush1.msra.mxu0 %v151
    %958 = vmatprep.subr.mxu0 %v155
    %959 = vmatpush1.msra.mxu0 %v154
    %960 = vmatprep.subr.mxu0 %v158
    %961 = vmatpush1.msra.mxu0 %v157
    %962 = vmatprep.subr.mxu0 %v161
    %963 = vmatpush1.msra.mxu0 %v160
    %964 = vmatprep.subr.mxu0 %v164
    %965 = vmatpush1.msra.mxu0 %v163
    %966 = vmatprep.subr.mxu0 %v167
    %967 = vmatpush1.msra.mxu0 %v166
    %968 = vmatprep.subr.mxu0 %v170
    %969 = vmatpush1.msra.mxu0 %v169
    %970 = vmatprep.subr.mxu0 %v173
    %971 = vmatpush1.msra.mxu0 %v172
    %972 = vmatprep.subr.mxu0 %v176
    %973 = vmatpush1.msra.mxu0 %v175
    %974 = vmatprep.subr.mxu0 %v179
    %975 = vmatpush1.msra.mxu0 %v178
    %976 = vmatprep.subr.mxu0 %v182
    %977 = vmatpush1.msra.mxu0 %v181
    %978 = vmatprep.subr.mxu0 %v185
    %979 = vmatpush1.msra.mxu0 %v184
    %980 = vmatprep.subr.mxu0 %v188
    %981 = vmatpush1.msra.mxu0 %v187
    %982 = vmatprep.subr.mxu0 %v191
    %983 = vmatpush1.msra.mxu0 %v190
    %984 = vmatprep.subr.mxu0 %v194
    %985 = vmatpush1.msra.mxu0 %v193
    %986 = vmatprep.subr.mxu0 0.0
    %987 = vmatpush1.msra.mxu0 0.0
    %988 = vmatprep.subr.mxu0 0.0
    %989 = vmatpush1.msra.mxu0 0.0
    %990 = vmatprep.subr.mxu0 0.0
    %991 = vmatpush1.msra.mxu0 0.0
    %992 = vmatprep.subr.mxu0 0.0
    %993 = vmatpush1.msra.mxu0 0.0
    %994 = vmatprep.subr.mxu0 0.0
    %995 = vmatpush1.msra.mxu0 0.0
    %996 = vmatprep.subr.mxu0 0.0
    %997 = vmatpush1.msra.mxu0 0.0
    %998 = vmatprep.subr.mxu0 0.0
    %999 = vmatpush1.msra.mxu0 0.0
    %1000 = vmatprep.subr.mxu0 0.0
    %1001 = vmatpush1.msra.mxu0 0.0
    %1002 = vmatprep.subr.mxu0 0.0
    %1003 = vmatpush1.msra.mxu0 0.0
    %1004 = vmatprep.subr.mxu0 0.0
    %1005 = vmatpush1.msra.mxu0 0.0
    %1006 = vmatprep.subr.mxu0 0.0
    %1007 = vmatpush1.msra.mxu0 0.0
    %1008 = vmatprep.subr.mxu0 0.0
    %1009 = vmatpush1.msra.mxu0 0.0
    %1010 = vmatprep.subr.mxu0 0.0
    %1011 = vmatpush1.msra.mxu0 0.0
    %1012 = vmatprep.subr.mxu0 0.0
    %1013 = vmatpush1.msra.mxu0 0.0
    %1014 = vmatprep.subr.mxu0 0.0
    %1015 = vmatpush1.msra.mxu0 0.0
    %1016 = vmatprep.subr.mxu0 0.0
    %1017 = vmatpush1.msra.mxu0 0.0
    %1018 = vmatprep.mubr.f32.mxu0 0.0
    %1019 = vmatmul.mubr.f32.gmra.mrb[0].mxu0 %v953
    %v1020 = vpop.f32.mrb[0].mxu0
    %v1021 = vadd.f32 0.0, %v1020
    %v1022 = vpop.f32.mrb[0].mxu0
    %v1023 = vadd.f32 0.0, %v1022
    %1024 = vdwg.mxu0
    %1025 = vmatprep.subr.mxu0 0.0
    %1026 = vmatpush1.msra.mxu0 %v150
    %1027 = vmatprep.subr.mxu0 0.0
    %1028 = vmatpush1.msra.mxu0 %v153
    %1029 = vmatprep.subr.mxu0 0.0
    %1030 = vmatpush1.msra.mxu0 %v156
    %1031 = vmatprep.subr.mxu0 0.0
    %1032 = vmatpush1.msra.mxu0 %v159
    %1033 = vmatprep.subr.mxu0 0.0
    %1034 = vmatpush1.msra.mxu0 %v162
    %1035 = vmatprep.subr.mxu0 0.0
    %1036 = vmatpush1.msra.mxu0 %v165
    %1037 = vmatprep.subr.mxu0 0.0
    %1038 = vmatpush1.msra.mxu0 %v168
    %1039 = vmatprep.subr.mxu0 0.0
    %1040 = vmatpush1.msra.mxu0 %v171
    %1041 = vmatprep.subr.mxu0 0.0
    %1042 = vmatpush1.msra.mxu0 %v174
    %1043 = vmatprep.subr.mxu0 0.0
    %1044 = vmatpush1.msra.mxu0 %v177
    %1045 = vmatprep.subr.mxu0 0.0
    %1046 = vmatpush1.msra.mxu0 %v180
    %1047 = vmatprep.subr.mxu0 0.0
    %1048 = vmatpush1.msra.mxu0 %v183
    %1049 = vmatprep.subr.mxu0 0.0
    %1050 = vmatpush1.msra.mxu0 %v186
    %1051 = vmatprep.subr.mxu0 0.0
    %1052 = vmatpush1.msra.mxu0 %v189
    %1053 = vmatprep.subr.mxu0 0.0
    %1054 = vmatpush1.msra.mxu0 %v192
    %1055 = vmatprep.subr.mxu0 0.0
    %1056 = vmatpush1.msra.mxu0 %v195
    %1057 = vmatprep.subr.mxu0 0.0
    %1058 = vmatpush1.msra.mxu0 0.0
    %1059 = vmatprep.subr.mxu0 0.0
    %1060 = vmatpush1.msra.mxu0 0.0
    %1061 = vmatprep.subr.mxu0 0.0
    %1062 = vmatpush1.msra.mxu0 0.0
    %1063 = vmatprep.subr.mxu0 0.0
    %1064 = vmatpush1.msra.mxu0 0.0
    %1065 = vmatprep.subr.mxu0 0.0
    %1066 = vmatpush1.msra.mxu0 0.0
    %1067 = vmatprep.subr.mxu0 0.0
    %1068 = vmatpush1.msra.mxu0 0.0
    %1069 = vmatprep.subr.mxu0 0.0
    %1070 = vmatpush1.msra.mxu0 0.0
    %1071 = vmatprep.subr.mxu0 0.0
    %1072 = vmatpush1.msra.mxu0 0.0
    %1073 = vmatprep.subr.mxu0 0.0
    %1074 = vmatpush1.msra.mxu0 0.0
    %1075 = vmatprep.subr.mxu0 0.0
    %1076 = vmatpush1.msra.mxu0 0.0
    %1077 = vmatprep.subr.mxu0 0.0
    %1078 = vmatpush1.msra.mxu0 0.0
    %1079 = vmatprep.subr.mxu0 0.0
    %1080 = vmatpush1.msra.mxu0 0.0
    %1081 = vmatprep.subr.mxu0 0.0
    %1082 = vmatpush1.msra.mxu0 0.0
    %1083 = vmatprep.subr.mxu0 0.0
    %1084 = vmatpush1.msra.mxu0 0.0
    %1085 = vmatprep.subr.mxu0 0.0
    %1086 = vmatpush1.msra.mxu0 0.0
    %1087 = vmatprep.subr.mxu0 0.0
    %1088 = vmatpush1.msra.mxu0 0.0
    %1089 = vmatprep.mubr.f32.mxu0 0.0
    %1090 = vmatmul.mubr.f32.gmra.mrb[0].mxu0 %v953
    %v1091 = vpop.f32.mrb[0].mxu0
    %v1092 = vadd.f32 0.0, %v1091
    %v1093 = vpop.f32.mrb[0].mxu0
    %1094 = vdwg.mxu0
    %1095 = vmatprep.subr.mxu0 %v197
    %1096 = vmatpush1.msra.mxu0 %v196
    %1097 = vmatprep.subr.mxu0 %v200
    %1098 = vmatpush1.msra.mxu0 %v199
    %1099 = vmatprep.subr.mxu0 %v203
    %1100 = vmatpush1.msra.mxu0 %v202
    %1101 = vmatprep.subr.mxu0 %v206
    %1102 = vmatpush1.msra.mxu0 %v205
    %1103 = vmatprep.subr.mxu0 %v209
    %1104 = vmatpush1.msra.mxu0 %v208
    %1105 = vmatprep.subr.mxu0 %v212
    %1106 = vmatpush1.msra.mxu0 %v211
    %1107 = vmatprep.subr.mxu0 %v215
    %1108 = vmatpush1.msra.mxu0 %v214
    %1109 = vmatprep.subr.mxu0 %v218
    %1110 = vmatpush1.msra.mxu0 %v217
    %1111 = vmatprep.subr.mxu0 %v221
    %1112 = vmatpush1.msra.mxu0 %v220
    %1113 = vmatprep.subr.mxu0 %v224
    %1114 = vmatpush1.msra.mxu0 %v223
    %1115 = vmatprep.subr.mxu0 %v227
    %1116 = vmatpush1.msra.mxu0 %v226
    %1117 = vmatprep.subr.mxu0 %v230
    %1118 = vmatpush1.msra.mxu0 %v229
    %1119 = vmatprep.subr.mxu0 %v233
    %1120 = vmatpush1.msra.mxu0 %v232
    %1121 = vmatprep.subr.mxu0 %v236
    %1122 = vmatpush1.msra.mxu0 %v235
    %1123 = vmatprep.subr.mxu0 %v239
    %1124 = vmatpush1.msra.mxu0 %v238
    %1125 = vmatprep.subr.mxu0 %v242
    %1126 = vmatpush1.msra.mxu0 %v241
    %1127 = vmatprep.subr.mxu0 0.0
    %1128 = vmatpush1.msra.mxu0 0.0
    %1129 = vmatprep.subr.mxu0 0.0
    %1130 = vmatpush1.msra.mxu0 0.0
    %1131 = vmatprep.subr.mxu0 0.0
    %1132 = vmatpush1.msra.mxu0 0.0
    %1133 = vmatprep.subr.mxu0 0.0
    %1134 = vmatpush1.msra.mxu0 0.0
    %1135 = vmatprep.subr.mxu0 0.0
    %1136 = vmatpush1.msra.mxu0 0.0
    %1137 = vmatprep.subr.mxu0 0.0
    %1138 = vmatpush1.msra.mxu0 0.0
    %1139 = vmatprep.subr.mxu0 0.0
    %1140 = vmatpush1.msra.mxu0 0.0
    %1141 = vmatprep.subr.mxu0 0.0
    %1142 = vmatpush1.msra.mxu0 0.0
    %1143 = vmatprep.subr.mxu0 0.0
    %1144 = vmatpush1.msra.mxu0 0.0
    %1145 = vmatprep.subr.mxu0 0.0
    %1146 = vmatpush1.msra.mxu0 0.0
    %1147 = vmatprep.subr.mxu0 0.0
    %1148 = vmatpush1.msra.mxu0 0.0
    %1149 = vmatprep.subr.mxu0 0.0
    %1150 = vmatpush1.msra.mxu0 0.0
    %1151 = vmatprep.subr.mxu0 0.0
    %1152 = vmatpush1.msra.mxu0 0.0
    %1153 = vmatprep.subr.mxu0 0.0
    %1154 = vmatpush1.msra.mxu0 0.0
    %1155 = vmatprep.subr.mxu0 0.0
    %1156 = vmatpush1.msra.mxu0 0.0
    %1157 = vmatprep.subr.mxu0 0.0
    %1158 = vmatpush1.msra.mxu0 0.0
    %1159 = vmatprep.mubr.f32.mxu0 0.0
    %1160 = vmatmul.mubr.f32.gmra.mrb[0].mxu0 %v775
    %v1161 = vpop.f32.mrb[0].mxu0
    %v1162 = vadd.f32 0.0, %v1161
    %v1163 = vpop.f32.mrb[0].mxu0
    %v1164 = vadd.f32 0.0, %v1163
    %1165 = vdwg.mxu0
    %1166 = vmatprep.subr.mxu0 0.0
    %1167 = vmatpush1.msra.mxu0 %v198
    %1168 = vmatprep.subr.mxu0 0.0
    %1169 = vmatpush1.msra.mxu0 %v201
    %1170 = vmatprep.subr.mxu0 0.0
    %1171 = vmatpush1.msra.mxu0 %v204
    %1172 = vmatprep.subr.mxu0 0.0
    %1173 = vmatpush1.msra.mxu0 %v207
    %1174 = vmatprep.subr.mxu0 0.0
    %1175 = vmatpush1.msra.mxu0 %v210
    %1176 = vmatprep.subr.mxu0 0.0
    %1177 = vmatpush1.msra.mxu0 %v213
    %1178 = vmatprep.subr.mxu0 0.0
    %1179 = vmatpush1.msra.mxu0 %v216
    %1180 = vmatprep.subr.mxu0 0.0
    %1181 = vmatpush1.msra.mxu0 %v219
    %1182 = vmatprep.subr.mxu0 0.0
    %1183 = vmatpush1.msra.mxu0 %v222
    %1184 = vmatprep.subr.mxu0 0.0
    %1185 = vmatpush1.msra.mxu0 %v225
    %1186 = vmatprep.subr.mxu0 0.0
    %1187 = vmatpush1.msra.mxu0 %v228
    %1188 = vmatprep.subr.mxu0 0.0
    %1189 = vmatpush1.msra.mxu0 %v231
    %1190 = vmatprep.subr.mxu0 0.0
    %1191 = vmatpush1.msra.mxu0 %v234
    %1192 = vmatprep.subr.mxu0 0.0
    %1193 = vmatpush1.msra.mxu0 %v237
    %1194 = vmatprep.subr.mxu0 0.0
    %1195 = vmatpush1.msra.mxu0 %v240
    %1196 = vmatprep.subr.mxu0 0.0
    %1197 = vmatpush1.msra.mxu0 %v243
    %1198 = vmatprep.subr.mxu0 0.0
    %1199 = vmatpush1.msra.mxu0 0.0
    %1200 = vmatprep.subr.mxu0 0.0
    %1201 = vmatpush1.msra.mxu0 0.0
    %1202 = vmatprep.subr.mxu0 0.0
    %1203 = vmatpush1.msra.mxu0 0.0
    %1204 = vmatprep.subr.mxu0 0.0
    %1205 = vmatpush1.msra.mxu0 0.0
    %1206 = vmatprep.subr.mxu0 0.0
    %1207 = vmatpush1.msra.mxu0 0.0
    %1208 = vmatprep.subr.mxu0 0.0
    %1209 = vmatpush1.msra.mxu0 0.0
    %1210 = vmatprep.subr.mxu0 0.0
    %1211 = vmatpush1.msra.mxu0 0.0
    %1212 = vmatprep.subr.mxu0 0.0
    %1213 = vmatpush1.msra.mxu0 0.0
    %1214 = vmatprep.subr.mxu0 0.0
    %1215 = vmatpush1.msra.mxu0 0.0
    %1216 = vmatprep.subr.mxu0 0.0
    %1217 = vmatpush1.msra.mxu0 0.0
    %1218 = vmatprep.subr.mxu0 0.0
    %1219 = vmatpush1.msra.mxu0 0.0
    %1220 = vmatprep.subr.mxu0 0.0
    %1221 = vmatpush1.msra.mxu0 0.0
    %1222 = vmatprep.subr.mxu0 0.0
    %1223 = vmatpush1.msra.mxu0 0.0
    %1224 = vmatprep.subr.mxu0 0.0
    %1225 = vmatpush1.msra.mxu0 0.0
    %1226 = vmatprep.subr.mxu0 0.0
    %1227 = vmatpush1.msra.mxu0 0.0
    %1228 = vmatprep.subr.mxu0 0.0
    %1229 = vmatpush1.msra.mxu0 0.0
    %1230 = vmatprep.mubr.f32.mxu0 0.0
    %1231 = vmatmul.mubr.f32.gmra.mrb[0].mxu0 %v775
    %v1232 = vpop.f32.mrb[0].mxu0
    %v1233 = vadd.f32 0.0, %v1232
    %v1234 = vpop.f32.mrb[0].mxu0
    %1235 = vdwg.mxu0
    %v1236 = vadd.f32 %v1021, %v1162
    %v1237 = vadd.f32 %v1023, %v1164
    %v1238 = vadd.f32 %v1236, %v726
    %v1239 = vadd.f32 %v1237, %v730
    %v1240 = vxor.u32 %v1238, 2147483648
    %v1241 = vxor.u32 %v1239, 2147483648
    %v1242 = vmul.f32 %v1240, 1.442695
    %v1243 = vpow.pop %v1242
    %v1244 = vmul.f32 %v1241, 1.442695
    %v1245 = vpow.pop %v1244
    %v1246 = vadd.f32 %v1243, 1.0
    %v1247 = vadd.f32 %v1245, 1.0
    %v1248 = vrcp.pop %v1246
    %v1249 = vmul.f32 1.0, %v1248
    %v1250 = vrcp.pop %v1247
    %v1251 = vmul.f32 1.0, %v1250
    %v1252 = vadd.f32 %v1092, %v751
    %v1253 = vadd.f32 %v1233, %v758
    %v1254 = vmul.f32 %v1249, %v1253
    %v1255 = vadd.f32 %v1252, %v1254
    %v1256 = vtanh.pop %v1255
    %v1257 = vsub.f32 1.0, %v1251
    %v1258 = vmul.f32 %v1257, %v1256
    %v1259 = vmul.f32 %v1251, %v775
    %v1260 = vadd.f32 %v1258, %v1259
    %vm1261 = vcmp.gt.f32.partialorder %v788, 0.0
    %v1262 = vsel %vm1261, 1, 0
    %1263 = vset.pattern.permute.xlu0 0
    %1264 = vperm.xlu0 %1263, %v1262
    %v1265 = vpop.permute.xlu0 %1264
    %vm1266 = vcmp.eq.s32.totalorder %v1265, 1
    %v1267 = vsel %vm1266, %v953, %v774
    %v1268 = vsel %vm1266, %v1260, %v775
    %1270 = vset.pattern.permute.xlu0 0
    %1271 = vperm.xlu0 %1270, %v788
    %v1272 = vpop.permute.xlu0 %1271
    %v1274 = vmul.f32 %v1260, %v1272
    %s1275 = scalar_lea.vmem [#allocation10], 8
    %1276 = vst [vmem:[%s1275] sm:$0xff] %v1274
    %s1277 = scalar_lea.vmem [#allocation2], 48
    %v1278 = vld [vmem:[%s1277] sm:$0xff]
    %v1279 = vld [vmem:[%s1277 + $0x8] sm:$0xff]
    %v1280 = vld [vmem:[%s1277 + $0x10] sm:$0xff]
    %s1281 = scalar_lea.vmem %s1, 16
    %v1282 = vld [vmem:[%s1281] sm:$0xff]
    %1283 = vmatprep.subr.mxu0 %v101
    %1284 = vmatpush1.msra.mxu0 %v100
    %1285 = vmatprep.subr.mxu0 %v104
    %1286 = vmatpush1.msra.mxu0 %v103
    %1287 = vmatprep.subr.mxu0 %v107
    %1288 = vmatpush1.msra.mxu0 %v106
    %1289 = vmatprep.subr.mxu0 %v110
    %1290 = vmatpush1.msra.mxu0 %v109
    %1291 = vmatprep.subr.mxu0 %v113
    %1292 = vmatpush1.msra.mxu0 %v112
    %1293 = vmatprep.subr.mxu0 %v116
    %1294 = vmatpush1.msra.mxu0 %v115
    %1295 = vmatprep.subr.mxu0 %v119
    %1296 = vmatpush1.msra.mxu0 %v118
    %1297 = vmatprep.subr.mxu0 %v122
    %1298 = vmatpush1.msra.mxu0 %v121
    %1299 = vmatprep.subr.mxu0 %v125
    %1300 = vmatpush1.msra.mxu0 %v124
    %1301 = vmatprep.subr.mxu0 %v128
    %1302 = vmatpush1.msra.mxu0 %v127
    %1303 = vmatprep.subr.mxu0 %v131
    %1304 = vmatpush1.msra.mxu0 %v130
    %1305 = vmatprep.subr.mxu0 %v134
    %1306 = vmatpush1.msra.mxu0 %v133
    %1307 = vmatprep.subr.mxu0 %v137
    %1308 = vmatpush1.msra.mxu0 %v136
    %1309 = vmatprep.subr.mxu0 %v140
    %1310 = vmatpush1.msra.mxu0 %v139
    %1311 = vmatprep.subr.mxu0 %v143
    %1312 = vmatpush1.msra.mxu0 %v142
    %1313 = vmatprep.subr.mxu0 %v146
    %1314 = vmatpush1.msra.mxu0 %v145
    %1315 = vmatprep.subr.mxu0 0.0
    %1316 = vmatpush1.msra.mxu0 0.0
    %1317 = vmatprep.subr.mxu0 0.0
    %1318 = vmatpush1.msra.mxu0 0.0
    %1319 = vmatprep.subr.mxu0 0.0
    %1320 = vmatpush1.msra.mxu0 0.0
    %1321 = vmatprep.subr.mxu0 0.0
    %1322 = vmatpush1.msra.mxu0 0.0
    %1323 = vmatprep.subr.mxu0 0.0
    %1324 = vmatpush1.msra.mxu0 0.0
    %1325 = vmatprep.subr.mxu0 0.0
    %1326 = vmatpush1.msra.mxu0 0.0
    %1327 = vmatprep.subr.mxu0 0.0
    %1328 = vmatpush1.msra.mxu0 0.0
    %1329 = vmatprep.subr.mxu0 0.0
    %1330 = vmatpush1.msra.mxu0 0.0
    %1331 = vmatprep.subr.mxu0 0.0
    %1332 = vmatpush1.msra.mxu0 0.0
    %1333 = vmatprep.subr.mxu0 0.0
    %1334 = vmatpush1.msra.mxu0 0.0
    %1335 = vmatprep.subr.mxu0 0.0
    %1336 = vmatpush1.msra.mxu0 0.0
    %1337 = vmatprep.subr.mxu0 0.0
    %1338 = vmatpush1.msra.mxu0 0.0
    %1339 = vmatprep.subr.mxu0 0.0
    %1340 = vmatpush1.msra.mxu0 0.0
    %1341 = vmatprep.subr.mxu0 0.0
    %1342 = vmatpush1.msra.mxu0 0.0
    %1343 = vmatprep.subr.mxu0 0.0
    %1344 = vmatpush1.msra.mxu0 0.0
    %1345 = vmatprep.subr.mxu0 0.0
    %1346 = vmatpush1.msra.mxu0 0.0
    %1347 = vmatprep.mubr.f32.mxu0 0.0
    %1348 = vmatmul.mubr.f32.gmra.mrb[0].mxu0 %v1267
    %v1349 = vpop.f32.mrb[0].mxu0
    %v1350 = vadd.f32 0.0, %v1349
    %v1351 = vpop.f32.mrb[0].mxu0
    %v1352 = vadd.f32 0.0, %v1351
    %1353 = vdwg.mxu0
    %1354 = vmatprep.subr.mxu0 0.0
    %1355 = vmatpush1.msra.mxu0 %v102
    %1356 = vmatprep.subr.mxu0 0.0
    %1357 = vmatpush1.msra.mxu0 %v105
    %1358 = vmatprep.subr.mxu0 0.0
    %1359 = vmatpush1.msra.mxu0 %v108
    %1360 = vmatprep.subr.mxu0 0.0
    %1361 = vmatpush1.msra.mxu0 %v111
    %1362 = vmatprep.subr.mxu0 0.0
    %1363 = vmatpush1.msra.mxu0 %v114
    %1364 = vmatprep.subr.mxu0 0.0
    %1365 = vmatpush1.msra.mxu0 %v117
    %1366 = vmatprep.subr.mxu0 0.0
    %1367 = vmatpush1.msra.mxu0 %v120
    %1368 = vmatprep.subr.mxu0 0.0
    %1369 = vmatpush1.msra.mxu0 %v123
    %1370 = vmatprep.subr.mxu0 0.0
    %1371 = vmatpush1.msra.mxu0 %v126
    %1372 = vmatprep.subr.mxu0 0.0
    %1373 = vmatpush1.msra.mxu0 %v129
    %1374 = vmatprep.subr.mxu0 0.0
    %1375 = vmatpush1.msra.mxu0 %v132
    %1376 = vmatprep.subr.mxu0 0.0
    %1377 = vmatpush1.msra.mxu0 %v135
    %1378 = vmatprep.subr.mxu0 0.0
    %1379 = vmatpush1.msra.mxu0 %v138
    %1380 = vmatprep.subr.mxu0 0.0
    %1381 = vmatpush1.msra.mxu0 %v141
    %1382 = vmatprep.subr.mxu0 0.0
    %1383 = vmatpush1.msra.mxu0 %v144
    %1384 = vmatprep.subr.mxu0 0.0
    %1385 = vmatpush1.msra.mxu0 %v147
    %1386 = vmatprep.subr.mxu0 0.0
    %1387 = vmatpush1.msra.mxu0 0.0
    %1388 = vmatprep.subr.mxu0 0.0
    %1389 = vmatpush1.msra.mxu0 0.0
    %1390 = vmatprep.subr.mxu0 0.0
    %1391 = vmatpush1.msra.mxu0 0.0
    %1392 = vmatprep.subr.mxu0 0.0
    %1393 = vmatpush1.msra.mxu0 0.0
    %1394 = vmatprep.subr.mxu0 0.0
    %1395 = vmatpush1.msra.mxu0 0.0
    %1396 = vmatprep.subr.mxu0 0.0
    %1397 = vmatpush1.msra.mxu0 0.0
    %1398 = vmatprep.subr.mxu0 0.0
    %1399 = vmatpush1.msra.mxu0 0.0
    %1400 = vmatprep.subr.mxu0 0.0
    %1401 = vmatpush1.msra.mxu0 0.0
    %1402 = vmatprep.subr.mxu0 0.0
    %1403 = vmatpush1.msra.mxu0 0.0
    %1404 = vmatprep.subr.mxu0 0.0
    %1405 = vmatpush1.msra.mxu0 0.0
    %1406 = vmatprep.subr.mxu0 0.0
    %1407 = vmatpush1.msra.mxu0 0.0
    %1408 = vmatprep.subr.mxu0 0.0
    %1409 = vmatpush1.msra.mxu0 0.0
    %1410 = vmatprep.subr.mxu0 0.0
    %1411 = vmatpush1.msra.mxu0 0.0
    %1412 = vmatprep.subr.mxu0 0.0
    %1413 = vmatpush1.msra.mxu0 0.0
    %1414 = vmatprep.subr.mxu0 0.0
    %1415 = vmatpush1.msra.mxu0 0.0
    %1416 = vmatprep.subr.mxu0 0.0
    %1417 = vmatpush1.msra.mxu0 0.0
    %1418 = vmatprep.mubr.f32.mxu0 0.0
    %1419 = vmatmul.mubr.f32.gmra.mrb[0].mxu0 %v1267
    %v1420 = vpop.f32.mrb[0].mxu0
    %v1421 = vadd.f32 0.0, %v1420
    %v1422 = vpop.f32.mrb[0].mxu0
    %1423 = vdwg.mxu0
    %v1424 = vadd.f32 %v1278, %v1350
    %v1425 = vadd.f32 %v1279, %v1352
    %v1426 = vadd.f32 %v1424, %v403
    %v1427 = vadd.f32 %v1425, %v407
    %v1428 = vxor.u32 %v1426, 2147483648
    %v1429 = vxor.u32 %v1427, 2147483648
    %v1430 = vmul.f32 %v1428, 1.442695
    %v1431 = vpow.pop %v1430
    %v1432 = vmul.f32 %v1429, 1.442695
    %v1433 = vpow.pop %v1432
    %v1434 = vadd.f32 %v1431, 1.0
    %v1435 = vadd.f32 %v1433, 1.0
    %v1436 = vrcp.pop %v1434
    %v1437 = vmul.f32 1.0, %v1436
    %v1438 = vrcp.pop %v1435
    %v1439 = vmul.f32 1.0, %v1438
    %v1440 = vadd.f32 %v1421, %v428
    %v1441 = vmul.f32 %v1437, %v1440
    %v1442 = vadd.f32 %v1280, %v1441
    %v1443 = vtanh.pop %v1442
    %v1444 = vsub.f32 1.0, %v1439
    %v1445 = vmul.f32 %v1444, %v1443
    %v1446 = vmul.f32 %v1439, %v1267
    %v1447 = vadd.f32 %v1445, %v1446
    %1448 = vmatprep.subr.mxu0 %v149
    %1449 = vmatpush1.msra.mxu0 %v148
    %1450 = vmatprep.subr.mxu0 %v152
    %1451 = vmatpush1.msra.mxu0 %v151
    %1452 = vmatprep.subr.mxu0 %v155
    %1453 = vmatpush1.msra.mxu0 %v154
    %1454 = vmatprep.subr.mxu0 %v158
    %1455 = vmatpush1.msra.mxu0 %v157
    %1456 = vmatprep.subr.mxu0 %v161
    %1457 = vmatpush1.msra.mxu0 %v160
    %1458 = vmatprep.subr.mxu0 %v164
    %1459 = vmatpush1.msra.mxu0 %v163
    %1460 = vmatprep.subr.mxu0 %v167
    %1461 = vmatpush1.msra.mxu0 %v166
    %1462 = vmatprep.subr.mxu0 %v170
    %1463 = vmatpush1.msra.mxu0 %v169
    %1464 = vmatprep.subr.mxu0 %v173
    %1465 = vmatpush1.msra.mxu0 %v172
    %1466 = vmatprep.subr.mxu0 %v176
    %1467 = vmatpush1.msra.mxu0 %v175
    %1468 = vmatprep.subr.mxu0 %v179
    %1469 = vmatpush1.msra.mxu0 %v178
    %1470 = vmatprep.subr.mxu0 %v182
    %1471 = vmatpush1.msra.mxu0 %v181
    %1472 = vmatprep.subr.mxu0 %v185
    %1473 = vmatpush1.msra.mxu0 %v184
    %1474 = vmatprep.subr.mxu0 %v188
    %1475 = vmatpush1.msra.mxu0 %v187
    %1476 = vmatprep.subr.mxu0 %v191
    %1477 = vmatpush1.msra.mxu0 %v190
    %1478 = vmatprep.subr.mxu0 %v194
    %1479 = vmatpush1.msra.mxu0 %v193
    %1480 = vmatprep.subr.mxu0 0.0
    %1481 = vmatpush1.msra.mxu0 0.0
    %1482 = vmatprep.subr.mxu0 0.0
    %1483 = vmatpush1.msra.mxu0 0.0
    %1484 = vmatprep.subr.mxu0 0.0
    %1485 = vmatpush1.msra.mxu0 0.0
    %1486 = vmatprep.subr.mxu0 0.0
    %1487 = vmatpush1.msra.mxu0 0.0
    %1488 = vmatprep.subr.mxu0 0.0
    %1489 = vmatpush1.msra.mxu0 0.0
    %1490 = vmatprep.subr.mxu0 0.0
    %1491 = vmatpush1.msra.mxu0 0.0
    %1492 = vmatprep.subr.mxu0 0.0
    %1493 = vmatpush1.msra.mxu0 0.0
    %1494 = vmatprep.subr.mxu0 0.0
    %1495 = vmatpush1.msra.mxu0 0.0
    %1496 = vmatprep.subr.mxu0 0.0
    %1497 = vmatpush1.msra.mxu0 0.0
    %1498 = vmatprep.subr.mxu0 0.0
    %1499 = vmatpush1.msra.mxu0 0.0
    %1500 = vmatprep.subr.mxu0 0.0
    %1501 = vmatpush1.msra.mxu0 0.0
    %1502 = vmatprep.subr.mxu0 0.0
    %1503 = vmatpush1.msra.mxu0 0.0
    %1504 = vmatprep.subr.mxu0 0.0
    %1505 = vmatpush1.msra.mxu0 0.0
    %1506 = vmatprep.subr.mxu0 0.0
    %1507 = vmatpush1.msra.mxu0 0.0
    %1508 = vmatprep.subr.mxu0 0.0
    %1509 = vmatpush1.msra.mxu0 0.0
    %1510 = vmatprep.subr.mxu0 0.0
    %1511 = vmatpush1.msra.mxu0 0.0
    %1512 = vmatprep.mubr.f32.mxu0 0.0
    %1513 = vmatmul.mubr.f32.gmra.mrb[0].mxu0 %v1447
    %v1514 = vpop.f32.mrb[0].mxu0
    %v1515 = vadd.f32 0.0, %v1514
    %v1516 = vpop.f32.mrb[0].mxu0
    %v1517 = vadd.f32 0.0, %v1516
    %1518 = vdwg.mxu0
    %1519 = vmatprep.subr.mxu0 0.0
    %1520 = vmatpush1.msra.mxu0 %v150
    %1521 = vmatprep.subr.mxu0 0.0
    %1522 = vmatpush1.msra.mxu0 %v153
    %1523 = vmatprep.subr.mxu0 0.0
    %1524 = vmatpush1.msra.mxu0 %v156
    %1525 = vmatprep.subr.mxu0 0.0
    %1526 = vmatpush1.msra.mxu0 %v159
    %1527 = vmatprep.subr.mxu0 0.0
    %1528 = vmatpush1.msra.mxu0 %v162
    %1529 = vmatprep.subr.mxu0 0.0
    %1530 = vmatpush1.msra.mxu0 %v165
    %1531 = vmatprep.subr.mxu0 0.0
    %1532 = vmatpush1.msra.mxu0 %v168
    %1533 = vmatprep.subr.mxu0 0.0
    %1534 = vmatpush1.msra.mxu0 %v171
    %1535 = vmatprep.subr.mxu0 0.0
    %1536 = vmatpush1.msra.mxu0 %v174
    %1537 = vmatprep.subr.mxu0 0.0
    %1538 = vmatpush1.msra.mxu0 %v177
    %1539 = vmatprep.subr.mxu0 0.0
    %1540 = vmatpush1.msra.mxu0 %v180
    %1541 = vmatprep.subr.mxu0 0.0
    %1542 = vmatpush1.msra.mxu0 %v183
    %1543 = vmatprep.subr.mxu0 0.0
    %1544 = vmatpush1.msra.mxu0 %v186
    %1545 = vmatprep.subr.mxu0 0.0
    %1546 = vmatpush1.msra.mxu0 %v189
    %1547 = vmatprep.subr.mxu0 0.0
    %1548 = vmatpush1.msra.mxu0 %v192
    %1549 = vmatprep.subr.mxu0 0.0
    %1550 = vmatpush1.msra.mxu0 %v195
    %1551 = vmatprep.subr.mxu0 0.0
    %1552 = vmatpush1.msra.mxu0 0.0
    %1553 = vmatprep.subr.mxu0 0.0
    %1554 = vmatpush1.msra.mxu0 0.0
    %1555 = vmatprep.subr.mxu0 0.0
    %1556 = vmatpush1.msra.mxu0 0.0
    %1557 = vmatprep.subr.mxu0 0.0
    %1558 = vmatpush1.msra.mxu0 0.0
    %1559 = vmatprep.subr.mxu0 0.0
    %1560 = vmatpush1.msra.mxu0 0.0
    %1561 = vmatprep.subr.mxu0 0.0
    %1562 = vmatpush1.msra.mxu0 0.0
    %1563 = vmatprep.subr.mxu0 0.0
    %1564 = vmatpush1.msra.mxu0 0.0
    %1565 = vmatprep.subr.mxu0 0.0
    %1566 = vmatpush1.msra.mxu0 0.0
    %1567 = vmatprep.subr.mxu0 0.0
    %1568 = vmatpush1.msra.mxu0 0.0
    %1569 = vmatprep.subr.mxu0 0.0
    %1570 = vmatpush1.msra.mxu0 0.0
    %1571 = vmatprep.subr.mxu0 0.0
    %1572 = vmatpush1.msra.mxu0 0.0
    %1573 = vmatprep.subr.mxu0 0.0
    %1574 = vmatpush1.msra.mxu0 0.0
    %1575 = vmatprep.subr.mxu0 0.0
    %1576 = vmatpush1.msra.mxu0 0.0
    %1577 = vmatprep.subr.mxu0 0.0
    %1578 = vmatpush1.msra.mxu0 0.0
    %1579 = vmatprep.subr.mxu0 0.0
    %1580 = vmatpush1.msra.mxu0 0.0
    %1581 = vmatprep.subr.mxu0 0.0
    %1582 = vmatpush1.msra.mxu0 0.0
    %1583 = vmatprep.mubr.f32.mxu0 0.0
    %1584 = vmatmul.mubr.f32.gmra.mrb[0].mxu0 %v1447
    %v1585 = vpop.f32.mrb[0].mxu0
    %v1586 = vadd.f32 0.0, %v1585
    %v1587 = vpop.f32.mrb[0].mxu0
    %1588 = vdwg.mxu0
    %1589 = vmatprep.subr.mxu0 %v197
    %1590 = vmatpush1.msra.mxu0 %v196
    %1591 = vmatprep.subr.mxu0 %v200
    %1592 = vmatpush1.msra.mxu0 %v199
    %1593 = vmatprep.subr.mxu0 %v203
    %1594 = vmatpush1.msra.mxu0 %v202
    %1595 = vmatprep.subr.mxu0 %v206
    %1596 = vmatpush1.msra.mxu0 %v205
    %1597 = vmatprep.subr.mxu0 %v209
    %1598 = vmatpush1.msra.mxu0 %v208
    %1599 = vmatprep.subr.mxu0 %v212
    %1600 = vmatpush1.msra.mxu0 %v211
    %1601 = vmatprep.subr.mxu0 %v215
    %1602 = vmatpush1.msra.mxu0 %v214
    %1603 = vmatprep.subr.mxu0 %v218
    %1604 = vmatpush1.msra.mxu0 %v217
    %1605 = vmatprep.subr.mxu0 %v221
    %1606 = vmatpush1.msra.mxu0 %v220
    %1607 = vmatprep.subr.mxu0 %v224
    %1608 = vmatpush1.msra.mxu0 %v223
    %1609 = vmatprep.subr.mxu0 %v227
    %1610 = vmatpush1.msra.mxu0 %v226
    %1611 = vmatprep.subr.mxu0 %v230
    %1612 = vmatpush1.msra.mxu0 %v229
    %1613 = vmatprep.subr.mxu0 %v233
    %1614 = vmatpush1.msra.mxu0 %v232
    %1615 = vmatprep.subr.mxu0 %v236
    %1616 = vmatpush1.msra.mxu0 %v235
    %1617 = vmatprep.subr.mxu0 %v239
    %1618 = vmatpush1.msra.mxu0 %v238
    %1619 = vmatprep.subr.mxu0 %v242
    %1620 = vmatpush1.msra.mxu0 %v241
    %1621 = vmatprep.subr.mxu0 0.0
    %1622 = vmatpush1.msra.mxu0 0.0
    %1623 = vmatprep.subr.mxu0 0.0
    %1624 = vmatpush1.msra.mxu0 0.0
    %1625 = vmatprep.subr.mxu0 0.0
    %1626 = vmatpush1.msra.mxu0 0.0
    %1627 = vmatprep.subr.mxu0 0.0
    %1628 = vmatpush1.msra.mxu0 0.0
    %1629 = vmatprep.subr.mxu0 0.0
    %1630 = vmatpush1.msra.mxu0 0.0
    %1631 = vmatprep.subr.mxu0 0.0
    %1632 = vmatpush1.msra.mxu0 0.0
    %1633 = vmatprep.subr.mxu0 0.0
    %1634 = vmatpush1.msra.mxu0 0.0
    %1635 = vmatprep.subr.mxu0 0.0
    %1636 = vmatpush1.msra.mxu0 0.0
    %1637 = vmatprep.subr.mxu0 0.0
    %1638 = vmatpush1.msra.mxu0 0.0
    %1639 = vmatprep.subr.mxu0 0.0
    %1640 = vmatpush1.msra.mxu0 0.0
    %1641 = vmatprep.subr.mxu0 0.0
    %1642 = vmatpush1.msra.mxu0 0.0
    %1643 = vmatprep.subr.mxu0 0.0
    %1644 = vmatpush1.msra.mxu0 0.0
    %1645 = vmatprep.subr.mxu0 0.0
    %1646 = vmatpush1.msra.mxu0 0.0
    %1647 = vmatprep.subr.mxu0 0.0
    %1648 = vmatpush1.msra.mxu0 0.0
    %1649 = vmatprep.subr.mxu0 0.0
    %1650 = vmatpush1.msra.mxu0 0.0
    %1651 = vmatprep.subr.mxu0 0.0
    %1652 = vmatpush1.msra.mxu0 0.0
    %1653 = vmatprep.mubr.f32.mxu0 0.0
    %1654 = vmatmul.mubr.f32.gmra.mrb[0].mxu0 %v1268
    %v1655 = vpop.f32.mrb[0].mxu0
    %v1656 = vadd.f32 0.0, %v1655
    %v1657 = vpop.f32.mrb[0].mxu0
    %v1658 = vadd.f32 0.0, %v1657
    %1659 = vdwg.mxu0
    %1660 = vmatprep.subr.mxu0 0.0
    %1661 = vmatpush1.msra.mxu0 %v198
    %1662 = vmatprep.subr.mxu0 0.0
    %1663 = vmatpush1.msra.mxu0 %v201
    %1664 = vmatprep.subr.mxu0 0.0
    %1665 = vmatpush1.msra.mxu0 %v204
    %1666 = vmatprep.subr.mxu0 0.0
    %1667 = vmatpush1.msra.mxu0 %v207
    %1668 = vmatprep.subr.mxu0 0.0
    %1669 = vmatpush1.msra.mxu0 %v210
    %1670 = vmatprep.subr.mxu0 0.0
    %1671 = vmatpush1.msra.mxu0 %v213
    %1672 = vmatprep.subr.mxu0 0.0
    %1673 = vmatpush1.msra.mxu0 %v216
    %1674 = vmatprep.subr.mxu0 0.0
    %1675 = vmatpush1.msra.mxu0 %v219
    %1676 = vmatprep.subr.mxu0 0.0
    %1677 = vmatpush1.msra.mxu0 %v222
    %1678 = vmatprep.subr.mxu0 0.0
    %1679 = vmatpush1.msra.mxu0 %v225
    %1680 = vmatprep.subr.mxu0 0.0
    %1681 = vmatpush1.msra.mxu0 %v228
    %1682 = vmatprep.subr.mxu0 0.0
    %1683 = vmatpush1.msra.mxu0 %v231
    %1684 = vmatprep.subr.mxu0 0.0
    %1685 = vmatpush1.msra.mxu0 %v234
    %1686 = vmatprep.subr.mxu0 0.0
    %1687 = vmatpush1.msra.mxu0 %v237
    %1688 = vmatprep.subr.mxu0 0.0
    %1689 = vmatpush1.msra.mxu0 %v240
    %1690 = vmatprep.subr.mxu0 0.0
    %1691 = vmatpush1.msra.mxu0 %v243
    %1692 = vmatprep.subr.mxu0 0.0
    %1693 = vmatpush1.msra.mxu0 0.0
    %1694 = vmatprep.subr.mxu0 0.0
    %1695 = vmatpush1.msra.mxu0 0.0
    %1696 = vmatprep.subr.mxu0 0.0
    %1697 = vmatpush1.msra.mxu0 0.0
    %1698 = vmatprep.subr.mxu0 0.0
    %1699 = vmatpush1.msra.mxu0 0.0
    %1700 = vmatprep.subr.mxu0 0.0
    %1701 = vmatpush1.msra.mxu0 0.0
    %1702 = vmatprep.subr.mxu0 0.0
    %1703 = vmatpush1.msra.mxu0 0.0
    %1704 = vmatprep.subr.mxu0 0.0
    %1705 = vmatpush1.msra.mxu0 0.0
    %1706 = vmatprep.subr.mxu0 0.0
    %1707 = vmatpush1.msra.mxu0 0.0
    %1708 = vmatprep.subr.mxu0 0.0
    %1709 = vmatpush1.msra.mxu0 0.0
    %1710 = vmatprep.subr.mxu0 0.0
    %1711 = vmatpush1.msra.mxu0 0.0
    %1712 = vmatprep.subr.mxu0 0.0
    %1713 = vmatpush1.msra.mxu0 0.0
    %1714 = vmatprep.subr.mxu0 0.0
    %1715 = vmatpush1.msra.mxu0 0.0
    %1716 = vmatprep.subr.mxu0 0.0
    %1717 = vmatpush1.msra.mxu0 0.0
    %1718 = vmatprep.subr.mxu0 0.0
    %1719 = vmatpush1.msra.mxu0 0.0
    %1720 = vmatprep.subr.mxu0 0.0
    %1721 = vmatpush1.msra.mxu0 0.0
    %1722 = vmatprep.subr.mxu0 0.0
    %1723 = vmatpush1.msra.mxu0 0.0
    %1724 = vmatprep.mubr.f32.mxu0 0.0
    %1725 = vmatmul.mubr.f32.gmra.mrb[0].mxu0 %v1268
    %v1726 = vpop.f32.mrb[0].mxu0
    %v1727 = vadd.f32 0.0, %v1726
    %v1728 = vpop.f32.mrb[0].mxu0
    %1729 = vdwg.mxu0
    %v1730 = vadd.f32 %v1515, %v1656
    %v1731 = vadd.f32 %v1517, %v1658
    %v1732 = vadd.f32 %v1730, %v726
    %v1733 = vadd.f32 %v1731, %v730
    %v1734 = vxor.u32 %v1732, 2147483648
    %v1735 = vxor.u32 %v1733, 2147483648
    %v1736 = vmul.f32 %v1734, 1.442695
    %v1737 = vpow.pop %v1736
    %v1738 = vmul.f32 %v1735, 1.442695
    %v1739 = vpow.pop %v1738
    %v1740 = vadd.f32 %v1737, 1.0
    %v1741 = vadd.f32 %v1739, 1.0
    %v1742 = vrcp.pop %v1740
    %v1743 = vmul.f32 1.0, %v1742
    %v1744 = vrcp.pop %v1741
    %v1745 = vmul.f32 1.0, %v1744
    %v1746 = vadd.f32 %v1586, %v751
    %v1747 = vadd.f32 %v1727, %v758
    %v1748 = vmul.f32 %v1743, %v1747
    %v1749 = vadd.f32 %v1746, %v1748
    %v1750 = vtanh.pop %v1749
    %v1751 = vsub.f32 1.0, %v1745
    %v1752 = vmul.f32 %v1751, %v1750
    %v1753 = vmul.f32 %v1745, %v1268
    %v1754 = vadd.f32 %v1752, %v1753
    %vm1755 = vcmp.gt.f32.partialorder %v1282, 0.0
    %v1756 = vsel %vm1755, 1, 0
    %1757 = vset.pattern.permute.xlu0 0
    %1758 = vperm.xlu0 %1757, %v1756
    %v1759 = vpop.permute.xlu0 %1758
    %vm1760 = vcmp.eq.s32.totalorder %v1759, 1
    %v1761 = vsel %vm1760, %v1447, %v1267
    %v1762 = vsel %vm1760, %v1754, %v1268
    %1764 = vset.pattern.permute.xlu0 0
    %1765 = vperm.xlu0 %1764, %v1282
    %v1766 = vpop.permute.xlu0 %1765
    %v1768 = vmul.f32 %v1754, %v1766
    %s1769 = scalar_lea.vmem [#allocation10], 16
    %1770 = vst [vmem:[%s1769] sm:$0xff] %v1768
    %s1771 = scalar_lea.vmem [#allocation2], 72
    %v1772 = vld [vmem:[%s1771] sm:$0xff]
    %v1773 = vld [vmem:[%s1771 + $0x8] sm:$0xff]
    %v1774 = vld [vmem:[%s1771 + $0x10] sm:$0xff]
    %s1775 = scalar_lea.vmem %s1, 24
    %v1776 = vld [vmem:[%s1775] sm:$0xff]
    %1777 = vmatprep.subr.mxu0 %v101
    %1778 = vmatpush1.msra.mxu0 %v100
    %1779 = vmatprep.subr.mxu0 %v104
    %1780 = vmatpush1.msra.mxu0 %v103
    %1781 = vmatprep.subr.mxu0 %v107
    %1782 = vmatpush1.msra.mxu0 %v106
    %1783 = vmatprep.subr.mxu0 %v110
    %1784 = vmatpush1.msra.mxu0 %v109
    %1785 = vmatprep.subr.mxu0 %v113
    %1786 = vmatpush1.msra.mxu0 %v112
    %1787 = vmatprep.subr.mxu0 %v116
    %1788 = vmatpush1.msra.mxu0 %v115
    %1789 = vmatprep.subr.mxu0 %v119
    %1790 = vmatpush1.msra.mxu0 %v118
    %1791 = vmatprep.subr.mxu0 %v122
    %1792 = vmatpush1.msra.mxu0 %v121
    %1793 = vmatprep.subr.mxu0 %v125
    %1794 = vmatpush1.msra.mxu0 %v124
    %1795 = vmatprep.subr.mxu0 %v128
    %1796 = vmatpush1.msra.mxu0 %v127
    %1797 = vmatprep.subr.mxu0 %v131
    %1798 = vmatpush1.msra.mxu0 %v130
    %1799 = vmatprep.subr.mxu0 %v134
    %1800 = vmatpush1.msra.mxu0 %v133
    %1801 = vmatprep.subr.mxu0 %v137
    %1802 = vmatpush1.msra.mxu0 %v136
    %1803 = vmatprep.subr.mxu0 %v140
    %1804 = vmatpush1.msra.mxu0 %v139
    %1805 = vmatprep.subr.mxu0 %v143
    %1806 = vmatpush1.msra.mxu0 %v142
    %1807 = vmatprep.subr.mxu0 %v146
    %1808 = vmatpush1.msra.mxu0 %v145
    %1809 = vmatprep.subr.mxu0 0.0
    %1810 = vmatpush1.msra.mxu0 0.0
    %1811 = vmatprep.subr.mxu0 0.0
    %1812 = vmatpush1.msra.mxu0 0.0
    %1813 = vmatprep.subr.mxu0 0.0
    %1814 = vmatpush1.msra.mxu0 0.0
    %1815 = vmatprep.subr.mxu0 0.0
    %1816 = vmatpush1.msra.mxu0 0.0
    %1817 = vmatprep.subr.mxu0 0.0
    %1818 = vmatpush1.msra.mxu0 0.0
    %1819 = vmatprep.subr.mxu0 0.0
    %1820 = vmatpush1.msra.mxu0 0.0
    %1821 = vmatprep.subr.mxu0 0.0
    %1822 = vmatpush1.msra.mxu0 0.0
    %1823 = vmatprep.subr.mxu0 0.0
    %1824 = vmatpush1.msra.mxu0 0.0
    %1825 = vmatprep.subr.mxu0 0.0
    %1826 = vmatpush1.msra.mxu0 0.0
    %1827 = vmatprep.subr.mxu0 0.0
    %1828 = vmatpush1.msra.mxu0 0.0
    %1829 = vmatprep.subr.mxu0 0.0
    %1830 = vmatpush1.msra.mxu0 0.0
    %1831 = vmatprep.subr.mxu0 0.0
    %1832 = vmatpush1.msra.mxu0 0.0
    %1833 = vmatprep.subr.mxu0 0.0
    %1834 = vmatpush1.msra.mxu0 0.0
    %1835 = vmatprep.subr.mxu0 0.0
    %1836 = vmatpush1.msra.mxu0 0.0
    %1837 = vmatprep.subr.mxu0 0.0
    %1838 = vmatpush1.msra.mxu0 0.0
    %1839 = vmatprep.subr.mxu0 0.0
    %1840 = vmatpush1.msra.mxu0 0.0
    %1841 = vmatprep.mubr.f32.mxu0 0.0
    %1842 = vmatmul.mubr.f32.gmra.mrb[0].mxu0 %v1761
    %v1843 = vpop.f32.mrb[0].mxu0
    %v1844 = vadd.f32 0.0, %v1843
    %v1845 = vpop.f32.mrb[0].mxu0
    %v1846 = vadd.f32 0.0, %v1845
    %1847 = vdwg.mxu0
    %1848 = vmatprep.subr.mxu0 0.0
    %1849 = vmatpush1.msra.mxu0 %v102
    %1850 = vmatprep.subr.mxu0 0.0
    %1851 = vmatpush1.msra.mxu0 %v105
    %1852 = vmatprep.subr.mxu0 0.0
    %1853 = vmatpush1.msra.mxu0 %v108
    %1854 = vmatprep.subr.mxu0 0.0
    %1855 = vmatpush1.msra.mxu0 %v111
    %1856 = vmatprep.subr.mxu0 0.0
    %1857 = vmatpush1.msra.mxu0 %v114
    %1858 = vmatprep.subr.mxu0 0.0
    %1859 = vmatpush1.msra.mxu0 %v117
    %1860 = vmatprep.subr.mxu0 0.0
    %1861 = vmatpush1.msra.mxu0 %v120
    %1862 = vmatprep.subr.mxu0 0.0
    %1863 = vmatpush1.msra.mxu0 %v123
    %1864 = vmatprep.subr.mxu0 0.0
    %1865 = vmatpush1.msra.mxu0 %v126
    %1866 = vmatprep.subr.mxu0 0.0
    %1867 = vmatpush1.msra.mxu0 %v129
    %1868 = vmatprep.subr.mxu0 0.0
    %1869 = vmatpush1.msra.mxu0 %v132
    %1870 = vmatprep.subr.mxu0 0.0
    %1871 = vmatpush1.msra.mxu0 %v135
    %1872 = vmatprep.subr.mxu0 0.0
    %1873 = vmatpush1.msra.mxu0 %v138
    %1874 = vmatprep.subr.mxu0 0.0
    %1875 = vmatpush1.msra.mxu0 %v141
    %1876 = vmatprep.subr.mxu0 0.0
    %1877 = vmatpush1.msra.mxu0 %v144
    %1878 = vmatprep.subr.mxu0 0.0
    %1879 = vmatpush1.msra.mxu0 %v147
    %1880 = vmatprep.subr.mxu0 0.0
    %1881 = vmatpush1.msra.mxu0 0.0
    %1882 = vmatprep.subr.mxu0 0.0
    %1883 = vmatpush1.msra.mxu0 0.0
    %1884 = vmatprep.subr.mxu0 0.0
    %1885 = vmatpush1.msra.mxu0 0.0
    %1886 = vmatprep.subr.mxu0 0.0
    %1887 = vmatpush1.msra.mxu0 0.0
    %1888 = vmatprep.subr.mxu0 0.0
    %1889 = vmatpush1.msra.mxu0 0.0
    %1890 = vmatprep.subr.mxu0 0.0
    %1891 = vmatpush1.msra.mxu0 0.0
    %1892 = vmatprep.subr.mxu0 0.0
    %1893 = vmatpush1.msra.mxu0 0.0
    %1894 = vmatprep.subr.mxu0 0.0
    %1895 = vmatpush1.msra.mxu0 0.0
    %1896 = vmatprep.subr.mxu0 0.0
    %1897 = vmatpush1.msra.mxu0 0.0
    %1898 = vmatprep.subr.mxu0 0.0
    %1899 = vmatpush1.msra.mxu0 0.0
    %1900 = vmatprep.subr.mxu0 0.0
    %1901 = vmatpush1.msra.mxu0 0.0
    %1902 = vmatprep.subr.mxu0 0.0
    %1903 = vmatpush1.msra.mxu0 0.0
    %1904 = vmatprep.subr.mxu0 0.0
    %1905 = vmatpush1.msra.mxu0 0.0
    %1906 = vmatprep.subr.mxu0 0.0
    %1907 = vmatpush1.msra.mxu0 0.0
    %1908 = vmatprep.subr.mxu0 0.0
    %1909 = vmatpush1.msra.mxu0 0.0
    %1910 = vmatprep.subr.mxu0 0.0
    %1911 = vmatpush1.msra.mxu0 0.0
    %1912 = vmatprep.mubr.f32.mxu0 0.0
    %1913 = vmatmul.mubr.f32.gmra.mrb[0].mxu0 %v1761
    %v1914 = vpop.f32.mrb[0].mxu0
    %v1915 = vadd.f32 0.0, %v1914
    %v1916 = vpop.f32.mrb[0].mxu0
    %1917 = vdwg.mxu0
    %v1918 = vadd.f32 %v1772, %v1844
    %v1919 = vadd.f32 %v1773, %v1846
    %v1920 = vadd.f32 %v1918, %v403
    %v1921 = vadd.f32 %v1919, %v407
    %v1922 = vxor.u32 %v1920, 2147483648
    %v1923 = vxor.u32 %v1921, 2147483648
    %v1924 = vmul.f32 %v1922, 1.442695
    %v1925 = vpow.pop %v1924
    %v1926 = vmul.f32 %v1923, 1.442695
    %v1927 = vpow.pop %v1926
    %v1928 = vadd.f32 %v1925, 1.0
    %v1929 = vadd.f32 %v1927, 1.0
    %v1930 = vrcp.pop %v1928
    %v1931 = vmul.f32 1.0, %v1930
    %v1932 = vrcp.pop %v1929
    %v1933 = vmul.f32 1.0, %v1932
    %v1934 = vadd.f32 %v1915, %v428
    %v1935 = vmul.f32 %v1931, %v1934
    %v1936 = vadd.f32 %v1774, %v1935
    %v1937 = vtanh.pop %v1936
    %v1938 = vsub.f32 1.0, %v1933
    %v1939 = vmul.f32 %v1938, %v1937
    %v1940 = vmul.f32 %v1933, %v1761
    %v1941 = vadd.f32 %v1939, %v1940
    %1942 = vmatprep.subr.mxu0 %v149
    %1943 = vmatpush1.msra.mxu0 %v148
    %1944 = vmatprep.subr.mxu0 %v152
    %1945 = vmatpush1.msra.mxu0 %v151
    %1946 = vmatprep.subr.mxu0 %v155
    %1947 = vmatpush1.msra.mxu0 %v154
    %1948 = vmatprep.subr.mxu0 %v158
    %1949 = vmatpush1.msra.mxu0 %v157
    %1950 = vmatprep.subr.mxu0 %v161
    %1951 = vmatpush1.msra.mxu0 %v160
    %1952 = vmatprep.subr.mxu0 %v164
    %1953 = vmatpush1.msra.mxu0 %v163
    %1954 = vmatprep.subr.mxu0 %v167
    %1955 = vmatpush1.msra.mxu0 %v166
    %1956 = vmatprep.subr.mxu0 %v170
    %1957 = vmatpush1.msra.mxu0 %v169
    %1958 = vmatprep.subr.mxu0 %v173
    %1959 = vmatpush1.msra.mxu0 %v172
    %1960 = vmatprep.subr.mxu0 %v176
    %1961 = vmatpush1.msra.mxu0 %v175
    %1962 = vmatprep.subr.mxu0 %v179
    %1963 = vmatpush1.msra.mxu0 %v178
    %1964 = vmatprep.subr.mxu0 %v182
    %1965 = vmatpush1.msra.mxu0 %v181
    %1966 = vmatprep.subr.mxu0 %v185
    %1967 = vmatpush1.msra.mxu0 %v184
    %1968 = vmatprep.subr.mxu0 %v188
    %1969 = vmatpush1.msra.mxu0 %v187
    %1970 = vmatprep.subr.mxu0 %v191
    %1971 = vmatpush1.msra.mxu0 %v190
    %1972 = vmatprep.subr.mxu0 %v194
    %1973 = vmatpush1.msra.mxu0 %v193
    %1974 = vmatprep.subr.mxu0 0.0
    %1975 = vmatpush1.msra.mxu0 0.0
    %1976 = vmatprep.subr.mxu0 0.0
    %1977 = vmatpush1.msra.mxu0 0.0
    %1978 = vmatprep.subr.mxu0 0.0
    %1979 = vmatpush1.msra.mxu0 0.0
    %1980 = vmatprep.subr.mxu0 0.0
    %1981 = vmatpush1.msra.mxu0 0.0
    %1982 = vmatprep.subr.mxu0 0.0
    %1983 = vmatpush1.msra.mxu0 0.0
    %1984 = vmatprep.subr.mxu0 0.0
    %1985 = vmatpush1.msra.mxu0 0.0
    %1986 = vmatprep.subr.mxu0 0.0
    %1987 = vmatpush1.msra.mxu0 0.0
    %1988 = vmatprep.subr.mxu0 0.0
    %1989 = vmatpush1.msra.mxu0 0.0
    %1990 = vmatprep.subr.mxu0 0.0
    %1991 = vmatpush1.msra.mxu0 0.0
    %1992 = vmatprep.subr.mxu0 0.0
    %1993 = vmatpush1.msra.mxu0 0.0
    %1994 = vmatprep.subr.mxu0 0.0
    %1995 = vmatpush1.msra.mxu0 0.0
    %1996 = vmatprep.subr.mxu0 0.0
    %1997 = vmatpush1.msra.mxu0 0.0
    %1998 = vmatprep.subr.mxu0 0.0
    %1999 = vmatpush1.msra.mxu0 0.0
    %2000 = vmatprep.subr.mxu0 0.0
    %2001 = vmatpush1.msra.mxu0 0.0
    %2002 = vmatprep.subr.mxu0 0.0
    %2003 = vmatpush1.msra.mxu0 0.0
    %2004 = vmatprep.subr.mxu0 0.0
    %2005 = vmatpush1.msra.mxu0 0.0
    %2006 = vmatprep.mubr.f32.mxu0 0.0
    %2007 = vmatmul.mubr.f32.gmra.mrb[0].mxu0 %v1941
    %v2008 = vpop.f32.mrb[0].mxu0
    %v2009 = vadd.f32 0.0, %v2008
    %v2010 = vpop.f32.mrb[0].mxu0
    %v2011 = vadd.f32 0.0, %v2010
    %2012 = vdwg.mxu0
    %2013 = vmatprep.subr.mxu0 0.0
    %2014 = vmatpush1.msra.mxu0 %v150
    %2015 = vmatprep.subr.mxu0 0.0
    %2016 = vmatpush1.msra.mxu0 %v153
    %2017 = vmatprep.subr.mxu0 0.0
    %2018 = vmatpush1.msra.mxu0 %v156
    %2019 = vmatprep.subr.mxu0 0.0
    %2020 = vmatpush1.msra.mxu0 %v159
    %2021 = vmatprep.subr.mxu0 0.0
    %2022 = vmatpush1.msra.mxu0 %v162
    %2023 = vmatprep.subr.mxu0 0.0
    %2024 = vmatpush1.msra.mxu0 %v165
    %2025 = vmatprep.subr.mxu0 0.0
    %2026 = vmatpush1.msra.mxu0 %v168
    %2027 = vmatprep.subr.mxu0 0.0
    %2028 = vmatpush1.msra.mxu0 %v171
    %2029 = vmatprep.subr.mxu0 0.0
    %2030 = vmatpush1.msra.mxu0 %v174
    %2031 = vmatprep.subr.mxu0 0.0
    %2032 = vmatpush1.msra.mxu0 %v177
    %2033 = vmatprep.subr.mxu0 0.0
    %2034 = vmatpush1.msra.mxu0 %v180
    %2035 = vmatprep.subr.mxu0 0.0
    %2036 = vmatpush1.msra.mxu0 %v183
    %2037 = vmatprep.subr.mxu0 0.0
    %2038 = vmatpush1.msra.mxu0 %v186
    %2039 = vmatprep.subr.mxu0 0.0
    %2040 = vmatpush1.msra.mxu0 %v189
    %2041 = vmatprep.subr.mxu0 0.0
    %2042 = vmatpush1.msra.mxu0 %v192
    %2043 = vmatprep.subr.mxu0 0.0
    %2044 = vmatpush1.msra.mxu0 %v195
    %2045 = vmatprep.subr.mxu0 0.0
    %2046 = vmatpush1.msra.mxu0 0.0
    %2047 = vmatprep.subr.mxu0 0.0
    %2048 = vmatpush1.msra.mxu0 0.0
    %2049 = vmatprep.subr.mxu0 0.0
    %2050 = vmatpush1.msra.mxu0 0.0
    %2051 = vmatprep.subr.mxu0 0.0
    %2052 = vmatpush1.msra.mxu0 0.0
    %2053 = vmatprep.subr.mxu0 0.0
    %2054 = vmatpush1.msra.mxu0 0.0
    %2055 = vmatprep.subr.mxu0 0.0
    %2056 = vmatpush1.msra.mxu0 0.0
    %2057 = vmatprep.subr.mxu0 0.0
    %2058 = vmatpush1.msra.mxu0 0.0
    %2059 = vmatprep.subr.mxu0 0.0
    %2060 = vmatpush1.msra.mxu0 0.0
    %2061 = vmatprep.subr.mxu0 0.0
    %2062 = vmatpush1.msra.mxu0 0.0
    %2063 = vmatprep.subr.mxu0 0.0
    %2064 = vmatpush1.msra.mxu0 0.0
    %2065 = vmatprep.subr.mxu0 0.0
    %2066 = vmatpush1.msra.mxu0 0.0
    %2067 = vmatprep.subr.mxu0 0.0
    %2068 = vmatpush1.msra.mxu0 0.0
    %2069 = vmatprep.subr.mxu0 0.0
    %2070 = vmatpush1.msra.mxu0 0.0
    %2071 = vmatprep.subr.mxu0 0.0
    %2072 = vmatpush1.msra.mxu0 0.0
    %2073 = vmatprep.subr.mxu0 0.0
    %2074 = vmatpush1.msra.mxu0 0.0
    %2075 = vmatprep.subr.mxu0 0.0
    %2076 = vmatpush1.msra.mxu0 0.0
    %2077 = vmatprep.mubr.f32.mxu0 0.0
    %2078 = vmatmul.mubr.f32.gmra.mrb[0].mxu0 %v1941
    %v2079 = vpop.f32.mrb[0].mxu0
    %v2080 = vadd.f32 0.0, %v2079
    %v2081 = vpop.f32.mrb[0].mxu0
    %2082 = vdwg.mxu0
    %2083 = vmatprep.subr.mxu0 %v197
    %2084 = vmatpush1.msra.mxu0 %v196
    %2085 = vmatprep.subr.mxu0 %v200
    %2086 = vmatpush1.msra.mxu0 %v199
    %2087 = vmatprep.subr.mxu0 %v203
    %2088 = vmatpush1.msra.mxu0 %v202
    %2089 = vmatprep.subr.mxu0 %v206
    %2090 = vmatpush1.msra.mxu0 %v205
    %2091 = vmatprep.subr.mxu0 %v209
    %2092 = vmatpush1.msra.mxu0 %v208
    %2093 = vmatprep.subr.mxu0 %v212
    %2094 = vmatpush1.msra.mxu0 %v211
    %2095 = vmatprep.subr.mxu0 %v215
    %2096 = vmatpush1.msra.mxu0 %v214
    %2097 = vmatprep.subr.mxu0 %v218
    %2098 = vmatpush1.msra.mxu0 %v217
    %2099 = vmatprep.subr.mxu0 %v221
    %2100 = vmatpush1.msra.mxu0 %v220
    %2101 = vmatprep.subr.mxu0 %v224
    %2102 = vmatpush1.msra.mxu0 %v223
    %2103 = vmatprep.subr.mxu0 %v227
    %2104 = vmatpush1.msra.mxu0 %v226
    %2105 = vmatprep.subr.mxu0 %v230
    %2106 = vmatpush1.msra.mxu0 %v229
    %2107 = vmatprep.subr.mxu0 %v233
    %2108 = vmatpush1.msra.mxu0 %v232
    %2109 = vmatprep.subr.mxu0 %v236
    %2110 = vmatpush1.msra.mxu0 %v235
    %2111 = vmatprep.subr.mxu0 %v239
    %2112 = vmatpush1.msra.mxu0 %v238
    %2113 = vmatprep.subr.mxu0 %v242
    %2114 = vmatpush1.msra.mxu0 %v241
    %2115 = vmatprep.subr.mxu0 0.0
    %2116 = vmatpush1.msra.mxu0 0.0
    %2117 = vmatprep.subr.mxu0 0.0
    %2118 = vmatpush1.msra.mxu0 0.0
    %2119 = vmatprep.subr.mxu0 0.0
    %2120 = vmatpush1.msra.mxu0 0.0
    %2121 = vmatprep.subr.mxu0 0.0
    %2122 = vmatpush1.msra.mxu0 0.0
    %2123 = vmatprep.subr.mxu0 0.0
    %2124 = vmatpush1.msra.mxu0 0.0
    %2125 = vmatprep.subr.mxu0 0.0
    %2126 = vmatpush1.msra.mxu0 0.0
    %2127 = vmatprep.subr.mxu0 0.0
    %2128 = vmatpush1.msra.mxu0 0.0
    %2129 = vmatprep.subr.mxu0 0.0
    %2130 = vmatpush1.msra.mxu0 0.0
    %2131 = vmatprep.subr.mxu0 0.0
    %2132 = vmatpush1.msra.mxu0 0.0
    %2133 = vmatprep.subr.mxu0 0.0
    %2134 = vmatpush1.msra.mxu0 0.0
    %2135 = vmatprep.subr.mxu0 0.0
    %2136 = vmatpush1.msra.mxu0 0.0
    %2137 = vmatprep.subr.mxu0 0.0
    %2138 = vmatpush1.msra.mxu0 0.0
    %2139 = vmatprep.subr.mxu0 0.0
    %2140 = vmatpush1.msra.mxu0 0.0
    %2141 = vmatprep.subr.mxu0 0.0
    %2142 = vmatpush1.msra.mxu0 0.0
    %2143 = vmatprep.subr.mxu0 0.0
    %2144 = vmatpush1.msra.mxu0 0.0
    %2145 = vmatprep.subr.mxu0 0.0
    %2146 = vmatpush1.msra.mxu0 0.0
    %2147 = vmatprep.mubr.f32.mxu0 0.0
    %2148 = vmatmul.mubr.f32.gmra.mrb[0].mxu0 %v1762
    %v2149 = vpop.f32.mrb[0].mxu0
    %v2150 = vadd.f32 0.0, %v2149
    %v2151 = vpop.f32.mrb[0].mxu0
    %v2152 = vadd.f32 0.0, %v2151
    %2153 = vdwg.mxu0
    %2154 = vmatprep.subr.mxu0 0.0
    %2155 = vmatpush1.msra.mxu0 %v198
    %2156 = vmatprep.subr.mxu0 0.0
    %2157 = vmatpush1.msra.mxu0 %v201
    %2158 = vmatprep.subr.mxu0 0.0
    %2159 = vmatpush1.msra.mxu0 %v204
    %2160 = vmatprep.subr.mxu0 0.0
    %2161 = vmatpush1.msra.mxu0 %v207
    %2162 = vmatprep.subr.mxu0 0.0
    %2163 = vmatpush1.msra.mxu0 %v210
    %2164 = vmatprep.subr.mxu0 0.0
    %2165 = vmatpush1.msra.mxu0 %v213
    %2166 = vmatprep.subr.mxu0 0.0
    %2167 = vmatpush1.msra.mxu0 %v216
    %2168 = vmatprep.subr.mxu0 0.0
    %2169 = vmatpush1.msra.mxu0 %v219
    %2170 = vmatprep.subr.mxu0 0.0
    %2171 = vmatpush1.msra.mxu0 %v222
    %2172 = vmatprep.subr.mxu0 0.0
    %2173 = vmatpush1.msra.mxu0 %v225
    %2174 = vmatprep.subr.mxu0 0.0
    %2175 = vmatpush1.msra.mxu0 %v228
    %2176 = vmatprep.subr.mxu0 0.0
    %2177 = vmatpush1.msra.mxu0 %v231
    %2178 = vmatprep.subr.mxu0 0.0
    %2179 = vmatpush1.msra.mxu0 %v234
    %2180 = vmatprep.subr.mxu0 0.0
    %2181 = vmatpush1.msra.mxu0 %v237
    %2182 = vmatprep.subr.mxu0 0.0
    %2183 = vmatpush1.msra.mxu0 %v240
    %2184 = vmatprep.subr.mxu0 0.0
    %2185 = vmatpush1.msra.mxu0 %v243
    %2186 = vmatprep.subr.mxu0 0.0
    %2187 = vmatpush1.msra.mxu0 0.0
    %2188 = vmatprep.subr.mxu0 0.0
    %2189 = vmatpush1.msra.mxu0 0.0
    %2190 = vmatprep.subr.mxu0 0.0
    %2191 = vmatpush1.msra.mxu0 0.0
    %2192 = vmatprep.subr.mxu0 0.0
    %2193 = vmatpush1.msra.mxu0 0.0
    %2194 = vmatprep.subr.mxu0 0.0
    %2195 = vmatpush1.msra.mxu0 0.0
    %2196 = vmatprep.subr.mxu0 0.0
    %2197 = vmatpush1.msra.mxu0 0.0
    %2198 = vmatprep.subr.mxu0 0.0
    %2199 = vmatpush1.msra.mxu0 0.0
    %2200 = vmatprep.subr.mxu0 0.0
    %2201 = vmatpush1.msra.mxu0 0.0
    %2202 = vmatprep.subr.mxu0 0.0
    %2203 = vmatpush1.msra.mxu0 0.0
    %2204 = vmatprep.subr.mxu0 0.0
    %2205 = vmatpush1.msra.mxu0 0.0
    %2206 = vmatprep.subr.mxu0 0.0
    %2207 = vmatpush1.msra.mxu0 0.0
    %2208 = vmatprep.subr.mxu0 0.0
    %2209 = vmatpush1.msra.mxu0 0.0
    %2210 = vmatprep.subr.mxu0 0.0
    %2211 = vmatpush1.msra.mxu0 0.0
    %2212 = vmatprep.subr.mxu0 0.0
    %2213 = vmatpush1.msra.mxu0 0.0
    %2214 = vmatprep.subr.mxu0 0.0
    %2215 = vmatpush1.msra.mxu0 0.0
    %2216 = vmatprep.subr.mxu0 0.0
    %2217 = vmatpush1.msra.mxu0 0.0
    %2218 = vmatprep.mubr.f32.mxu0 0.0
    %2219 = vmatmul.mubr.f32.gmra.mrb[0].mxu0 %v1762
    %v2220 = vpop.f32.mrb[0].mxu0
    %v2221 = vadd.f32 0.0, %v2220
    %v2222 = vpop.f32.mrb[0].mxu0
    %2223 = vdwg.mxu0
    %v2224 = vadd.f32 %v2009, %v2150
    %v2225 = vadd.f32 %v2011, %v2152
    %v2226 = vadd.f32 %v2224, %v726
    %v2227 = vadd.f32 %v2225, %v730
    %v2228 = vxor.u32 %v2226, 2147483648
    %v2229 = vxor.u32 %v2227, 2147483648
    %v2230 = vmul.f32 %v2228, 1.442695
    %v2231 = vpow.pop %v2230
    %v2232 = vmul.f32 %v2229, 1.442695
    %v2233 = vpow.pop %v2232
    %v2234 = vadd.f32 %v2231, 1.0
    %v2235 = vadd.f32 %v2233, 1.0
    %v2236 = vrcp.pop %v2234
    %v2237 = vmul.f32 1.0, %v2236
    %v2238 = vrcp.pop %v2235
    %v2239 = vmul.f32 1.0, %v2238
    %v2240 = vadd.f32 %v2080, %v751
    %v2241 = vadd.f32 %v2221, %v758
    %v2242 = vmul.f32 %v2237, %v2241
    %v2243 = vadd.f32 %v2240, %v2242
    %v2244 = vtanh.pop %v2243
    %v2245 = vsub.f32 1.0, %v2239
    %v2246 = vmul.f32 %v2245, %v2244
    %v2247 = vmul.f32 %v2239, %v1762
    %v2248 = vadd.f32 %v2246, %v2247
    %vm2249 = vcmp.gt.f32.partialorder %v1776, 0.0
    %v2250 = vsel %vm2249, 1, 0
    %2251 = vset.pattern.permute.xlu0 0
    %2252 = vperm.xlu0 %2251, %v2250
    %v2253 = vpop.permute.xlu0 %2252
    %vm2254 = vcmp.eq.s32.totalorder %v2253, 1
    %v2255 = vsel %vm2254, %v1941, %v1761
    %v2256 = vsel %vm2254, %v2248, %v1762
    %2258 = vset.pattern.permute.xlu0 0
    %2259 = vperm.xlu0 %2258, %v1776
    %v2260 = vpop.permute.xlu0 %2259
    %v2262 = vmul.f32 %v2248, %v2260
    %s2263 = scalar_lea.vmem [#allocation10], 24
    %2264 = vst [vmem:[%s2263] sm:$0xff] %v2262
    %s2265 = scalar_lea.vmem [#allocation2], 96
    %v2266 = vld [vmem:[%s2265] sm:$0xff]
    %v2267 = vld [vmem:[%s2265 + $0x8] sm:$0xff]
    %v2268 = vld [vmem:[%s2265 + $0x10] sm:$0xff]
    %s2269 = scalar_lea.vmem %s1, 32
    %v2270 = vld [vmem:[%s2269] sm:$0xff]
    %2271 = vmatprep.subr.mxu0 %v101
    %2272 = vmatpush1.msra.mxu0 %v100
    %2273 = vmatprep.subr.mxu0 %v104
    %2274 = vmatpush1.msra.mxu0 %v103
    %2275 = vmatprep.subr.mxu0 %v107
    %2276 = vmatpush1.msra.mxu0 %v106
    %2277 = vmatprep.subr.mxu0 %v110
    %2278 = vmatpush1.msra.mxu0 %v109
    %2279 = vmatprep.subr.mxu0 %v113
    %2280 = vmatpush1.msra.mxu0 %v112
    %2281 = vmatprep.subr.mxu0 %v116
    %2282 = vmatpush1.msra.mxu0 %v115
    %2283 = vmatprep.subr.mxu0 %v119
    %2284 = vmatpush1.msra.mxu0 %v118
    %2285 = vmatprep.subr.mxu0 %v122
    %2286 = vmatpush1.msra.mxu0 %v121
    %2287 = vmatprep.subr.mxu0 %v125
    %2288 = vmatpush1.msra.mxu0 %v124
    %2289 = vmatprep.subr.mxu0 %v128
    %2290 = vmatpush1.msra.mxu0 %v127
    %2291 = vmatprep.subr.mxu0 %v131
    %2292 = vmatpush1.msra.mxu0 %v130
    %2293 = vmatprep.subr.mxu0 %v134
    %2294 = vmatpush1.msra.mxu0 %v133
    %2295 = vmatprep.subr.mxu0 %v137
    %2296 = vmatpush1.msra.mxu0 %v136
    %2297 = vmatprep.subr.mxu0 %v140
    %2298 = vmatpush1.msra.mxu0 %v139
    %2299 = vmatprep.subr.mxu0 %v143
    %2300 = vmatpush1.msra.mxu0 %v142
    %2301 = vmatprep.subr.mxu0 %v146
    %2302 = vmatpush1.msra.mxu0 %v145
    %2303 = vmatprep.subr.mxu0 0.0
    %2304 = vmatpush1.msra.mxu0 0.0
    %2305 = vmatprep.subr.mxu0 0.0
    %2306 = vmatpush1.msra.mxu0 0.0
    %2307 = vmatprep.subr.mxu0 0.0
    %2308 = vmatpush1.msra.mxu0 0.0
    %2309 = vmatprep.subr.mxu0 0.0
    %2310 = vmatpush1.msra.mxu0 0.0
    %2311 = vmatprep.subr.mxu0 0.0
    %2312 = vmatpush1.msra.mxu0 0.0
    %2313 = vmatprep.subr.mxu0 0.0
    %2314 = vmatpush1.msra.mxu0 0.0
    %2315 = vmatprep.subr.mxu0 0.0
    %2316 = vmatpush1.msra.mxu0 0.0
    %2317 = vmatprep.subr.mxu0 0.0
    %2318 = vmatpush1.msra.mxu0 0.0
    %2319 = vmatprep.subr.mxu0 0.0
    %2320 = vmatpush1.msra.mxu0 0.0
    %2321 = vmatprep.subr.mxu0 0.0
    %2322 = vmatpush1.msra.mxu0 0.0
    %2323 = vmatprep.subr.mxu0 0.0
    %2324 = vmatpush1.msra.mxu0 0.0
    %2325 = vmatprep.subr.mxu0 0.0
    %2326 = vmatpush1.msra.mxu0 0.0
    %2327 = vmatprep.subr.mxu0 0.0
    %2328 = vmatpush1.msra.mxu0 0.0
    %2329 = vmatprep.subr.mxu0 0.0
    %2330 = vmatpush1.msra.mxu0 0.0
    %2331 = vmatprep.subr.mxu0 0.0
    %2332 = vmatpush1.msra.mxu0 0.0
    %2333 = vmatprep.subr.mxu0 0.0
    %2334 = vmatpush1.msra.mxu0 0.0
    %2335 = vmatprep.mubr.f32.mxu0 0.0
    %2336 = vmatmul.mubr.f32.gmra.mrb[0].mxu0 %v2255
    %v2337 = vpop.f32.mrb[0].mxu0
    %v2338 = vadd.f32 0.0, %v2337
    %v2339 = vpop.f32.mrb[0].mxu0
    %v2340 = vadd.f32 0.0, %v2339
    %2341 = vdwg.mxu0
    %2342 = vmatprep.subr.mxu0 0.0
    %2343 = vmatpush1.msra.mxu0 %v102
    %2344 = vmatprep.subr.mxu0 0.0
    %2345 = vmatpush1.msra.mxu0 %v105
    %2346 = vmatprep.subr.mxu0 0.0
    %2347 = vmatpush1.msra.mxu0 %v108
    %2348 = vmatprep.subr.mxu0 0.0
    %2349 = vmatpush1.msra.mxu0 %v111
    %2350 = vmatprep.subr.mxu0 0.0
    %2351 = vmatpush1.msra.mxu0 %v114
    %2352 = vmatprep.subr.mxu0 0.0
    %2353 = vmatpush1.msra.mxu0 %v117
    %2354 = vmatprep.subr.mxu0 0.0
    %2355 = vmatpush1.msra.mxu0 %v120
    %2356 = vmatprep.subr.mxu0 0.0
    %2357 = vmatpush1.msra.mxu0 %v123
    %2358 = vmatprep.subr.mxu0 0.0
    %2359 = vmatpush1.msra.mxu0 %v126
    %2360 = vmatprep.subr.mxu0 0.0
    %2361 = vmatpush1.msra.mxu0 %v129
    %2362 = vmatprep.subr.mxu0 0.0
    %2363 = vmatpush1.msra.mxu0 %v132
    %2364 = vmatprep.subr.mxu0 0.0
    %2365 = vmatpush1.msra.mxu0 %v135
    %2366 = vmatprep.subr.mxu0 0.0
    %2367 = vmatpush1.msra.mxu0 %v138
    %2368 = vmatprep.subr.mxu0 0.0
    %2369 = vmatpush1.msra.mxu0 %v141
    %2370 = vmatprep.subr.mxu0 0.0
    %2371 = vmatpush1.msra.mxu0 %v144
    %2372 = vmatprep.subr.mxu0 0.0
    %2373 = vmatpush1.msra.mxu0 %v147
    %2374 = vmatprep.subr.mxu0 0.0
    %2375 = vmatpush1.msra.mxu0 0.0
    %2376 = vmatprep.subr.mxu0 0.0
    %2377 = vmatpush1.msra.mxu0 0.0
    %2378 = vmatprep.subr.mxu0 0.0
    %2379 = vmatpush1.msra.mxu0 0.0
    %2380 = vmatprep.subr.mxu0 0.0
    %2381 = vmatpush1.msra.mxu0 0.0
    %2382 = vmatprep.subr.mxu0 0.0
    %2383 = vmatpush1.msra.mxu0 0.0
    %2384 = vmatprep.subr.mxu0 0.0
    %2385 = vmatpush1.msra.mxu0 0.0
    %2386 = vmatprep.subr.mxu0 0.0
    %2387 = vmatpush1.msra.mxu0 0.0
    %2388 = vmatprep.subr.mxu0 0.0
    %2389 = vmatpush1.msra.mxu0 0.0
    %2390 = vmatprep.subr.mxu0 0.0
    %2391 = vmatpush1.msra.mxu0 0.0
    %2392 = vmatprep.subr.mxu0 0.0
    %2393 = vmatpush1.msra.mxu0 0.0
    %2394 = vmatprep.subr.mxu0 0.0
    %2395 = vmatpush1.msra.mxu0 0.0
    %2396 = vmatprep.subr.mxu0 0.0
    %2397 = vmatpush1.msra.mxu0 0.0
    %2398 = vmatprep.subr.mxu0 0.0
    %2399 = vmatpush1.msra.mxu0 0.0
    %2400 = vmatprep.subr.mxu0 0.0
    %2401 = vmatpush1.msra.mxu0 0.0
    %2402 = vmatprep.subr.mxu0 0.0
    %2403 = vmatpush1.msra.mxu0 0.0
    %2404 = vmatprep.subr.mxu0 0.0
    %2405 = vmatpush1.msra.mxu0 0.0
    %2406 = vmatprep.mubr.f32.mxu0 0.0
    %2407 = vmatmul.mubr.f32.gmra.mrb[0].mxu0 %v2255
    %v2408 = vpop.f32.mrb[0].mxu0
    %v2409 = vadd.f32 0.0, %v2408
    %v2410 = vpop.f32.mrb[0].mxu0
    %2411 = vdwg.mxu0
    %v2412 = vadd.f32 %v2266, %v2338
    %v2413 = vadd.f32 %v2267, %v2340
    %v2414 = vadd.f32 %v2412, %v403
    %v2415 = vadd.f32 %v2413, %v407
    %v2416 = vxor.u32 %v2414, 2147483648
    %v2417 = vxor.u32 %v2415, 2147483648
    %v2418 = vmul.f32 %v2416, 1.442695
    %v2419 = vpow.pop %v2418
    %v2420 = vmul.f32 %v2417, 1.442695
    %v2421 = vpow.pop %v2420
    %v2422 = vadd.f32 %v2419, 1.0
    %v2423 = vadd.f32 %v2421, 1.0
    %v2424 = vrcp.pop %v2422
    %v2425 = vmul.f32 1.0, %v2424
    %v2426 = vrcp.pop %v2423
    %v2427 = vmul.f32 1.0, %v2426
    %v2428 = vadd.f32 %v2409, %v428
    %v2429 = vmul.f32 %v2425, %v2428
    %v2430 = vadd.f32 %v2268, %v2429
    %v2431 = vtanh.pop %v2430
    %v2432 = vsub.f32 1.0, %v2427
    %v2433 = vmul.f32 %v2432, %v2431
    %v2434 = vmul.f32 %v2427, %v2255
    %v2435 = vadd.f32 %v2433, %v2434
    %2436 = vmatprep.subr.mxu0 %v149
    %2437 = vmatpush1.msra.mxu0 %v148
    %2438 = vmatprep.subr.mxu0 %v152
    %2439 = vmatpush1.msra.mxu0 %v151
    %2440 = vmatprep.subr.mxu0 %v155
    %2441 = vmatpush1.msra.mxu0 %v154
    %2442 = vmatprep.subr.mxu0 %v158
    %2443 = vmatpush1.msra.mxu0 %v157
    %2444 = vmatprep.subr.mxu0 %v161
    %2445 = vmatpush1.msra.mxu0 %v160
    %2446 = vmatprep.subr.mxu0 %v164
    %2447 = vmatpush1.msra.mxu0 %v163
    %2448 = vmatprep.subr.mxu0 %v167
    %2449 = vmatpush1.msra.mxu0 %v166
    %2450 = vmatprep.subr.mxu0 %v170
    %2451 = vmatpush1.msra.mxu0 %v169
    %2452 = vmatprep.subr.mxu0 %v173
    %2453 = vmatpush1.msra.mxu0 %v172
    %2454 = vmatprep.subr.mxu0 %v176
    %2455 = vmatpush1.msra.mxu0 %v175
    %2456 = vmatprep.subr.mxu0 %v179
    %2457 = vmatpush1.msra.mxu0 %v178
    %2458 = vmatprep.subr.mxu0 %v182
    %2459 = vmatpush1.msra.mxu0 %v181
    %2460 = vmatprep.subr.mxu0 %v185
    %2461 = vmatpush1.msra.mxu0 %v184
    %2462 = vmatprep.subr.mxu0 %v188
    %2463 = vmatpush1.msra.mxu0 %v187
    %2464 = vmatprep.subr.mxu0 %v191
    %2465 = vmatpush1.msra.mxu0 %v190
    %2466 = vmatprep.subr.mxu0 %v194
    %2467 = vmatpush1.msra.mxu0 %v193
    %2468 = vmatprep.subr.mxu0 0.0
    %2469 = vmatpush1.msra.mxu0 0.0
    %2470 = vmatprep.subr.mxu0 0.0
    %2471 = vmatpush1.msra.mxu0 0.0
    %2472 = vmatprep.subr.mxu0 0.0
    %2473 = vmatpush1.msra.mxu0 0.0
    %2474 = vmatprep.subr.mxu0 0.0
    %2475 = vmatpush1.msra.mxu0 0.0
    %2476 = vmatprep.subr.mxu0 0.0
    %2477 = vmatpush1.msra.mxu0 0.0
    %2478 = vmatprep.subr.mxu0 0.0
    %2479 = vmatpush1.msra.mxu0 0.0
    %2480 = vmatprep.subr.mxu0 0.0
    %2481 = vmatpush1.msra.mxu0 0.0
    %2482 = vmatprep.subr.mxu0 0.0
    %2483 = vmatpush1.msra.mxu0 0.0
    %2484 = vmatprep.subr.mxu0 0.0
    %2485 = vmatpush1.msra.mxu0 0.0
    %2486 = vmatprep.subr.mxu0 0.0
    %2487 = vmatpush1.msra.mxu0 0.0
    %2488 = vmatprep.subr.mxu0 0.0
    %2489 = vmatpush1.msra.mxu0 0.0
    %2490 = vmatprep.subr.mxu0 0.0
    %2491 = vmatpush1.msra.mxu0 0.0
    %2492 = vmatprep.subr.mxu0 0.0
    %2493 = vmatpush1.msra.mxu0 0.0
    %2494 = vmatprep.subr.mxu0 0.0
    %2495 = vmatpush1.msra.mxu0 0.0
    %2496 = vmatprep.subr.mxu0 0.0
    %2497 = vmatpush1.msra.mxu0 0.0
    %2498 = vmatprep.subr.mxu0 0.0
    %2499 = vmatpush1.msra.mxu0 0.0
    %2500 = vmatprep.mubr.f32.mxu0 0.0
    %2501 = vmatmul.mubr.f32.gmra.mrb[0].mxu0 %v2435
    %v2502 = vpop.f32.mrb[0].mxu0
    %v2503 = vadd.f32 0.0, %v2502
    %v2504 = vpop.f32.mrb[0].mxu0
    %v2505 = vadd.f32 0.0, %v2504
    %2506 = vdwg.mxu0
    %2507 = vmatprep.subr.mxu0 0.0
    %2508 = vmatpush1.msra.mxu0 %v150
    %2509 = vmatprep.subr.mxu0 0.0
    %2510 = vmatpush1.msra.mxu0 %v153
    %2511 = vmatprep.subr.mxu0 0.0
    %2512 = vmatpush1.msra.mxu0 %v156
    %2513 = vmatprep.subr.mxu0 0.0
    %2514 = vmatpush1.msra.mxu0 %v159
    %2515 = vmatprep.subr.mxu0 0.0
    %2516 = vmatpush1.msra.mxu0 %v162
    %2517 = vmatprep.subr.mxu0 0.0
    %2518 = vmatpush1.msra.mxu0 %v165
    %2519 = vmatprep.subr.mxu0 0.0
    %2520 = vmatpush1.msra.mxu0 %v168
    %2521 = vmatprep.subr.mxu0 0.0
    %2522 = vmatpush1.msra.mxu0 %v171
    %2523 = vmatprep.subr.mxu0 0.0
    %2524 = vmatpush1.msra.mxu0 %v174
    %2525 = vmatprep.subr.mxu0 0.0
    %2526 = vmatpush1.msra.mxu0 %v177
    %2527 = vmatprep.subr.mxu0 0.0
    %2528 = vmatpush1.msra.mxu0 %v180
    %2529 = vmatprep.subr.mxu0 0.0
    %2530 = vmatpush1.msra.mxu0 %v183
    %2531 = vmatprep.subr.mxu0 0.0
    %2532 = vmatpush1.msra.mxu0 %v186
    %2533 = vmatprep.subr.mxu0 0.0
    %2534 = vmatpush1.msra.mxu0 %v189
    %2535 = vmatprep.subr.mxu0 0.0
    %2536 = vmatpush1.msra.mxu0 %v192
    %2537 = vmatprep.subr.mxu0 0.0
    %2538 = vmatpush1.msra.mxu0 %v195
    %2539 = vmatprep.subr.mxu0 0.0
    %2540 = vmatpush1.msra.mxu0 0.0
    %2541 = vmatprep.subr.mxu0 0.0
    %2542 = vmatpush1.msra.mxu0 0.0
    %2543 = vmatprep.subr.mxu0 0.0
    %2544 = vmatpush1.msra.mxu0 0.0
    %2545 = vmatprep.subr.mxu0 0.0
    %2546 = vmatpush1.msra.mxu0 0.0
    %2547 = vmatprep.subr.mxu0 0.0
    %2548 = vmatpush1.msra.mxu0 0.0
    %2549 = vmatprep.subr.mxu0 0.0
    %2550 = vmatpush1.msra.mxu0 0.0
    %2551 = vmatprep.subr.mxu0 0.0
    %2552 = vmatpush1.msra.mxu0 0.0
    %2553 = vmatprep.subr.mxu0 0.0
    %2554 = vmatpush1.msra.mxu0 0.0
    %2555 = vmatprep.subr.mxu0 0.0
    %2556 = vmatpush1.msra.mxu0 0.0
    %2557 = vmatprep.subr.mxu0 0.0
    %2558 = vmatpush1.msra.mxu0 0.0
    %2559 = vmatprep.subr.mxu0 0.0
    %2560 = vmatpush1.msra.mxu0 0.0
    %2561 = vmatprep.subr.mxu0 0.0
    %2562 = vmatpush1.msra.mxu0 0.0
    %2563 = vmatprep.subr.mxu0 0.0
    %2564 = vmatpush1.msra.mxu0 0.0
    %2565 = vmatprep.subr.mxu0 0.0
    %2566 = vmatpush1.msra.mxu0 0.0
    %2567 = vmatprep.subr.mxu0 0.0
    %2568 = vmatpush1.msra.mxu0 0.0
    %2569 = vmatprep.subr.mxu0 0.0
    %2570 = vmatpush1.msra.mxu0 0.0
    %2571 = vmatprep.mubr.f32.mxu0 0.0
    %2572 = vmatmul.mubr.f32.gmra.mrb[0].mxu0 %v2435
    %v2573 = vpop.f32.mrb[0].mxu0
    %v2574 = vadd.f32 0.0, %v2573
    %v2575 = vpop.f32.mrb[0].mxu0
    %2576 = vdwg.mxu0
    %2577 = vmatprep.subr.mxu0 %v197
    %2578 = vmatpush1.msra.mxu0 %v196
    %2579 = vmatprep.subr.mxu0 %v200
    %2580 = vmatpush1.msra.mxu0 %v199
    %2581 = vmatprep.subr.mxu0 %v203
    %2582 = vmatpush1.msra.mxu0 %v202
    %2583 = vmatprep.subr.mxu0 %v206
    %2584 = vmatpush1.msra.mxu0 %v205
    %2585 = vmatprep.subr.mxu0 %v209
    %2586 = vmatpush1.msra.mxu0 %v208
    %2587 = vmatprep.subr.mxu0 %v212
    %2588 = vmatpush1.msra.mxu0 %v211
    %2589 = vmatprep.subr.mxu0 %v215
    %2590 = vmatpush1.msra.mxu0 %v214
    %2591 = vmatprep.subr.mxu0 %v218
    %2592 = vmatpush1.msra.mxu0 %v217
    %2593 = vmatprep.subr.mxu0 %v221
    %2594 = vmatpush1.msra.mxu0 %v220
    %2595 = vmatprep.subr.mxu0 %v224
    %2596 = vmatpush1.msra.mxu0 %v223
    %2597 = vmatprep.subr.mxu0 %v227
    %2598 = vmatpush1.msra.mxu0 %v226
    %2599 = vmatprep.subr.mxu0 %v230
    %2600 = vmatpush1.msra.mxu0 %v229
    %2601 = vmatprep.subr.mxu0 %v233
    %2602 = vmatpush1.msra.mxu0 %v232
    %2603 = vmatprep.subr.mxu0 %v236
    %2604 = vmatpush1.msra.mxu0 %v235
    %2605 = vmatprep.subr.mxu0 %v239
    %2606 = vmatpush1.msra.mxu0 %v238
    %2607 = vmatprep.subr.mxu0 %v242
    %2608 = vmatpush1.msra.mxu0 %v241
    %2609 = vmatprep.subr.mxu0 0.0
    %2610 = vmatpush1.msra.mxu0 0.0
    %2611 = vmatprep.subr.mxu0 0.0
    %2612 = vmatpush1.msra.mxu0 0.0
    %2613 = vmatprep.subr.mxu0 0.0
    %2614 = vmatpush1.msra.mxu0 0.0
    %2615 = vmatprep.subr.mxu0 0.0
    %2616 = vmatpush1.msra.mxu0 0.0
    %2617 = vmatprep.subr.mxu0 0.0
    %2618 = vmatpush1.msra.mxu0 0.0
    %2619 = vmatprep.subr.mxu0 0.0
    %2620 = vmatpush1.msra.mxu0 0.0
    %2621 = vmatprep.subr.mxu0 0.0
    %2622 = vmatpush1.msra.mxu0 0.0
    %2623 = vmatprep.subr.mxu0 0.0
    %2624 = vmatpush1.msra.mxu0 0.0
    %2625 = vmatprep.subr.mxu0 0.0
    %2626 = vmatpush1.msra.mxu0 0.0
    %2627 = vmatprep.subr.mxu0 0.0
    %2628 = vmatpush1.msra.mxu0 0.0
    %2629 = vmatprep.subr.mxu0 0.0
    %2630 = vmatpush1.msra.mxu0 0.0
    %2631 = vmatprep.subr.mxu0 0.0
    %2632 = vmatpush1.msra.mxu0 0.0
    %2633 = vmatprep.subr.mxu0 0.0
    %2634 = vmatpush1.msra.mxu0 0.0
    %2635 = vmatprep.subr.mxu0 0.0
    %2636 = vmatpush1.msra.mxu0 0.0
    %2637 = vmatprep.subr.mxu0 0.0
    %2638 = vmatpush1.msra.mxu0 0.0
    %2639 = vmatprep.subr.mxu0 0.0
    %2640 = vmatpush1.msra.mxu0 0.0
    %2641 = vmatprep.mubr.f32.mxu0 0.0
    %2642 = vmatmul.mubr.f32.gmra.mrb[0].mxu0 %v2256
    %v2643 = vpop.f32.mrb[0].mxu0
    %v2644 = vadd.f32 0.0, %v2643
    %v2645 = vpop.f32.mrb[0].mxu0
    %v2646 = vadd.f32 0.0, %v2645
    %2647 = vdwg.mxu0
    %2648 = vmatprep.subr.mxu0 0.0
    %2649 = vmatpush1.msra.mxu0 %v198
    %2650 = vmatprep.subr.mxu0 0.0
    %2651 = vmatpush1.msra.mxu0 %v201
    %2652 = vmatprep.subr.mxu0 0.0
    %2653 = vmatpush1.msra.mxu0 %v204
    %2654 = vmatprep.subr.mxu0 0.0
    %2655 = vmatpush1.msra.mxu0 %v207
    %2656 = vmatprep.subr.mxu0 0.0
    %2657 = vmatpush1.msra.mxu0 %v210
    %2658 = vmatprep.subr.mxu0 0.0
    %2659 = vmatpush1.msra.mxu0 %v213
    %2660 = vmatprep.subr.mxu0 0.0
    %2661 = vmatpush1.msra.mxu0 %v216
    %2662 = vmatprep.subr.mxu0 0.0
    %2663 = vmatpush1.msra.mxu0 %v219
    %2664 = vmatprep.subr.mxu0 0.0
    %2665 = vmatpush1.msra.mxu0 %v222
    %2666 = vmatprep.subr.mxu0 0.0
    %2667 = vmatpush1.msra.mxu0 %v225
    %2668 = vmatprep.subr.mxu0 0.0
    %2669 = vmatpush1.msra.mxu0 %v228
    %2670 = vmatprep.subr.mxu0 0.0
    %2671 = vmatpush1.msra.mxu0 %v231
    %2672 = vmatprep.subr.mxu0 0.0
    %2673 = vmatpush1.msra.mxu0 %v234
    %2674 = vmatprep.subr.mxu0 0.0
    %2675 = vmatpush1.msra.mxu0 %v237
    %2676 = vmatprep.subr.mxu0 0.0
    %2677 = vmatpush1.msra.mxu0 %v240
    %2678 = vmatprep.subr.mxu0 0.0
    %2679 = vmatpush1.msra.mxu0 %v243
    %2680 = vmatprep.subr.mxu0 0.0
    %2681 = vmatpush1.msra.mxu0 0.0
    %2682 = vmatprep.subr.mxu0 0.0
    %2683 = vmatpush1.msra.mxu0 0.0
    %2684 = vmatprep.subr.mxu0 0.0
    %2685 = vmatpush1.msra.mxu0 0.0
    %2686 = vmatprep.subr.mxu0 0.0
    %2687 = vmatpush1.msra.mxu0 0.0
    %2688 = vmatprep.subr.mxu0 0.0
    %2689 = vmatpush1.msra.mxu0 0.0
    %2690 = vmatprep.subr.mxu0 0.0
    %2691 = vmatpush1.msra.mxu0 0.0
    %2692 = vmatprep.subr.mxu0 0.0
    %2693 = vmatpush1.msra.mxu0 0.0
    %2694 = vmatprep.subr.mxu0 0.0
    %2695 = vmatpush1.msra.mxu0 0.0
    %2696 = vmatprep.subr.mxu0 0.0
    %2697 = vmatpush1.msra.mxu0 0.0
    %2698 = vmatprep.subr.mxu0 0.0
    %2699 = vmatpush1.msra.mxu0 0.0
    %2700 = vmatprep.subr.mxu0 0.0
    %2701 = vmatpush1.msra.mxu0 0.0
    %2702 = vmatprep.subr.mxu0 0.0
    %2703 = vmatpush1.msra.mxu0 0.0
    %2704 = vmatprep.subr.mxu0 0.0
    %2705 = vmatpush1.msra.mxu0 0.0
    %2706 = vmatprep.subr.mxu0 0.0
    %2707 = vmatpush1.msra.mxu0 0.0
    %2708 = vmatprep.subr.mxu0 0.0
    %2709 = vmatpush1.msra.mxu0 0.0
    %2710 = vmatprep.subr.mxu0 0.0
    %2711 = vmatpush1.msra.mxu0 0.0
    %2712 = vmatprep.mubr.f32.mxu0 0.0
    %2713 = vmatmul.mubr.f32.gmra.mrb[0].mxu0 %v2256
    %v2714 = vpop.f32.mrb[0].mxu0
    %v2715 = vadd.f32 0.0, %v2714
    %v2716 = vpop.f32.mrb[0].mxu0
    %2717 = vdwg.mxu0
    %v2718 = vadd.f32 %v2503, %v2644
    %v2719 = vadd.f32 %v2505, %v2646
    %v2720 = vadd.f32 %v2718, %v726
    %v2721 = vadd.f32 %v2719, %v730
    %v2722 = vxor.u32 %v2720, 2147483648
    %v2723 = vxor.u32 %v2721, 2147483648
    %v2724 = vmul.f32 %v2722, 1.442695
    %v2725 = vpow.pop %v2724
    %v2726 = vmul.f32 %v2723, 1.442695
    %v2727 = vpow.pop %v2726
    %v2728 = vadd.f32 %v2725, 1.0
    %v2729 = vadd.f32 %v2727, 1.0
    %v2730 = vrcp.pop %v2728
    %v2731 = vmul.f32 1.0, %v2730
    %v2732 = vrcp.pop %v2729
    %v2733 = vmul.f32 1.0, %v2732
    %v2734 = vadd.f32 %v2574, %v751
    %v2735 = vadd.f32 %v2715, %v758
    %v2736 = vmul.f32 %v2731, %v2735
    %v2737 = vadd.f32 %v2734, %v2736
    %v2738 = vtanh.pop %v2737
    %v2739 = vsub.f32 1.0, %v2733
    %v2740 = vmul.f32 %v2739, %v2738
    %v2741 = vmul.f32 %v2733, %v2256
    %v2742 = vadd.f32 %v2740, %v2741
    %vm2743 = vcmp.gt.f32.partialorder %v2270, 0.0
    %v2744 = vsel %vm2743, 1, 0
    %2745 = vset.pattern.permute.xlu0 0
    %2746 = vperm.xlu0 %2745, %v2744
    %v2747 = vpop.permute.xlu0 %2746
    %vm2748 = vcmp.eq.s32.totalorder %v2747, 1
    %v2749 = vsel %vm2748, %v2435, %v2255
    %v2750 = vsel %vm2748, %v2742, %v2256
    %2752 = vset.pattern.permute.xlu0 0
    %2753 = vperm.xlu0 %2752, %v2270
    %v2754 = vpop.permute.xlu0 %2753
    %v2756 = vmul.f32 %v2742, %v2754
    %s2757 = scalar_lea.vmem [#allocation10], 32
    %2758 = vst [vmem:[%s2757] sm:$0xff] %v2756
    %s2759 = scalar_lea.vmem [#allocation2], 120
    %v2760 = vld [vmem:[%s2759] sm:$0xff]
    %v2761 = vld [vmem:[%s2759 + $0x8] sm:$0xff]
    %v2762 = vld [vmem:[%s2759 + $0x10] sm:$0xff]
    %s2763 = scalar_lea.vmem %s1, 40
    %v2764 = vld [vmem:[%s2763] sm:$0xff]
    %2765 = vmatprep.subr.mxu0 %v101
    %2766 = vmatpush1.msra.mxu0 %v100
    %2767 = vmatprep.subr.mxu0 %v104
    %2768 = vmatpush1.msra.mxu0 %v103
    %2769 = vmatprep.subr.mxu0 %v107
    %2770 = vmatpush1.msra.mxu0 %v106
    %2771 = vmatprep.subr.mxu0 %v110
    %2772 = vmatpush1.msra.mxu0 %v109
    %2773 = vmatprep.subr.mxu0 %v113
    %2774 = vmatpush1.msra.mxu0 %v112
    %2775 = vmatprep.subr.mxu0 %v116
    %2776 = vmatpush1.msra.mxu0 %v115
    %2777 = vmatprep.subr.mxu0 %v119
    %2778 = vmatpush1.msra.mxu0 %v118
    %2779 = vmatprep.subr.mxu0 %v122
    %2780 = vmatpush1.msra.mxu0 %v121
    %2781 = vmatprep.subr.mxu0 %v125
    %2782 = vmatpush1.msra.mxu0 %v124
    %2783 = vmatprep.subr.mxu0 %v128
    %2784 = vmatpush1.msra.mxu0 %v127
    %2785 = vmatprep.subr.mxu0 %v131
    %2786 = vmatpush1.msra.mxu0 %v130
    %2787 = vmatprep.subr.mxu0 %v134
    %2788 = vmatpush1.msra.mxu0 %v133
    %2789 = vmatprep.subr.mxu0 %v137
    %2790 = vmatpush1.msra.mxu0 %v136
    %2791 = vmatprep.subr.mxu0 %v140
    %2792 = vmatpush1.msra.mxu0 %v139
    %2793 = vmatprep.subr.mxu0 %v143
    %2794 = vmatpush1.msra.mxu0 %v142
    %2795 = vmatprep.subr.mxu0 %v146
    %2796 = vmatpush1.msra.mxu0 %v145
    %2797 = vmatprep.subr.mxu0 0.0
    %2798 = vmatpush1.msra.mxu0 0.0
    %2799 = vmatprep.subr.mxu0 0.0
    %2800 = vmatpush1.msra.mxu0 0.0
    %2801 = vmatprep.subr.mxu0 0.0
    %2802 = vmatpush1.msra.mxu0 0.0
    %2803 = vmatprep.subr.mxu0 0.0
    %2804 = vmatpush1.msra.mxu0 0.0
    %2805 = vmatprep.subr.mxu0 0.0
    %2806 = vmatpush1.msra.mxu0 0.0
    %2807 = vmatprep.subr.mxu0 0.0
    %2808 = vmatpush1.msra.mxu0 0.0
    %2809 = vmatprep.subr.mxu0 0.0
    %2810 = vmatpush1.msra.mxu0 0.0
    %2811 = vmatprep.subr.mxu0 0.0
    %2812 = vmatpush1.msra.mxu0 0.0
    %2813 = vmatprep.subr.mxu0 0.0
    %2814 = vmatpush1.msra.mxu0 0.0
    %2815 = vmatprep.subr.mxu0 0.0
    %2816 = vmatpush1.msra.mxu0 0.0
    %2817 = vmatprep.subr.mxu0 0.0
    %2818 = vmatpush1.msra.mxu0 0.0
    %2819 = vmatprep.subr.mxu0 0.0
    %2820 = vmatpush1.msra.mxu0 0.0
    %2821 = vmatprep.subr.mxu0 0.0
    %2822 = vmatpush1.msra.mxu0 0.0
    %2823 = vmatprep.subr.mxu0 0.0
    %2824 = vmatpush1.msra.mxu0 0.0
    %2825 = vmatprep.subr.mxu0 0.0
    %2826 = vmatpush1.msra.mxu0 0.0
    %2827 = vmatprep.subr.mxu0 0.0
    %2828 = vmatpush1.msra.mxu0 0.0
    %2829 = vmatprep.mubr.f32.mxu0 0.0
    %2830 = vmatmul.mubr.f32.gmra.mrb[0].mxu0 %v2749
    %v2831 = vpop.f32.mrb[0].mxu0
    %v2832 = vadd.f32 0.0, %v2831
    %v2833 = vpop.f32.mrb[0].mxu0
    %v2834 = vadd.f32 0.0, %v2833
    %2835 = vdwg.mxu0
    %2836 = vmatprep.subr.mxu0 0.0
    %2837 = vmatpush1.msra.mxu0 %v102
    %2838 = vmatprep.subr.mxu0 0.0
    %2839 = vmatpush1.msra.mxu0 %v105
    %2840 = vmatprep.subr.mxu0 0.0
    %2841 = vmatpush1.msra.mxu0 %v108
    %2842 = vmatprep.subr.mxu0 0.0
    %2843 = vmatpush1.msra.mxu0 %v111
    %2844 = vmatprep.subr.mxu0 0.0
    %2845 = vmatpush1.msra.mxu0 %v114
    %2846 = vmatprep.subr.mxu0 0.0
    %2847 = vmatpush1.msra.mxu0 %v117
    %2848 = vmatprep.subr.mxu0 0.0
    %2849 = vmatpush1.msra.mxu0 %v120
    %2850 = vmatprep.subr.mxu0 0.0
    %2851 = vmatpush1.msra.mxu0 %v123
    %2852 = vmatprep.subr.mxu0 0.0
    %2853 = vmatpush1.msra.mxu0 %v126
    %2854 = vmatprep.subr.mxu0 0.0
    %2855 = vmatpush1.msra.mxu0 %v129
    %2856 = vmatprep.subr.mxu0 0.0
    %2857 = vmatpush1.msra.mxu0 %v132
    %2858 = vmatprep.subr.mxu0 0.0
    %2859 = vmatpush1.msra.mxu0 %v135
    %2860 = vmatprep.subr.mxu0 0.0
    %2861 = vmatpush1.msra.mxu0 %v138
    %2862 = vmatprep.subr.mxu0 0.0
    %2863 = vmatpush1.msra.mxu0 %v141
    %2864 = vmatprep.subr.mxu0 0.0
    %2865 = vmatpush1.msra.mxu0 %v144
    %2866 = vmatprep.subr.mxu0 0.0
    %2867 = vmatpush1.msra.mxu0 %v147
    %2868 = vmatprep.subr.mxu0 0.0
    %2869 = vmatpush1.msra.mxu0 0.0
    %2870 = vmatprep.subr.mxu0 0.0
    %2871 = vmatpush1.msra.mxu0 0.0
    %2872 = vmatprep.subr.mxu0 0.0
    %2873 = vmatpush1.msra.mxu0 0.0
    %2874 = vmatprep.subr.mxu0 0.0
    %2875 = vmatpush1.msra.mxu0 0.0
    %2876 = vmatprep.subr.mxu0 0.0
    %2877 = vmatpush1.msra.mxu0 0.0
    %2878 = vmatprep.subr.mxu0 0.0
    %2879 = vmatpush1.msra.mxu0 0.0
    %2880 = vmatprep.subr.mxu0 0.0
    %2881 = vmatpush1.msra.mxu0 0.0
    %2882 = vmatprep.subr.mxu0 0.0
    %2883 = vmatpush1.msra.mxu0 0.0
    %2884 = vmatprep.subr.mxu0 0.0
    %2885 = vmatpush1.msra.mxu0 0.0
    %2886 = vmatprep.subr.mxu0 0.0
    %2887 = vmatpush1.msra.mxu0 0.0
    %2888 = vmatprep.subr.mxu0 0.0
    %2889 = vmatpush1.msra.mxu0 0.0
    %2890 = vmatprep.subr.mxu0 0.0
    %2891 = vmatpush1.msra.mxu0 0.0
    %2892 = vmatprep.subr.mxu0 0.0
    %2893 = vmatpush1.msra.mxu0 0.0
    %2894 = vmatprep.subr.mxu0 0.0
    %2895 = vmatpush1.msra.mxu0 0.0
    %2896 = vmatprep.subr.mxu0 0.0
    %2897 = vmatpush1.msra.mxu0 0.0
    %2898 = vmatprep.subr.mxu0 0.0
    %2899 = vmatpush1.msra.mxu0 0.0
    %2900 = vmatprep.mubr.f32.mxu0 0.0
    %2901 = vmatmul.mubr.f32.gmra.mrb[0].mxu0 %v2749
    %v2902 = vpop.f32.mrb[0].mxu0
    %v2903 = vadd.f32 0.0, %v2902
    %v2904 = vpop.f32.mrb[0].mxu0
    %2905 = vdwg.mxu0
    %v2906 = vadd.f32 %v2760, %v2832
    %v2907 = vadd.f32 %v2761, %v2834
    %v2908 = vadd.f32 %v2906, %v403
    %v2909 = vadd.f32 %v2907, %v407
    %v2910 = vxor.u32 %v2908, 2147483648
    %v2911 = vxor.u32 %v2909, 2147483648
    %v2912 = vmul.f32 %v2910, 1.442695
    %v2913 = vpow.pop %v2912
    %v2914 = vmul.f32 %v2911, 1.442695
    %v2915 = vpow.pop %v2914
    %v2916 = vadd.f32 %v2913, 1.0
    %v2917 = vadd.f32 %v2915, 1.0
    %v2918 = vrcp.pop %v2916
    %v2919 = vmul.f32 1.0, %v2918
    %v2920 = vrcp.pop %v2917
    %v2921 = vmul.f32 1.0, %v2920
    %v2922 = vadd.f32 %v2903, %v428
    %v2923 = vmul.f32 %v2919, %v2922
    %v2924 = vadd.f32 %v2762, %v2923
    %v2925 = vtanh.pop %v2924
    %v2926 = vsub.f32 1.0, %v2921
    %v2927 = vmul.f32 %v2926, %v2925
    %v2928 = vmul.f32 %v2921, %v2749
    %v2929 = vadd.f32 %v2927, %v2928
    %2930 = vmatprep.subr.mxu0 %v149
    %2931 = vmatpush1.msra.mxu0 %v148
    %2932 = vmatprep.subr.mxu0 %v152
    %2933 = vmatpush1.msra.mxu0 %v151
    %2934 = vmatprep.subr.mxu0 %v155
    %2935 = vmatpush1.msra.mxu0 %v154
    %2936 = vmatprep.subr.mxu0 %v158
    %2937 = vmatpush1.msra.mxu0 %v157
    %2938 = vmatprep.subr.mxu0 %v161
    %2939 = vmatpush1.msra.mxu0 %v160
    %2940 = vmatprep.subr.mxu0 %v164
    %2941 = vmatpush1.msra.mxu0 %v163
    %2942 = vmatprep.subr.mxu0 %v167
    %2943 = vmatpush1.msra.mxu0 %v166
    %2944 = vmatprep.subr.mxu0 %v170
    %2945 = vmatpush1.msra.mxu0 %v169
    %2946 = vmatprep.subr.mxu0 %v173
    %2947 = vmatpush1.msra.mxu0 %v172
    %2948 = vmatprep.subr.mxu0 %v176
    %2949 = vmatpush1.msra.mxu0 %v175
    %2950 = vmatprep.subr.mxu0 %v179
    %2951 = vmatpush1.msra.mxu0 %v178
    %2952 = vmatprep.subr.mxu0 %v182
    %2953 = vmatpush1.msra.mxu0 %v181
    %2954 = vmatprep.subr.mxu0 %v185
    %2955 = vmatpush1.msra.mxu0 %v184
    %2956 = vmatprep.subr.mxu0 %v188
    %2957 = vmatpush1.msra.mxu0 %v187
    %2958 = vmatprep.subr.mxu0 %v191
    %2959 = vmatpush1.msra.mxu0 %v190
    %2960 = vmatprep.subr.mxu0 %v194
    %2961 = vmatpush1.msra.mxu0 %v193
    %2962 = vmatprep.subr.mxu0 0.0
    %2963 = vmatpush1.msra.mxu0 0.0
    %2964 = vmatprep.subr.mxu0 0.0
    %2965 = vmatpush1.msra.mxu0 0.0
    %2966 = vmatprep.subr.mxu0 0.0
    %2967 = vmatpush1.msra.mxu0 0.0
    %2968 = vmatprep.subr.mxu0 0.0
    %2969 = vmatpush1.msra.mxu0 0.0
    %2970 = vmatprep.subr.mxu0 0.0
    %2971 = vmatpush1.msra.mxu0 0.0
    %2972 = vmatprep.subr.mxu0 0.0
    %2973 = vmatpush1.msra.mxu0 0.0
    %2974 = vmatprep.subr.mxu0 0.0
    %2975 = vmatpush1.msra.mxu0 0.0
    %2976 = vmatprep.subr.mxu0 0.0
    %2977 = vmatpush1.msra.mxu0 0.0
    %2978 = vmatprep.subr.mxu0 0.0
    %2979 = vmatpush1.msra.mxu0 0.0
    %2980 = vmatprep.subr.mxu0 0.0
    %2981 = vmatpush1.msra.mxu0 0.0
    %2982 = vmatprep.subr.mxu0 0.0
    %2983 = vmatpush1.msra.mxu0 0.0
    %2984 = vmatprep.subr.mxu0 0.0
    %2985 = vmatpush1.msra.mxu0 0.0
    %2986 = vmatprep.subr.mxu0 0.0
    %2987 = vmatpush1.msra.mxu0 0.0
    %2988 = vmatprep.subr.mxu0 0.0
    %2989 = vmatpush1.msra.mxu0 0.0
    %2990 = vmatprep.subr.mxu0 0.0
    %2991 = vmatpush1.msra.mxu0 0.0
    %2992 = vmatprep.subr.mxu0 0.0
    %2993 = vmatpush1.msra.mxu0 0.0
    %2994 = vmatprep.mubr.f32.mxu0 0.0
    %2995 = vmatmul.mubr.f32.gmra.mrb[0].mxu0 %v2929
    %v2996 = vpop.f32.mrb[0].mxu0
    %v2997 = vadd.f32 0.0, %v2996
    %v2998 = vpop.f32.mrb[0].mxu0
    %v2999 = vadd.f32 0.0, %v2998
    %3000 = vdwg.mxu0
    %3001 = vmatprep.subr.mxu0 0.0
    %3002 = vmatpush1.msra.mxu0 %v150
    %3003 = vmatprep.subr.mxu0 0.0
    %3004 = vmatpush1.msra.mxu0 %v153
    %3005 = vmatprep.subr.mxu0 0.0
    %3006 = vmatpush1.msra.mxu0 %v156
    %3007 = vmatprep.subr.mxu0 0.0
    %3008 = vmatpush1.msra.mxu0 %v159
    %3009 = vmatprep.subr.mxu0 0.0
    %3010 = vmatpush1.msra.mxu0 %v162
    %3011 = vmatprep.subr.mxu0 0.0
    %3012 = vmatpush1.msra.mxu0 %v165
    %3013 = vmatprep.subr.mxu0 0.0
    %3014 = vmatpush1.msra.mxu0 %v168
    %3015 = vmatprep.subr.mxu0 0.0
    %3016 = vmatpush1.msra.mxu0 %v171
    %3017 = vmatprep.subr.mxu0 0.0
    %3018 = vmatpush1.msra.mxu0 %v174
    %3019 = vmatprep.subr.mxu0 0.0
    %3020 = vmatpush1.msra.mxu0 %v177
    %3021 = vmatprep.subr.mxu0 0.0
    %3022 = vmatpush1.msra.mxu0 %v180
    %3023 = vmatprep.subr.mxu0 0.0
    %3024 = vmatpush1.msra.mxu0 %v183
    %3025 = vmatprep.subr.mxu0 0.0
    %3026 = vmatpush1.msra.mxu0 %v186
    %3027 = vmatprep.subr.mxu0 0.0
    %3028 = vmatpush1.msra.mxu0 %v189
    %3029 = vmatprep.subr.mxu0 0.0
    %3030 = vmatpush1.msra.mxu0 %v192
    %3031 = vmatprep.subr.mxu0 0.0
    %3032 = vmatpush1.msra.mxu0 %v195
    %3033 = vmatprep.subr.mxu0 0.0
    %3034 = vmatpush1.msra.mxu0 0.0
    %3035 = vmatprep.subr.mxu0 0.0
    %3036 = vmatpush1.msra.mxu0 0.0
    %3037 = vmatprep.subr.mxu0 0.0
    %3038 = vmatpush1.msra.mxu0 0.0
    %3039 = vmatprep.subr.mxu0 0.0
    %3040 = vmatpush1.msra.mxu0 0.0
    %3041 = vmatprep.subr.mxu0 0.0
    %3042 = vmatpush1.msra.mxu0 0.0
    %3043 = vmatprep.subr.mxu0 0.0
    %3044 = vmatpush1.msra.mxu0 0.0
    %3045 = vmatprep.subr.mxu0 0.0
    %3046 = vmatpush1.msra.mxu0 0.0
    %3047 = vmatprep.subr.mxu0 0.0
    %3048 = vmatpush1.msra.mxu0 0.0
    %3049 = vmatprep.subr.mxu0 0.0
    %3050 = vmatpush1.msra.mxu0 0.0
    %3051 = vmatprep.subr.mxu0 0.0
    %3052 = vmatpush1.msra.mxu0 0.0
    %3053 = vmatprep.subr.mxu0 0.0
    %3054 = vmatpush1.msra.mxu0 0.0
    %3055 = vmatprep.subr.mxu0 0.0
    %3056 = vmatpush1.msra.mxu0 0.0
    %3057 = vmatprep.subr.mxu0 0.0
    %3058 = vmatpush1.msra.mxu0 0.0
    %3059 = vmatprep.subr.mxu0 0.0
    %3060 = vmatpush1.msra.mxu0 0.0
    %3061 = vmatprep.subr.mxu0 0.0
    %3062 = vmatpush1.msra.mxu0 0.0
    %3063 = vmatprep.subr.mxu0 0.0
    %3064 = vmatpush1.msra.mxu0 0.0
    %3065 = vmatprep.mubr.f32.mxu0 0.0
    %3066 = vmatmul.mubr.f32.gmra.mrb[0].mxu0 %v2929
    %v3067 = vpop.f32.mrb[0].mxu0
    %v3068 = vadd.f32 0.0, %v3067
    %v3069 = vpop.f32.mrb[0].mxu0
    %3070 = vdwg.mxu0
    %3071 = vmatprep.subr.mxu0 %v197
    %3072 = vmatpush1.msra.mxu0 %v196
    %3073 = vmatprep.subr.mxu0 %v200
    %3074 = vmatpush1.msra.mxu0 %v199
    %3075 = vmatprep.subr.mxu0 %v203
    %3076 = vmatpush1.msra.mxu0 %v202
    %3077 = vmatprep.subr.mxu0 %v206
    %3078 = vmatpush1.msra.mxu0 %v205
    %3079 = vmatprep.subr.mxu0 %v209
    %3080 = vmatpush1.msra.mxu0 %v208
    %3081 = vmatprep.subr.mxu0 %v212
    %3082 = vmatpush1.msra.mxu0 %v211
    %3083 = vmatprep.subr.mxu0 %v215
    %3084 = vmatpush1.msra.mxu0 %v214
    %3085 = vmatprep.subr.mxu0 %v218
    %3086 = vmatpush1.msra.mxu0 %v217
    %3087 = vmatprep.subr.mxu0 %v221
    %3088 = vmatpush1.msra.mxu0 %v220
    %3089 = vmatprep.subr.mxu0 %v224
    %3090 = vmatpush1.msra.mxu0 %v223
    %3091 = vmatprep.subr.mxu0 %v227
    %3092 = vmatpush1.msra.mxu0 %v226
    %3093 = vmatprep.subr.mxu0 %v230
    %3094 = vmatpush1.msra.mxu0 %v229
    %3095 = vmatprep.subr.mxu0 %v233
    %3096 = vmatpush1.msra.mxu0 %v232
    %3097 = vmatprep.subr.mxu0 %v236
    %3098 = vmatpush1.msra.mxu0 %v235
    %3099 = vmatprep.subr.mxu0 %v239
    %3100 = vmatpush1.msra.mxu0 %v238
    %3101 = vmatprep.subr.mxu0 %v242
    %3102 = vmatpush1.msra.mxu0 %v241
    %3103 = vmatprep.subr.mxu0 0.0
    %3104 = vmatpush1.msra.mxu0 0.0
    %3105 = vmatprep.subr.mxu0 0.0
    %3106 = vmatpush1.msra.mxu0 0.0
    %3107 = vmatprep.subr.mxu0 0.0
    %3108 = vmatpush1.msra.mxu0 0.0
    %3109 = vmatprep.subr.mxu0 0.0
    %3110 = vmatpush1.msra.mxu0 0.0
    %3111 = vmatprep.subr.mxu0 0.0
    %3112 = vmatpush1.msra.mxu0 0.0
    %3113 = vmatprep.subr.mxu0 0.0
    %3114 = vmatpush1.msra.mxu0 0.0
    %3115 = vmatprep.subr.mxu0 0.0
    %3116 = vmatpush1.msra.mxu0 0.0
    %3117 = vmatprep.subr.mxu0 0.0
    %3118 = vmatpush1.msra.mxu0 0.0
    %3119 = vmatprep.subr.mxu0 0.0
    %3120 = vmatpush1.msra.mxu0 0.0
    %3121 = vmatprep.subr.mxu0 0.0
    %3122 = vmatpush1.msra.mxu0 0.0
    %3123 = vmatprep.subr.mxu0 0.0
    %3124 = vmatpush1.msra.mxu0 0.0
    %3125 = vmatprep.subr.mxu0 0.0
    %3126 = vmatpush1.msra.mxu0 0.0
    %3127 = vmatprep.subr.mxu0 0.0
    %3128 = vmatpush1.msra.mxu0 0.0
    %3129 = vmatprep.subr.mxu0 0.0
    %3130 = vmatpush1.msra.mxu0 0.0
    %3131 = vmatprep.subr.mxu0 0.0
    %3132 = vmatpush1.msra.mxu0 0.0
    %3133 = vmatprep.subr.mxu0 0.0
    %3134 = vmatpush1.msra.mxu0 0.0
    %3135 = vmatprep.mubr.f32.mxu0 0.0
    %3136 = vmatmul.mubr.f32.gmra.mrb[0].mxu0 %v2750
    %v3137 = vpop.f32.mrb[0].mxu0
    %v3138 = vadd.f32 0.0, %v3137
    %v3139 = vpop.f32.mrb[0].mxu0
    %v3140 = vadd.f32 0.0, %v3139
    %3141 = vdwg.mxu0
    %3142 = vmatprep.subr.mxu0 0.0
    %3143 = vmatpush1.msra.mxu0 %v198
    %3144 = vmatprep.subr.mxu0 0.0
    %3145 = vmatpush1.msra.mxu0 %v201
    %3146 = vmatprep.subr.mxu0 0.0
    %3147 = vmatpush1.msra.mxu0 %v204
    %3148 = vmatprep.subr.mxu0 0.0
    %3149 = vmatpush1.msra.mxu0 %v207
    %3150 = vmatprep.subr.mxu0 0.0
    %3151 = vmatpush1.msra.mxu0 %v210
    %3152 = vmatprep.subr.mxu0 0.0
    %3153 = vmatpush1.msra.mxu0 %v213
    %3154 = vmatprep.subr.mxu0 0.0
    %3155 = vmatpush1.msra.mxu0 %v216
    %3156 = vmatprep.subr.mxu0 0.0
    %3157 = vmatpush1.msra.mxu0 %v219
    %3158 = vmatprep.subr.mxu0 0.0
    %3159 = vmatpush1.msra.mxu0 %v222
    %3160 = vmatprep.subr.mxu0 0.0
    %3161 = vmatpush1.msra.mxu0 %v225
    %3162 = vmatprep.subr.mxu0 0.0
    %3163 = vmatpush1.msra.mxu0 %v228
    %3164 = vmatprep.subr.mxu0 0.0
    %3165 = vmatpush1.msra.mxu0 %v231
    %3166 = vmatprep.subr.mxu0 0.0
    %3167 = vmatpush1.msra.mxu0 %v234
    %3168 = vmatprep.subr.mxu0 0.0
    %3169 = vmatpush1.msra.mxu0 %v237
    %3170 = vmatprep.subr.mxu0 0.0
    %3171 = vmatpush1.msra.mxu0 %v240
    %3172 = vmatprep.subr.mxu0 0.0
    %3173 = vmatpush1.msra.mxu0 %v243
    %3174 = vmatprep.subr.mxu0 0.0
    %3175 = vmatpush1.msra.mxu0 0.0
    %3176 = vmatprep.subr.mxu0 0.0
    %3177 = vmatpush1.msra.mxu0 0.0
    %3178 = vmatprep.subr.mxu0 0.0
    %3179 = vmatpush1.msra.mxu0 0.0
    %3180 = vmatprep.subr.mxu0 0.0
    %3181 = vmatpush1.msra.mxu0 0.0
    %3182 = vmatprep.subr.mxu0 0.0
    %3183 = vmatpush1.msra.mxu0 0.0
    %3184 = vmatprep.subr.mxu0 0.0
    %3185 = vmatpush1.msra.mxu0 0.0
    %3186 = vmatprep.subr.mxu0 0.0
    %3187 = vmatpush1.msra.mxu0 0.0
    %3188 = vmatprep.subr.mxu0 0.0
    %3189 = vmatpush1.msra.mxu0 0.0
    %3190 = vmatprep.subr.mxu0 0.0
    %3191 = vmatpush1.msra.mxu0 0.0
    %3192 = vmatprep.subr.mxu0 0.0
    %3193 = vmatpush1.msra.mxu0 0.0
    %3194 = vmatprep.subr.mxu0 0.0
    %3195 = vmatpush1.msra.mxu0 0.0
    %3196 = vmatprep.subr.mxu0 0.0
    %3197 = vmatpush1.msra.mxu0 0.0
    %3198 = vmatprep.subr.mxu0 0.0
    %3199 = vmatpush1.msra.mxu0 0.0
    %3200 = vmatprep.subr.mxu0 0.0
    %3201 = vmatpush1.msra.mxu0 0.0
    %3202 = vmatprep.subr.mxu0 0.0
    %3203 = vmatpush1.msra.mxu0 0.0
    %3204 = vmatprep.subr.mxu0 0.0
    %3205 = vmatpush1.msra.mxu0 0.0
    %3206 = vmatprep.mubr.f32.mxu0 0.0
    %3207 = vmatmul.mubr.f32.gmra.mrb[0].mxu0 %v2750
    %v3208 = vpop.f32.mrb[0].mxu0
    %v3209 = vadd.f32 0.0, %v3208
    %v3210 = vpop.f32.mrb[0].mxu0
    %3211 = vdwg.mxu0
    %v3212 = vadd.f32 %v2997, %v3138
    %v3213 = vadd.f32 %v2999, %v3140
    %v3214 = vadd.f32 %v3212, %v726
    %v3215 = vadd.f32 %v3213, %v730
    %v3216 = vxor.u32 %v3214, 2147483648
    %v3217 = vxor.u32 %v3215, 2147483648
    %v3218 = vmul.f32 %v3216, 1.442695
    %v3219 = vpow.pop %v3218
    %v3220 = vmul.f32 %v3217, 1.442695
    %v3221 = vpow.pop %v3220
    %v3222 = vadd.f32 %v3219, 1.0
    %v3223 = vadd.f32 %v3221, 1.0
    %v3224 = vrcp.pop %v3222
    %v3225 = vmul.f32 1.0, %v3224
    %v3226 = vrcp.pop %v3223
    %v3227 = vmul.f32 1.0, %v3226
    %v3228 = vadd.f32 %v3068, %v751
    %v3229 = vadd.f32 %v3209, %v758
    %v3230 = vmul.f32 %v3225, %v3229
    %v3231 = vadd.f32 %v3228, %v3230
    %v3232 = vtanh.pop %v3231
    %v3233 = vsub.f32 1.0, %v3227
    %v3234 = vmul.f32 %v3233, %v3232
    %v3235 = vmul.f32 %v3227, %v2750
    %v3236 = vadd.f32 %v3234, %v3235
    %vm3237 = vcmp.gt.f32.partialorder %v2764, 0.0
    %v3238 = vsel %vm3237, 1, 0
    %3239 = vset.pattern.permute.xlu0 0
    %3240 = vperm.xlu0 %3239, %v3238
    %v3241 = vpop.permute.xlu0 %3240
    %vm3242 = vcmp.eq.s32.totalorder %v3241, 1
    %v3243 = vsel %vm3242, %v2929, %v2749
    %v3244 = vsel %vm3242, %v3236, %v2750
    %3246 = vset.pattern.permute.xlu0 0
    %3247 = vperm.xlu0 %3246, %v2764
    %v3248 = vpop.permute.xlu0 %3247
    %v3250 = vmul.f32 %v3236, %v3248
    %s3251 = scalar_lea.vmem [#allocation10], 40
    %3252 = vst [vmem:[%s3251] sm:$0xff] %v3250
    %s3253 = scalar_lea.vmem [#allocation2], 144
    %v3254 = vld [vmem:[%s3253] sm:$0xff]
    %v3255 = vld [vmem:[%s3253 + $0x8] sm:$0xff]
    %v3256 = vld [vmem:[%s3253 + $0x10] sm:$0xff]
    %s3257 = scalar_lea.vmem %s1, 48
    %v3258 = vld [vmem:[%s3257] sm:$0xff]
    %3259 = vmatprep.subr.mxu0 %v101
    %3260 = vmatpush1.msra.mxu0 %v100
    %3261 = vmatprep.subr.mxu0 %v104
    %3262 = vmatpush1.msra.mxu0 %v103
    %3263 = vmatprep.subr.mxu0 %v107
    %3264 = vmatpush1.msra.mxu0 %v106
    %3265 = vmatprep.subr.mxu0 %v110
    %3266 = vmatpush1.msra.mxu0 %v109
    %3267 = vmatprep.subr.mxu0 %v113
    %3268 = vmatpush1.msra.mxu0 %v112
    %3269 = vmatprep.subr.mxu0 %v116
    %3270 = vmatpush1.msra.mxu0 %v115
    %3271 = vmatprep.subr.mxu0 %v119
    %3272 = vmatpush1.msra.mxu0 %v118
    %3273 = vmatprep.subr.mxu0 %v122
    %3274 = vmatpush1.msra.mxu0 %v121
    %3275 = vmatprep.subr.mxu0 %v125
    %3276 = vmatpush1.msra.mxu0 %v124
    %3277 = vmatprep.subr.mxu0 %v128
    %3278 = vmatpush1.msra.mxu0 %v127
    %3279 = vmatprep.subr.mxu0 %v131
    %3280 = vmatpush1.msra.mxu0 %v130
    %3281 = vmatprep.subr.mxu0 %v134
    %3282 = vmatpush1.msra.mxu0 %v133
    %3283 = vmatprep.subr.mxu0 %v137
    %3284 = vmatpush1.msra.mxu0 %v136
    %3285 = vmatprep.subr.mxu0 %v140
    %3286 = vmatpush1.msra.mxu0 %v139
    %3287 = vmatprep.subr.mxu0 %v143
    %3288 = vmatpush1.msra.mxu0 %v142
    %3289 = vmatprep.subr.mxu0 %v146
    %3290 = vmatpush1.msra.mxu0 %v145
    %3291 = vmatprep.subr.mxu0 0.0
    %3292 = vmatpush1.msra.mxu0 0.0
    %3293 = vmatprep.subr.mxu0 0.0
    %3294 = vmatpush1.msra.mxu0 0.0
    %3295 = vmatprep.subr.mxu0 0.0
    %3296 = vmatpush1.msra.mxu0 0.0
    %3297 = vmatprep.subr.mxu0 0.0
    %3298 = vmatpush1.msra.mxu0 0.0
    %3299 = vmatprep.subr.mxu0 0.0
    %3300 = vmatpush1.msra.mxu0 0.0
    %3301 = vmatprep.subr.mxu0 0.0
    %3302 = vmatpush1.msra.mxu0 0.0
    %3303 = vmatprep.subr.mxu0 0.0
    %3304 = vmatpush1.msra.mxu0 0.0
    %3305 = vmatprep.subr.mxu0 0.0
    %3306 = vmatpush1.msra.mxu0 0.0
    %3307 = vmatprep.subr.mxu0 0.0
    %3308 = vmatpush1.msra.mxu0 0.0
    %3309 = vmatprep.subr.mxu0 0.0
    %3310 = vmatpush1.msra.mxu0 0.0
    %3311 = vmatprep.subr.mxu0 0.0
    %3312 = vmatpush1.msra.mxu0 0.0
    %3313 = vmatprep.subr.mxu0 0.0
    %3314 = vmatpush1.msra.mxu0 0.0
    %3315 = vmatprep.subr.mxu0 0.0
    %3316 = vmatpush1.msra.mxu0 0.0
    %3317 = vmatprep.subr.mxu0 0.0
    %3318 = vmatpush1.msra.mxu0 0.0
    %3319 = vmatprep.subr.mxu0 0.0
    %3320 = vmatpush1.msra.mxu0 0.0
    %3321 = vmatprep.subr.mxu0 0.0
    %3322 = vmatpush1.msra.mxu0 0.0
    %3323 = vmatprep.mubr.f32.mxu0 0.0
    %3324 = vmatmul.mubr.f32.gmra.mrb[0].mxu0 %v3243
    %v3325 = vpop.f32.mrb[0].mxu0
    %v3326 = vadd.f32 0.0, %v3325
    %v3327 = vpop.f32.mrb[0].mxu0
    %v3328 = vadd.f32 0.0, %v3327
    %3329 = vdwg.mxu0
    %3330 = vmatprep.subr.mxu0 0.0
    %3331 = vmatpush1.msra.mxu0 %v102
    %3332 = vmatprep.subr.mxu0 0.0
    %3333 = vmatpush1.msra.mxu0 %v105
    %3334 = vmatprep.subr.mxu0 0.0
    %3335 = vmatpush1.msra.mxu0 %v108
    %3336 = vmatprep.subr.mxu0 0.0
    %3337 = vmatpush1.msra.mxu0 %v111
    %3338 = vmatprep.subr.mxu0 0.0
    %3339 = vmatpush1.msra.mxu0 %v114
    %3340 = vmatprep.subr.mxu0 0.0
    %3341 = vmatpush1.msra.mxu0 %v117
    %3342 = vmatprep.subr.mxu0 0.0
    %3343 = vmatpush1.msra.mxu0 %v120
    %3344 = vmatprep.subr.mxu0 0.0
    %3345 = vmatpush1.msra.mxu0 %v123
    %3346 = vmatprep.subr.mxu0 0.0
    %3347 = vmatpush1.msra.mxu0 %v126
    %3348 = vmatprep.subr.mxu0 0.0
    %3349 = vmatpush1.msra.mxu0 %v129
    %3350 = vmatprep.subr.mxu0 0.0
    %3351 = vmatpush1.msra.mxu0 %v132
    %3352 = vmatprep.subr.mxu0 0.0
    %3353 = vmatpush1.msra.mxu0 %v135
    %3354 = vmatprep.subr.mxu0 0.0
    %3355 = vmatpush1.msra.mxu0 %v138
    %3356 = vmatprep.subr.mxu0 0.0
    %3357 = vmatpush1.msra.mxu0 %v141
    %3358 = vmatprep.subr.mxu0 0.0
    %3359 = vmatpush1.msra.mxu0 %v144
    %3360 = vmatprep.subr.mxu0 0.0
    %3361 = vmatpush1.msra.mxu0 %v147
    %3362 = vmatprep.subr.mxu0 0.0
    %3363 = vmatpush1.msra.mxu0 0.0
    %3364 = vmatprep.subr.mxu0 0.0
    %3365 = vmatpush1.msra.mxu0 0.0
    %3366 = vmatprep.subr.mxu0 0.0
    %3367 = vmatpush1.msra.mxu0 0.0
    %3368 = vmatprep.subr.mxu0 0.0
    %3369 = vmatpush1.msra.mxu0 0.0
    %3370 = vmatprep.subr.mxu0 0.0
    %3371 = vmatpush1.msra.mxu0 0.0
    %3372 = vmatprep.subr.mxu0 0.0
    %3373 = vmatpush1.msra.mxu0 0.0
    %3374 = vmatprep.subr.mxu0 0.0
    %3375 = vmatpush1.msra.mxu0 0.0
    %3376 = vmatprep.subr.mxu0 0.0
    %3377 = vmatpush1.msra.mxu0 0.0
    %3378 = vmatprep.subr.mxu0 0.0
    %3379 = vmatpush1.msra.mxu0 0.0
    %3380 = vmatprep.subr.mxu0 0.0
    %3381 = vmatpush1.msra.mxu0 0.0
    %3382 = vmatprep.subr.mxu0 0.0
    %3383 = vmatpush1.msra.mxu0 0.0
    %3384 = vmatprep.subr.mxu0 0.0
    %3385 = vmatpush1.msra.mxu0 0.0
    %3386 = vmatprep.subr.mxu0 0.0
    %3387 = vmatpush1.msra.mxu0 0.0
    %3388 = vmatprep.subr.mxu0 0.0
    %3389 = vmatpush1.msra.mxu0 0.0
    %3390 = vmatprep.subr.mxu0 0.0
    %3391 = vmatpush1.msra.mxu0 0.0
    %3392 = vmatprep.subr.mxu0 0.0
    %3393 = vmatpush1.msra.mxu0 0.0
    %3394 = vmatprep.mubr.f32.mxu0 0.0
    %3395 = vmatmul.mubr.f32.gmra.mrb[0].mxu0 %v3243
    %v3396 = vpop.f32.mrb[0].mxu0
    %v3397 = vadd.f32 0.0, %v3396
    %v3398 = vpop.f32.mrb[0].mxu0
    %3399 = vdwg.mxu0
    %v3400 = vadd.f32 %v3254, %v3326
    %v3401 = vadd.f32 %v3255, %v3328
    %v3402 = vadd.f32 %v3400, %v403
    %v3403 = vadd.f32 %v3401, %v407
    %v3404 = vxor.u32 %v3402, 2147483648
    %v3405 = vxor.u32 %v3403, 2147483648
    %v3406 = vmul.f32 %v3404, 1.442695
    %v3407 = vpow.pop %v3406
    %v3408 = vmul.f32 %v3405, 1.442695
    %v3409 = vpow.pop %v3408
    %v3410 = vadd.f32 %v3407, 1.0
    %v3411 = vadd.f32 %v3409, 1.0
    %v3412 = vrcp.pop %v3410
    %v3413 = vmul.f32 1.0, %v3412
    %v3414 = vrcp.pop %v3411
    %v3415 = vmul.f32 1.0, %v3414
    %v3416 = vadd.f32 %v3397, %v428
    %v3417 = vmul.f32 %v3413, %v3416
    %v3418 = vadd.f32 %v3256, %v3417
    %v3419 = vtanh.pop %v3418
    %v3420 = vsub.f32 1.0, %v3415
    %v3421 = vmul.f32 %v3420, %v3419
    %v3422 = vmul.f32 %v3415, %v3243
    %v3423 = vadd.f32 %v3421, %v3422
    %3424 = vmatprep.subr.mxu0 %v149
    %3425 = vmatpush1.msra.mxu0 %v148
    %3426 = vmatprep.subr.mxu0 %v152
    %3427 = vmatpush1.msra.mxu0 %v151
    %3428 = vmatprep.subr.mxu0 %v155
    %3429 = vmatpush1.msra.mxu0 %v154
    %3430 = vmatprep.subr.mxu0 %v158
    %3431 = vmatpush1.msra.mxu0 %v157
    %3432 = vmatprep.subr.mxu0 %v161
    %3433 = vmatpush1.msra.mxu0 %v160
    %3434 = vmatprep.subr.mxu0 %v164
    %3435 = vmatpush1.msra.mxu0 %v163
    %3436 = vmatprep.subr.mxu0 %v167
    %3437 = vmatpush1.msra.mxu0 %v166
    %3438 = vmatprep.subr.mxu0 %v170
    %3439 = vmatpush1.msra.mxu0 %v169
    %3440 = vmatprep.subr.mxu0 %v173
    %3441 = vmatpush1.msra.mxu0 %v172
    %3442 = vmatprep.subr.mxu0 %v176
    %3443 = vmatpush1.msra.mxu0 %v175
    %3444 = vmatprep.subr.mxu0 %v179
    %3445 = vmatpush1.msra.mxu0 %v178
    %3446 = vmatprep.subr.mxu0 %v182
    %3447 = vmatpush1.msra.mxu0 %v181
    %3448 = vmatprep.subr.mxu0 %v185
    %3449 = vmatpush1.msra.mxu0 %v184
    %3450 = vmatprep.subr.mxu0 %v188
    %3451 = vmatpush1.msra.mxu0 %v187
    %3452 = vmatprep.subr.mxu0 %v191
    %3453 = vmatpush1.msra.mxu0 %v190
    %3454 = vmatprep.subr.mxu0 %v194
    %3455 = vmatpush1.msra.mxu0 %v193
    %3456 = vmatprep.subr.mxu0 0.0
    %3457 = vmatpush1.msra.mxu0 0.0
    %3458 = vmatprep.subr.mxu0 0.0
    %3459 = vmatpush1.msra.mxu0 0.0
    %3460 = vmatprep.subr.mxu0 0.0
    %3461 = vmatpush1.msra.mxu0 0.0
    %3462 = vmatprep.subr.mxu0 0.0
    %3463 = vmatpush1.msra.mxu0 0.0
    %3464 = vmatprep.subr.mxu0 0.0
    %3465 = vmatpush1.msra.mxu0 0.0
    %3466 = vmatprep.subr.mxu0 0.0
    %3467 = vmatpush1.msra.mxu0 0.0
    %3468 = vmatprep.subr.mxu0 0.0
    %3469 = vmatpush1.msra.mxu0 0.0
    %3470 = vmatprep.subr.mxu0 0.0
    %3471 = vmatpush1.msra.mxu0 0.0
    %3472 = vmatprep.subr.mxu0 0.0
    %3473 = vmatpush1.msra.mxu0 0.0
    %3474 = vmatprep.subr.mxu0 0.0
    %3475 = vmatpush1.msra.mxu0 0.0
    %3476 = vmatprep.subr.mxu0 0.0
    %3477 = vmatpush1.msra.mxu0 0.0
    %3478 = vmatprep.subr.mxu0 0.0
    %3479 = vmatpush1.msra.mxu0 0.0
    %3480 = vmatprep.subr.mxu0 0.0
    %3481 = vmatpush1.msra.mxu0 0.0
    %3482 = vmatprep.subr.mxu0 0.0
    %3483 = vmatpush1.msra.mxu0 0.0
    %3484 = vmatprep.subr.mxu0 0.0
    %3485 = vmatpush1.msra.mxu0 0.0
    %3486 = vmatprep.subr.mxu0 0.0
    %3487 = vmatpush1.msra.mxu0 0.0
    %3488 = vmatprep.mubr.f32.mxu0 0.0
    %3489 = vmatmul.mubr.f32.gmra.mrb[0].mxu0 %v3423
    %v3490 = vpop.f32.mrb[0].mxu0
    %v3491 = vadd.f32 0.0, %v3490
    %v3492 = vpop.f32.mrb[0].mxu0
    %v3493 = vadd.f32 0.0, %v3492
    %3494 = vdwg.mxu0
    %3495 = vmatprep.subr.mxu0 0.0
    %3496 = vmatpush1.msra.mxu0 %v150
    %3497 = vmatprep.subr.mxu0 0.0
    %3498 = vmatpush1.msra.mxu0 %v153
    %3499 = vmatprep.subr.mxu0 0.0
    %3500 = vmatpush1.msra.mxu0 %v156
    %3501 = vmatprep.subr.mxu0 0.0
    %3502 = vmatpush1.msra.mxu0 %v159
    %3503 = vmatprep.subr.mxu0 0.0
    %3504 = vmatpush1.msra.mxu0 %v162
    %3505 = vmatprep.subr.mxu0 0.0
    %3506 = vmatpush1.msra.mxu0 %v165
    %3507 = vmatprep.subr.mxu0 0.0
    %3508 = vmatpush1.msra.mxu0 %v168
    %3509 = vmatprep.subr.mxu0 0.0
    %3510 = vmatpush1.msra.mxu0 %v171
    %3511 = vmatprep.subr.mxu0 0.0
    %3512 = vmatpush1.msra.mxu0 %v174
    %3513 = vmatprep.subr.mxu0 0.0
    %3514 = vmatpush1.msra.mxu0 %v177
    %3515 = vmatprep.subr.mxu0 0.0
    %3516 = vmatpush1.msra.mxu0 %v180
    %3517 = vmatprep.subr.mxu0 0.0
    %3518 = vmatpush1.msra.mxu0 %v183
    %3519 = vmatprep.subr.mxu0 0.0
    %3520 = vmatpush1.msra.mxu0 %v186
    %3521 = vmatprep.subr.mxu0 0.0
    %3522 = vmatpush1.msra.mxu0 %v189
    %3523 = vmatprep.subr.mxu0 0.0
    %3524 = vmatpush1.msra.mxu0 %v192
    %3525 = vmatprep.subr.mxu0 0.0
    %3526 = vmatpush1.msra.mxu0 %v195
    %3527 = vmatprep.subr.mxu0 0.0
    %3528 = vmatpush1.msra.mxu0 0.0
    %3529 = vmatprep.subr.mxu0 0.0
    %3530 = vmatpush1.msra.mxu0 0.0
    %3531 = vmatprep.subr.mxu0 0.0
    %3532 = vmatpush1.msra.mxu0 0.0
    %3533 = vmatprep.subr.mxu0 0.0
    %3534 = vmatpush1.msra.mxu0 0.0
    %3535 = vmatprep.subr.mxu0 0.0
    %3536 = vmatpush1.msra.mxu0 0.0
    %3537 = vmatprep.subr.mxu0 0.0
    %3538 = vmatpush1.msra.mxu0 0.0
    %3539 = vmatprep.subr.mxu0 0.0
    %3540 = vmatpush1.msra.mxu0 0.0
    %3541 = vmatprep.subr.mxu0 0.0
    %3542 = vmatpush1.msra.mxu0 0.0
    %3543 = vmatprep.subr.mxu0 0.0
    %3544 = vmatpush1.msra.mxu0 0.0
    %3545 = vmatprep.subr.mxu0 0.0
    %3546 = vmatpush1.msra.mxu0 0.0
    %3547 = vmatprep.subr.mxu0 0.0
    %3548 = vmatpush1.msra.mxu0 0.0
    %3549 = vmatprep.subr.mxu0 0.0
    %3550 = vmatpush1.msra.mxu0 0.0
    %3551 = vmatprep.subr.mxu0 0.0
    %3552 = vmatpush1.msra.mxu0 0.0
    %3553 = vmatprep.subr.mxu0 0.0
    %3554 = vmatpush1.msra.mxu0 0.0
    %3555 = vmatprep.subr.mxu0 0.0
    %3556 = vmatpush1.msra.mxu0 0.0
    %3557 = vmatprep.subr.mxu0 0.0
    %3558 = vmatpush1.msra.mxu0 0.0
    %3559 = vmatprep.mubr.f32.mxu0 0.0
    %3560 = vmatmul.mubr.f32.gmra.mrb[0].mxu0 %v3423
    %v3561 = vpop.f32.mrb[0].mxu0
    %v3562 = vadd.f32 0.0, %v3561
    %v3563 = vpop.f32.mrb[0].mxu0
    %3564 = vdwg.mxu0
    %3565 = vmatprep.subr.mxu0 %v197
    %3566 = vmatpush1.msra.mxu0 %v196
    %3567 = vmatprep.subr.mxu0 %v200
    %3568 = vmatpush1.msra.mxu0 %v199
    %3569 = vmatprep.subr.mxu0 %v203
    %3570 = vmatpush1.msra.mxu0 %v202
    %3571 = vmatprep.subr.mxu0 %v206
    %3572 = vmatpush1.msra.mxu0 %v205
    %3573 = vmatprep.subr.mxu0 %v209
    %3574 = vmatpush1.msra.mxu0 %v208
    %3575 = vmatprep.subr.mxu0 %v212
    %3576 = vmatpush1.msra.mxu0 %v211
    %3577 = vmatprep.subr.mxu0 %v215
    %3578 = vmatpush1.msra.mxu0 %v214
    %3579 = vmatprep.subr.mxu0 %v218
    %3580 = vmatpush1.msra.mxu0 %v217
    %3581 = vmatprep.subr.mxu0 %v221
    %3582 = vmatpush1.msra.mxu0 %v220
    %3583 = vmatprep.subr.mxu0 %v224
    %3584 = vmatpush1.msra.mxu0 %v223
    %3585 = vmatprep.subr.mxu0 %v227
    %3586 = vmatpush1.msra.mxu0 %v226
    %3587 = vmatprep.subr.mxu0 %v230
    %3588 = vmatpush1.msra.mxu0 %v229
    %3589 = vmatprep.subr.mxu0 %v233
    %3590 = vmatpush1.msra.mxu0 %v232
    %3591 = vmatprep.subr.mxu0 %v236
    %3592 = vmatpush1.msra.mxu0 %v235
    %3593 = vmatprep.subr.mxu0 %v239
    %3594 = vmatpush1.msra.mxu0 %v238
    %3595 = vmatprep.subr.mxu0 %v242
    %3596 = vmatpush1.msra.mxu0 %v241
    %3597 = vmatprep.subr.mxu0 0.0
    %3598 = vmatpush1.msra.mxu0 0.0
    %3599 = vmatprep.subr.mxu0 0.0
    %3600 = vmatpush1.msra.mxu0 0.0
    %3601 = vmatprep.subr.mxu0 0.0
    %3602 = vmatpush1.msra.mxu0 0.0
    %3603 = vmatprep.subr.mxu0 0.0
    %3604 = vmatpush1.msra.mxu0 0.0
    %3605 = vmatprep.subr.mxu0 0.0
    %3606 = vmatpush1.msra.mxu0 0.0
    %3607 = vmatprep.subr.mxu0 0.0
    %3608 = vmatpush1.msra.mxu0 0.0
    %3609 = vmatprep.subr.mxu0 0.0
    %3610 = vmatpush1.msra.mxu0 0.0
    %3611 = vmatprep.subr.mxu0 0.0
    %3612 = vmatpush1.msra.mxu0 0.0
    %3613 = vmatprep.subr.mxu0 0.0
    %3614 = vmatpush1.msra.mxu0 0.0
    %3615 = vmatprep.subr.mxu0 0.0
    %3616 = vmatpush1.msra.mxu0 0.0
    %3617 = vmatprep.subr.mxu0 0.0
    %3618 = vmatpush1.msra.mxu0 0.0
    %3619 = vmatprep.subr.mxu0 0.0
    %3620 = vmatpush1.msra.mxu0 0.0
    %3621 = vmatprep.subr.mxu0 0.0
    %3622 = vmatpush1.msra.mxu0 0.0
    %3623 = vmatprep.subr.mxu0 0.0
    %3624 = vmatpush1.msra.mxu0 0.0
    %3625 = vmatprep.subr.mxu0 0.0
    %3626 = vmatpush1.msra.mxu0 0.0
    %3627 = vmatprep.subr.mxu0 0.0
    %3628 = vmatpush1.msra.mxu0 0.0
    %3629 = vmatprep.mubr.f32.mxu0 0.0
    %3630 = vmatmul.mubr.f32.gmra.mrb[0].mxu0 %v3244
    %v3631 = vpop.f32.mrb[0].mxu0
    %v3632 = vadd.f32 0.0, %v3631
    %v3633 = vpop.f32.mrb[0].mxu0
    %v3634 = vadd.f32 0.0, %v3633
    %3635 = vdwg.mxu0
    %3636 = vmatprep.subr.mxu0 0.0
    %3637 = vmatpush1.msra.mxu0 %v198
    %3638 = vmatprep.subr.mxu0 0.0
    %3639 = vmatpush1.msra.mxu0 %v201
    %3640 = vmatprep.subr.mxu0 0.0
    %3641 = vmatpush1.msra.mxu0 %v204
    %3642 = vmatprep.subr.mxu0 0.0
    %3643 = vmatpush1.msra.mxu0 %v207
    %3644 = vmatprep.subr.mxu0 0.0
    %3645 = vmatpush1.msra.mxu0 %v210
    %3646 = vmatprep.subr.mxu0 0.0
    %3647 = vmatpush1.msra.mxu0 %v213
    %3648 = vmatprep.subr.mxu0 0.0
    %3649 = vmatpush1.msra.mxu0 %v216
    %3650 = vmatprep.subr.mxu0 0.0
    %3651 = vmatpush1.msra.mxu0 %v219
    %3652 = vmatprep.subr.mxu0 0.0
    %3653 = vmatpush1.msra.mxu0 %v222
    %3654 = vmatprep.subr.mxu0 0.0
    %3655 = vmatpush1.msra.mxu0 %v225
    %3656 = vmatprep.subr.mxu0 0.0
    %3657 = vmatpush1.msra.mxu0 %v228
    %3658 = vmatprep.subr.mxu0 0.0
    %3659 = vmatpush1.msra.mxu0 %v231
    %3660 = vmatprep.subr.mxu0 0.0
    %3661 = vmatpush1.msra.mxu0 %v234
    %3662 = vmatprep.subr.mxu0 0.0
    %3663 = vmatpush1.msra.mxu0 %v237
    %3664 = vmatprep.subr.mxu0 0.0
    %3665 = vmatpush1.msra.mxu0 %v240
    %3666 = vmatprep.subr.mxu0 0.0
    %3667 = vmatpush1.msra.mxu0 %v243
    %3668 = vmatprep.subr.mxu0 0.0
    %3669 = vmatpush1.msra.mxu0 0.0
    %3670 = vmatprep.subr.mxu0 0.0
    %3671 = vmatpush1.msra.mxu0 0.0
    %3672 = vmatprep.subr.mxu0 0.0
    %3673 = vmatpush1.msra.mxu0 0.0
    %3674 = vmatprep.subr.mxu0 0.0
    %3675 = vmatpush1.msra.mxu0 0.0
    %3676 = vmatprep.subr.mxu0 0.0
    %3677 = vmatpush1.msra.mxu0 0.0
    %3678 = vmatprep.subr.mxu0 0.0
    %3679 = vmatpush1.msra.mxu0 0.0
    %3680 = vmatprep.subr.mxu0 0.0
    %3681 = vmatpush1.msra.mxu0 0.0
    %3682 = vmatprep.subr.mxu0 0.0
    %3683 = vmatpush1.msra.mxu0 0.0
    %3684 = vmatprep.subr.mxu0 0.0
    %3685 = vmatpush1.msra.mxu0 0.0
    %3686 = vmatprep.subr.mxu0 0.0
    %3687 = vmatpush1.msra.mxu0 0.0
    %3688 = vmatprep.subr.mxu0 0.0
    %3689 = vmatpush1.msra.mxu0 0.0
    %3690 = vmatprep.subr.mxu0 0.0
    %3691 = vmatpush1.msra.mxu0 0.0
    %3692 = vmatprep.subr.mxu0 0.0
    %3693 = vmatpush1.msra.mxu0 0.0
    %3694 = vmatprep.subr.mxu0 0.0
    %3695 = vmatpush1.msra.mxu0 0.0
    %3696 = vmatprep.subr.mxu0 0.0
    %3697 = vmatpush1.msra.mxu0 0.0
    %3698 = vmatprep.subr.mxu0 0.0
    %3699 = vmatpush1.msra.mxu0 0.0
    %3700 = vmatprep.mubr.f32.mxu0 0.0
    %3701 = vmatmul.mubr.f32.gmra.mrb[0].mxu0 %v3244
    %v3702 = vpop.f32.mrb[0].mxu0
    %v3703 = vadd.f32 0.0, %v3702
    %v3704 = vpop.f32.mrb[0].mxu0
    %3705 = vdwg.mxu0
    %v3706 = vadd.f32 %v3491, %v3632
    %v3707 = vadd.f32 %v3493, %v3634
    %v3708 = vadd.f32 %v3706, %v726
    %v3709 = vadd.f32 %v3707, %v730
    %v3710 = vxor.u32 %v3708, 2147483648
    %v3711 = vxor.u32 %v3709, 2147483648
    %v3712 = vmul.f32 %v3710, 1.442695
    %v3713 = vpow.pop %v3712
    %v3714 = vmul.f32 %v3711, 1.442695
    %v3715 = vpow.pop %v3714
    %v3716 = vadd.f32 %v3713, 1.0
    %v3717 = vadd.f32 %v3715, 1.0
    %v3718 = vrcp.pop %v3716
    %v3719 = vmul.f32 1.0, %v3718
    %v3720 = vrcp.pop %v3717
    %v3721 = vmul.f32 1.0, %v3720
    %v3722 = vadd.f32 %v3562, %v751
    %v3723 = vadd.f32 %v3703, %v758
    %v3724 = vmul.f32 %v3719, %v3723
    %v3725 = vadd.f32 %v3722, %v3724
    %v3726 = vtanh.pop %v3725
    %v3727 = vsub.f32 1.0, %v3721
    %v3728 = vmul.f32 %v3727, %v3726
    %v3729 = vmul.f32 %v3721, %v3244
    %v3730 = vadd.f32 %v3728, %v3729
    %vm3731 = vcmp.gt.f32.partialorder %v3258, 0.0
    %v3732 = vsel %vm3731, 1, 0
    %3733 = vset.pattern.permute.xlu0 0
    %3734 = vperm.xlu0 %3733, %v3732
    %v3735 = vpop.permute.xlu0 %3734
    %vm3736 = vcmp.eq.s32.totalorder %v3735, 1
    %v3737 = vsel %vm3736, %v3423, %v3243
    %v3738 = vsel %vm3736, %v3730, %v3244
    %3740 = vset.pattern.permute.xlu0 0
    %3741 = vperm.xlu0 %3740, %v3258
    %v3742 = vpop.permute.xlu0 %3741
    %v3744 = vmul.f32 %v3730, %v3742
    %s3745 = scalar_lea.vmem [#allocation10], 48
    %3746 = vst [vmem:[%s3745] sm:$0xff] %v3744
    %s3747 = scalar_lea.vmem [#allocation2], 168
    %v3748 = vld [vmem:[%s3747] sm:$0xff]
    %v3749 = vld [vmem:[%s3747 + $0x8] sm:$0xff]
    %v3750 = vld [vmem:[%s3747 + $0x10] sm:$0xff]
    %s3751 = scalar_lea.vmem %s1, 56
    %v3752 = vld [vmem:[%s3751] sm:$0xff]
    %3753 = vmatprep.subr.mxu0 %v101
    %3754 = vmatpush1.msra.mxu0 %v100
    %3755 = vmatprep.subr.mxu0 %v104
    %3756 = vmatpush1.msra.mxu0 %v103
    %3757 = vmatprep.subr.mxu0 %v107
    %3758 = vmatpush1.msra.mxu0 %v106
    %3759 = vmatprep.subr.mxu0 %v110
    %3760 = vmatpush1.msra.mxu0 %v109
    %3761 = vmatprep.subr.mxu0 %v113
    %3762 = vmatpush1.msra.mxu0 %v112
    %3763 = vmatprep.subr.mxu0 %v116
    %3764 = vmatpush1.msra.mxu0 %v115
    %3765 = vmatprep.subr.mxu0 %v119
    %3766 = vmatpush1.msra.mxu0 %v118
    %3767 = vmatprep.subr.mxu0 %v122
    %3768 = vmatpush1.msra.mxu0 %v121
    %3769 = vmatprep.subr.mxu0 %v125
    %3770 = vmatpush1.msra.mxu0 %v124
    %3771 = vmatprep.subr.mxu0 %v128
    %3772 = vmatpush1.msra.mxu0 %v127
    %3773 = vmatprep.subr.mxu0 %v131
    %3774 = vmatpush1.msra.mxu0 %v130
    %3775 = vmatprep.subr.mxu0 %v134
    %3776 = vmatpush1.msra.mxu0 %v133
    %3777 = vmatprep.subr.mxu0 %v137
    %3778 = vmatpush1.msra.mxu0 %v136
    %3779 = vmatprep.subr.mxu0 %v140
    %3780 = vmatpush1.msra.mxu0 %v139
    %3781 = vmatprep.subr.mxu0 %v143
    %3782 = vmatpush1.msra.mxu0 %v142
    %3783 = vmatprep.subr.mxu0 %v146
    %3784 = vmatpush1.msra.mxu0 %v145
    %3785 = vmatprep.subr.mxu0 0.0
    %3786 = vmatpush1.msra.mxu0 0.0
    %3787 = vmatprep.subr.mxu0 0.0
    %3788 = vmatpush1.msra.mxu0 0.0
    %3789 = vmatprep.subr.mxu0 0.0
    %3790 = vmatpush1.msra.mxu0 0.0
    %3791 = vmatprep.subr.mxu0 0.0
    %3792 = vmatpush1.msra.mxu0 0.0
    %3793 = vmatprep.subr.mxu0 0.0
    %3794 = vmatpush1.msra.mxu0 0.0
    %3795 = vmatprep.subr.mxu0 0.0
    %3796 = vmatpush1.msra.mxu0 0.0
    %3797 = vmatprep.subr.mxu0 0.0
    %3798 = vmatpush1.msra.mxu0 0.0
    %3799 = vmatprep.subr.mxu0 0.0
    %3800 = vmatpush1.msra.mxu0 0.0
    %3801 = vmatprep.subr.mxu0 0.0
    %3802 = vmatpush1.msra.mxu0 0.0
    %3803 = vmatprep.subr.mxu0 0.0
    %3804 = vmatpush1.msra.mxu0 0.0
    %3805 = vmatprep.subr.mxu0 0.0
    %3806 = vmatpush1.msra.mxu0 0.0
    %3807 = vmatprep.subr.mxu0 0.0
    %3808 = vmatpush1.msra.mxu0 0.0
    %3809 = vmatprep.subr.mxu0 0.0
    %3810 = vmatpush1.msra.mxu0 0.0
    %3811 = vmatprep.subr.mxu0 0.0
    %3812 = vmatpush1.msra.mxu0 0.0
    %3813 = vmatprep.subr.mxu0 0.0
    %3814 = vmatpush1.msra.mxu0 0.0
    %3815 = vmatprep.subr.mxu0 0.0
    %3816 = vmatpush1.msra.mxu0 0.0
    %3817 = vmatprep.mubr.f32.mxu0 0.0
    %3818 = vmatmul.mubr.f32.gmra.mrb[0].mxu0 %v3737
    %v3819 = vpop.f32.mrb[0].mxu0
    %v3820 = vadd.f32 0.0, %v3819
    %v3821 = vpop.f32.mrb[0].mxu0
    %v3822 = vadd.f32 0.0, %v3821
    %3823 = vdwg.mxu0
    %3824 = vmatprep.subr.mxu0 0.0
    %3825 = vmatpush1.msra.mxu0 %v102
    %3826 = vmatprep.subr.mxu0 0.0
    %3827 = vmatpush1.msra.mxu0 %v105
    %3828 = vmatprep.subr.mxu0 0.0
    %3829 = vmatpush1.msra.mxu0 %v108
    %3830 = vmatprep.subr.mxu0 0.0
    %3831 = vmatpush1.msra.mxu0 %v111
    %3832 = vmatprep.subr.mxu0 0.0
    %3833 = vmatpush1.msra.mxu0 %v114
    %3834 = vmatprep.subr.mxu0 0.0
    %3835 = vmatpush1.msra.mxu0 %v117
    %3836 = vmatprep.subr.mxu0 0.0
    %3837 = vmatpush1.msra.mxu0 %v120
    %3838 = vmatprep.subr.mxu0 0.0
    %3839 = vmatpush1.msra.mxu0 %v123
    %3840 = vmatprep.subr.mxu0 0.0
    %3841 = vmatpush1.msra.mxu0 %v126
    %3842 = vmatprep.subr.mxu0 0.0
    %3843 = vmatpush1.msra.mxu0 %v129
    %3844 = vmatprep.subr.mxu0 0.0
    %3845 = vmatpush1.msra.mxu0 %v132
    %3846 = vmatprep.subr.mxu0 0.0
    %3847 = vmatpush1.msra.mxu0 %v135
    %3848 = vmatprep.subr.mxu0 0.0
    %3849 = vmatpush1.msra.mxu0 %v138
    %3850 = vmatprep.subr.mxu0 0.0
    %3851 = vmatpush1.msra.mxu0 %v141
    %3852 = vmatprep.subr.mxu0 0.0
    %3853 = vmatpush1.msra.mxu0 %v144
    %3854 = vmatprep.subr.mxu0 0.0
    %3855 = vmatpush1.msra.mxu0 %v147
    %3856 = vmatprep.subr.mxu0 0.0
    %3857 = vmatpush1.msra.mxu0 0.0
    %3858 = vmatprep.subr.mxu0 0.0
    %3859 = vmatpush1.msra.mxu0 0.0
    %3860 = vmatprep.subr.mxu0 0.0
    %3861 = vmatpush1.msra.mxu0 0.0
    %3862 = vmatprep.subr.mxu0 0.0
    %3863 = vmatpush1.msra.mxu0 0.0
    %3864 = vmatprep.subr.mxu0 0.0
    %3865 = vmatpush1.msra.mxu0 0.0
    %3866 = vmatprep.subr.mxu0 0.0
    %3867 = vmatpush1.msra.mxu0 0.0
    %3868 = vmatprep.subr.mxu0 0.0
    %3869 = vmatpush1.msra.mxu0 0.0
    %3870 = vmatprep.subr.mxu0 0.0
    %3871 = vmatpush1.msra.mxu0 0.0
    %3872 = vmatprep.subr.mxu0 0.0
    %3873 = vmatpush1.msra.mxu0 0.0
    %3874 = vmatprep.subr.mxu0 0.0
    %3875 = vmatpush1.msra.mxu0 0.0
    %3876 = vmatprep.subr.mxu0 0.0
    %3877 = vmatpush1.msra.mxu0 0.0
    %3878 = vmatprep.subr.mxu0 0.0
    %3879 = vmatpush1.msra.mxu0 0.0
    %3880 = vmatprep.subr.mxu0 0.0
    %3881 = vmatpush1.msra.mxu0 0.0
    %3882 = vmatprep.subr.mxu0 0.0
    %3883 = vmatpush1.msra.mxu0 0.0
    %3884 = vmatprep.subr.mxu0 0.0
    %3885 = vmatpush1.msra.mxu0 0.0
    %3886 = vmatprep.subr.mxu0 0.0
    %3887 = vmatpush1.msra.mxu0 0.0
    %3888 = vmatprep.mubr.f32.mxu0 0.0
    %3889 = vmatmul.mubr.f32.gmra.mrb[0].mxu0 %v3737
    %v3890 = vpop.f32.mrb[0].mxu0
    %v3891 = vadd.f32 0.0, %v3890
    %v3892 = vpop.f32.mrb[0].mxu0
    %3893 = vdwg.mxu0
    %v3894 = vadd.f32 %v3748, %v3820
    %v3895 = vadd.f32 %v3749, %v3822
    %v3896 = vadd.f32 %v3894, %v403
    %v3897 = vadd.f32 %v3895, %v407
    %v3898 = vxor.u32 %v3896, 2147483648
    %v3899 = vxor.u32 %v3897, 2147483648
    %v3900 = vmul.f32 %v3898, 1.442695
    %v3901 = vpow.pop %v3900
    %v3902 = vmul.f32 %v3899, 1.442695
    %v3903 = vpow.pop %v3902
    %v3904 = vadd.f32 %v3901, 1.0
    %v3905 = vadd.f32 %v3903, 1.0
    %v3906 = vrcp.pop %v3904
    %v3907 = vmul.f32 1.0, %v3906
    %v3908 = vrcp.pop %v3905
    %v3909 = vmul.f32 1.0, %v3908
    %v3910 = vadd.f32 %v3891, %v428
    %v3911 = vmul.f32 %v3907, %v3910
    %v3912 = vadd.f32 %v3750, %v3911
    %v3913 = vtanh.pop %v3912
    %v3914 = vsub.f32 1.0, %v3909
    %v3915 = vmul.f32 %v3914, %v3913
    %v3916 = vmul.f32 %v3909, %v3737
    %v3917 = vadd.f32 %v3915, %v3916
    %3918 = vmatprep.subr.mxu0 %v149
    %3919 = vmatpush1.msra.mxu0 %v148
    %3920 = vmatprep.subr.mxu0 %v152
    %3921 = vmatpush1.msra.mxu0 %v151
    %3922 = vmatprep.subr.mxu0 %v155
    %3923 = vmatpush1.msra.mxu0 %v154
    %3924 = vmatprep.subr.mxu0 %v158
    %3925 = vmatpush1.msra.mxu0 %v157
    %3926 = vmatprep.subr.mxu0 %v161
    %3927 = vmatpush1.msra.mxu0 %v160
    %3928 = vmatprep.subr.mxu0 %v164
    %3929 = vmatpush1.msra.mxu0 %v163
    %3930 = vmatprep.subr.mxu0 %v167
    %3931 = vmatpush1.msra.mxu0 %v166
    %3932 = vmatprep.subr.mxu0 %v170
    %3933 = vmatpush1.msra.mxu0 %v169
    %3934 = vmatprep.subr.mxu0 %v173
    %3935 = vmatpush1.msra.mxu0 %v172
    %3936 = vmatprep.subr.mxu0 %v176
    %3937 = vmatpush1.msra.mxu0 %v175
    %3938 = vmatprep.subr.mxu0 %v179
    %3939 = vmatpush1.msra.mxu0 %v178
    %3940 = vmatprep.subr.mxu0 %v182
    %3941 = vmatpush1.msra.mxu0 %v181
    %3942 = vmatprep.subr.mxu0 %v185
    %3943 = vmatpush1.msra.mxu0 %v184
    %3944 = vmatprep.subr.mxu0 %v188
    %3945 = vmatpush1.msra.mxu0 %v187
    %3946 = vmatprep.subr.mxu0 %v191
    %3947 = vmatpush1.msra.mxu0 %v190
    %3948 = vmatprep.subr.mxu0 %v194
    %3949 = vmatpush1.msra.mxu0 %v193
    %3950 = vmatprep.subr.mxu0 0.0
    %3951 = vmatpush1.msra.mxu0 0.0
    %3952 = vmatprep.subr.mxu0 0.0
    %3953 = vmatpush1.msra.mxu0 0.0
    %3954 = vmatprep.subr.mxu0 0.0
    %3955 = vmatpush1.msra.mxu0 0.0
    %3956 = vmatprep.subr.mxu0 0.0
    %3957 = vmatpush1.msra.mxu0 0.0
    %3958 = vmatprep.subr.mxu0 0.0
    %3959 = vmatpush1.msra.mxu0 0.0
    %3960 = vmatprep.subr.mxu0 0.0
    %3961 = vmatpush1.msra.mxu0 0.0
    %3962 = vmatprep.subr.mxu0 0.0
    %3963 = vmatpush1.msra.mxu0 0.0
    %3964 = vmatprep.subr.mxu0 0.0
    %3965 = vmatpush1.msra.mxu0 0.0
    %3966 = vmatprep.subr.mxu0 0.0
    %3967 = vmatpush1.msra.mxu0 0.0
    %3968 = vmatprep.subr.mxu0 0.0
    %3969 = vmatpush1.msra.mxu0 0.0
    %3970 = vmatprep.subr.mxu0 0.0
    %3971 = vmatpush1.msra.mxu0 0.0
    %3972 = vmatprep.subr.mxu0 0.0
    %3973 = vmatpush1.msra.mxu0 0.0
    %3974 = vmatprep.subr.mxu0 0.0
    %3975 = vmatpush1.msra.mxu0 0.0
    %3976 = vmatprep.subr.mxu0 0.0
    %3977 = vmatpush1.msra.mxu0 0.0
    %3978 = vmatprep.subr.mxu0 0.0
    %3979 = vmatpush1.msra.mxu0 0.0
    %3980 = vmatprep.subr.mxu0 0.0
    %3981 = vmatpush1.msra.mxu0 0.0
    %3982 = vmatprep.mubr.f32.mxu0 0.0
    %3983 = vmatmul.mubr.f32.gmra.mrb[0].mxu0 %v3917
    %v3984 = vpop.f32.mrb[0].mxu0
    %v3985 = vadd.f32 0.0, %v3984
    %v3986 = vpop.f32.mrb[0].mxu0
    %v3987 = vadd.f32 0.0, %v3986
    %3988 = vdwg.mxu0
    %3989 = vmatprep.subr.mxu0 0.0
    %3990 = vmatpush1.msra.mxu0 %v150
    %3991 = vmatprep.subr.mxu0 0.0
    %3992 = vmatpush1.msra.mxu0 %v153
    %3993 = vmatprep.subr.mxu0 0.0
    %3994 = vmatpush1.msra.mxu0 %v156
    %3995 = vmatprep.subr.mxu0 0.0
    %3996 = vmatpush1.msra.mxu0 %v159
    %3997 = vmatprep.subr.mxu0 0.0
    %3998 = vmatpush1.msra.mxu0 %v162
    %3999 = vmatprep.subr.mxu0 0.0
    %4000 = vmatpush1.msra.mxu0 %v165
    %4001 = vmatprep.subr.mxu0 0.0
    %4002 = vmatpush1.msra.mxu0 %v168
    %4003 = vmatprep.subr.mxu0 0.0
    %4004 = vmatpush1.msra.mxu0 %v171
    %4005 = vmatprep.subr.mxu0 0.0
    %4006 = vmatpush1.msra.mxu0 %v174
    %4007 = vmatprep.subr.mxu0 0.0
    %4008 = vmatpush1.msra.mxu0 %v177
    %4009 = vmatprep.subr.mxu0 0.0
    %4010 = vmatpush1.msra.mxu0 %v180
    %4011 = vmatprep.subr.mxu0 0.0
    %4012 = vmatpush1.msra.mxu0 %v183
    %4013 = vmatprep.subr.mxu0 0.0
    %4014 = vmatpush1.msra.mxu0 %v186
    %4015 = vmatprep.subr.mxu0 0.0
    %4016 = vmatpush1.msra.mxu0 %v189
    %4017 = vmatprep.subr.mxu0 0.0
    %4018 = vmatpush1.msra.mxu0 %v192
    %4019 = vmatprep.subr.mxu0 0.0
    %4020 = vmatpush1.msra.mxu0 %v195
    %4021 = vmatprep.subr.mxu0 0.0
    %4022 = vmatpush1.msra.mxu0 0.0
    %4023 = vmatprep.subr.mxu0 0.0
    %4024 = vmatpush1.msra.mxu0 0.0
    %4025 = vmatprep.subr.mxu0 0.0
    %4026 = vmatpush1.msra.mxu0 0.0
    %4027 = vmatprep.subr.mxu0 0.0
    %4028 = vmatpush1.msra.mxu0 0.0
    %4029 = vmatprep.subr.mxu0 0.0
    %4030 = vmatpush1.msra.mxu0 0.0
    %4031 = vmatprep.subr.mxu0 0.0
    %4032 = vmatpush1.msra.mxu0 0.0
    %4033 = vmatprep.subr.mxu0 0.0
    %4034 = vmatpush1.msra.mxu0 0.0
    %4035 = vmatprep.subr.mxu0 0.0
    %4036 = vmatpush1.msra.mxu0 0.0
    %4037 = vmatprep.subr.mxu0 0.0
    %4038 = vmatpush1.msra.mxu0 0.0
    %4039 = vmatprep.subr.mxu0 0.0
    %4040 = vmatpush1.msra.mxu0 0.0
    %4041 = vmatprep.subr.mxu0 0.0
    %4042 = vmatpush1.msra.mxu0 0.0
    %4043 = vmatprep.subr.mxu0 0.0
    %4044 = vmatpush1.msra.mxu0 0.0
    %4045 = vmatprep.subr.mxu0 0.0
    %4046 = vmatpush1.msra.mxu0 0.0
    %4047 = vmatprep.subr.mxu0 0.0
    %4048 = vmatpush1.msra.mxu0 0.0
    %4049 = vmatprep.subr.mxu0 0.0
    %4050 = vmatpush1.msra.mxu0 0.0
    %4051 = vmatprep.subr.mxu0 0.0
    %4052 = vmatpush1.msra.mxu0 0.0
    %4053 = vmatprep.mubr.f32.mxu0 0.0
    %4054 = vmatmul.mubr.f32.gmra.mrb[0].mxu0 %v3917
    %v4055 = vpop.f32.mrb[0].mxu0
    %v4056 = vadd.f32 0.0, %v4055
    %v4057 = vpop.f32.mrb[0].mxu0
    %4058 = vdwg.mxu0
    %4059 = vmatprep.subr.mxu0 %v197
    %4060 = vmatpush1.msra.mxu0 %v196
    %4061 = vmatprep.subr.mxu0 %v200
    %4062 = vmatpush1.msra.mxu0 %v199
    %4063 = vmatprep.subr.mxu0 %v203
    %4064 = vmatpush1.msra.mxu0 %v202
    %4065 = vmatprep.subr.mxu0 %v206
    %4066 = vmatpush1.msra.mxu0 %v205
    %4067 = vmatprep.subr.mxu0 %v209
    %4068 = vmatpush1.msra.mxu0 %v208
    %4069 = vmatprep.subr.mxu0 %v212
    %4070 = vmatpush1.msra.mxu0 %v211
    %4071 = vmatprep.subr.mxu0 %v215
    %4072 = vmatpush1.msra.mxu0 %v214
    %4073 = vmatprep.subr.mxu0 %v218
    %4074 = vmatpush1.msra.mxu0 %v217
    %4075 = vmatprep.subr.mxu0 %v221
    %4076 = vmatpush1.msra.mxu0 %v220
    %4077 = vmatprep.subr.mxu0 %v224
    %4078 = vmatpush1.msra.mxu0 %v223
    %4079 = vmatprep.subr.mxu0 %v227
    %4080 = vmatpush1.msra.mxu0 %v226
    %4081 = vmatprep.subr.mxu0 %v230
    %4082 = vmatpush1.msra.mxu0 %v229
    %4083 = vmatprep.subr.mxu0 %v233
    %4084 = vmatpush1.msra.mxu0 %v232
    %4085 = vmatprep.subr.mxu0 %v236
    %4086 = vmatpush1.msra.mxu0 %v235
    %4087 = vmatprep.subr.mxu0 %v239
    %4088 = vmatpush1.msra.mxu0 %v238
    %4089 = vmatprep.subr.mxu0 %v242
    %4090 = vmatpush1.msra.mxu0 %v241
    %4091 = vmatprep.subr.mxu0 0.0
    %4092 = vmatpush1.msra.mxu0 0.0
    %4093 = vmatprep.subr.mxu0 0.0
    %4094 = vmatpush1.msra.mxu0 0.0
    %4095 = vmatprep.subr.mxu0 0.0
    %4096 = vmatpush1.msra.mxu0 0.0
    %4097 = vmatprep.subr.mxu0 0.0
    %4098 = vmatpush1.msra.mxu0 0.0
    %4099 = vmatprep.subr.mxu0 0.0
    %4100 = vmatpush1.msra.mxu0 0.0
    %4101 = vmatprep.subr.mxu0 0.0
    %4102 = vmatpush1.msra.mxu0 0.0
    %4103 = vmatprep.subr.mxu0 0.0
    %4104 = vmatpush1.msra.mxu0 0.0
    %4105 = vmatprep.subr.mxu0 0.0
    %4106 = vmatpush1.msra.mxu0 0.0
    %4107 = vmatprep.subr.mxu0 0.0
    %4108 = vmatpush1.msra.mxu0 0.0
    %4109 = vmatprep.subr.mxu0 0.0
    %4110 = vmatpush1.msra.mxu0 0.0
    %4111 = vmatprep.subr.mxu0 0.0
    %4112 = vmatpush1.msra.mxu0 0.0
    %4113 = vmatprep.subr.mxu0 0.0
    %4114 = vmatpush1.msra.mxu0 0.0
    %4115 = vmatprep.subr.mxu0 0.0
    %4116 = vmatpush1.msra.mxu0 0.0
    %4117 = vmatprep.subr.mxu0 0.0
    %4118 = vmatpush1.msra.mxu0 0.0
    %4119 = vmatprep.subr.mxu0 0.0
    %4120 = vmatpush1.msra.mxu0 0.0
    %4121 = vmatprep.subr.mxu0 0.0
    %4122 = vmatpush1.msra.mxu0 0.0
    %4123 = vmatprep.mubr.f32.mxu0 0.0
    %4124 = vmatmul.mubr.f32.gmra.mrb[0].mxu0 %v3738
    %v4125 = vpop.f32.mrb[0].mxu0
    %v4126 = vadd.f32 0.0, %v4125
    %v4127 = vpop.f32.mrb[0].mxu0
    %v4128 = vadd.f32 0.0, %v4127
    %4129 = vdwg.mxu0
    %4130 = vmatprep.subr.mxu0 0.0
    %4131 = vmatpush1.msra.mxu0 %v198
    %4132 = vmatprep.subr.mxu0 0.0
    %4133 = vmatpush1.msra.mxu0 %v201
    %4134 = vmatprep.subr.mxu0 0.0
    %4135 = vmatpush1.msra.mxu0 %v204
    %4136 = vmatprep.subr.mxu0 0.0
    %4137 = vmatpush1.msra.mxu0 %v207
    %4138 = vmatprep.subr.mxu0 0.0
    %4139 = vmatpush1.msra.mxu0 %v210
    %4140 = vmatprep.subr.mxu0 0.0
    %4141 = vmatpush1.msra.mxu0 %v213
    %4142 = vmatprep.subr.mxu0 0.0
    %4143 = vmatpush1.msra.mxu0 %v216
    %4144 = vmatprep.subr.mxu0 0.0
    %4145 = vmatpush1.msra.mxu0 %v219
    %4146 = vmatprep.subr.mxu0 0.0
    %4147 = vmatpush1.msra.mxu0 %v222
    %4148 = vmatprep.subr.mxu0 0.0
    %4149 = vmatpush1.msra.mxu0 %v225
    %4150 = vmatprep.subr.mxu0 0.0
    %4151 = vmatpush1.msra.mxu0 %v228
    %4152 = vmatprep.subr.mxu0 0.0
    %4153 = vmatpush1.msra.mxu0 %v231
    %4154 = vmatprep.subr.mxu0 0.0
    %4155 = vmatpush1.msra.mxu0 %v234
    %4156 = vmatprep.subr.mxu0 0.0
    %4157 = vmatpush1.msra.mxu0 %v237
    %4158 = vmatprep.subr.mxu0 0.0
    %4159 = vmatpush1.msra.mxu0 %v240
    %4160 = vmatprep.subr.mxu0 0.0
    %4161 = vmatpush1.msra.mxu0 %v243
    %4162 = vmatprep.subr.mxu0 0.0
    %4163 = vmatpush1.msra.mxu0 0.0
    %4164 = vmatprep.subr.mxu0 0.0
    %4165 = vmatpush1.msra.mxu0 0.0
    %4166 = vmatprep.subr.mxu0 0.0
    %4167 = vmatpush1.msra.mxu0 0.0
    %4168 = vmatprep.subr.mxu0 0.0
    %4169 = vmatpush1.msra.mxu0 0.0
    %4170 = vmatprep.subr.mxu0 0.0
    %4171 = vmatpush1.msra.mxu0 0.0
    %4172 = vmatprep.subr.mxu0 0.0
    %4173 = vmatpush1.msra.mxu0 0.0
    %4174 = vmatprep.subr.mxu0 0.0
    %4175 = vmatpush1.msra.mxu0 0.0
    %4176 = vmatprep.subr.mxu0 0.0
    %4177 = vmatpush1.msra.mxu0 0.0
    %4178 = vmatprep.subr.mxu0 0.0
    %4179 = vmatpush1.msra.mxu0 0.0
    %4180 = vmatprep.subr.mxu0 0.0
    %4181 = vmatpush1.msra.mxu0 0.0
    %4182 = vmatprep.subr.mxu0 0.0
    %4183 = vmatpush1.msra.mxu0 0.0
    %4184 = vmatprep.subr.mxu0 0.0
    %4185 = vmatpush1.msra.mxu0 0.0
    %4186 = vmatprep.subr.mxu0 0.0
    %4187 = vmatpush1.msra.mxu0 0.0
    %4188 = vmatprep.subr.mxu0 0.0
    %4189 = vmatpush1.msra.mxu0 0.0
    %4190 = vmatprep.subr.mxu0 0.0
    %4191 = vmatpush1.msra.mxu0 0.0
    %4192 = vmatprep.subr.mxu0 0.0
    %4193 = vmatpush1.msra.mxu0 0.0
    %4194 = vmatprep.mubr.f32.mxu0 0.0
    %4195 = vmatmul.mubr.f32.gmra.mrb[0].mxu0 %v3738
    %v4196 = vpop.f32.mrb[0].mxu0
    %v4197 = vadd.f32 0.0, %v4196
    %v4198 = vpop.f32.mrb[0].mxu0
    %4199 = vdwg.mxu0
    %v4200 = vadd.f32 %v3985, %v4126
    %v4201 = vadd.f32 %v3987, %v4128
    %v4202 = vadd.f32 %v4200, %v726
    %v4203 = vadd.f32 %v4201, %v730
    %v4204 = vxor.u32 %v4202, 2147483648
    %v4205 = vxor.u32 %v4203, 2147483648
    %v4206 = vmul.f32 %v4204, 1.442695
    %v4207 = vpow.pop %v4206
    %v4208 = vmul.f32 %v4205, 1.442695
    %v4209 = vpow.pop %v4208
    %v4210 = vadd.f32 %v4207, 1.0
    %v4211 = vadd.f32 %v4209, 1.0
    %v4212 = vrcp.pop %v4210
    %v4213 = vmul.f32 1.0, %v4212
    %v4214 = vrcp.pop %v4211
    %v4215 = vmul.f32 1.0, %v4214
    %v4216 = vadd.f32 %v4056, %v751
    %v4217 = vadd.f32 %v4197, %v758
    %v4218 = vmul.f32 %v4213, %v4217
    %v4219 = vadd.f32 %v4216, %v4218
    %v4220 = vtanh.pop %v4219
    %v4221 = vsub.f32 1.0, %v4215
    %v4222 = vmul.f32 %v4221, %v4220
    %v4223 = vmul.f32 %v4215, %v3738
    %v4224 = vadd.f32 %v4222, %v4223
    %vm4225 = vcmp.gt.f32.partialorder %v3752, 0.0
    %v4226 = vsel %vm4225, 1, 0
    %4227 = vset.pattern.permute.xlu0 0
    %4228 = vperm.xlu0 %4227, %v4226
    %v4229 = vpop.permute.xlu0 %4228
    %vm4230 = vcmp.eq.s32.totalorder %v4229, 1
    %v4231 = vsel %vm4230, %v3917, %v3737
    %v4232 = vsel %vm4230, %v4224, %v3738
    %4234 = vset.pattern.permute.xlu0 0
    %4235 = vperm.xlu0 %4234, %v3752
    %v4236 = vpop.permute.xlu0 %4235
    %v4238 = vmul.f32 %v4224, %v4236
    %s4239 = scalar_lea.vmem [#allocation10], 56
    %4240 = vst [vmem:[%s4239] sm:$0xff] %v4238
    %4241 = vst [vmem:[#allocation11] sm:$0xff] %v4231
    %4242 = vst [vmem:[%s250] sm:$0xff] %v4232
    // Predicated region
    $region62: #{tpu_custom_call.1} parent=1 // pred_check
      _
    $region63: #{tpu_custom_call.1} parent=1 // pred_check_branch
      %4244 = sbr.rel (0) target = $region65
    $region64: #{tpu_custom_call.1} parent=1 // pred_region
      %s4246 = ssub.s32 1024, 1024
      %4247 = vsyncadd [#allocation4], %s4246
      %s4248 = sshll.u32 [#allocation10], 4
      %s4249 = int_to_ptr.vmem [resolvable:$true] %s4248
      %4254 = dma.vmem_to_hbm [thread:$0]  %s4249, 1024, %s10, [#allocation4], 128, 128, 8
    $region65: #{tpu_custom_call.1} parent=1 // pred_fallthru
      _
    // Predicated region
    $region66: #{tpu_custom_call.1} parent=1 // pred_check
      _
    $region67: #{tpu_custom_call.1} parent=1 // pred_check_branch
      %4256 = sbr.rel (0) target = $region69
    $region68: #{tpu_custom_call.1} parent=1 // pred_region
      %s4258 = ssub.s32 256, 256
      %4259 = vsyncadd [#allocation12], %s4258
      %s4260 = sshll.u32 [#allocation11], 4
      %s4261 = int_to_ptr.vmem [resolvable:$true] %s4260
      %4266 = dma.vmem_to_hbm [thread:$0]  %s4261, 256, %s11, [#allocation12], 128, 128, 8
    $region69: #{tpu_custom_call.1} parent=1 // pred_fallthru
      _
    // Predicated region
    $region70: #{tpu_custom_call.1} parent=1 // pred_check
      _
    $region71: #{tpu_custom_call.1} parent=1 // pred_check_branch
      %4268 = sbr.rel (0) target = $region73
    $region72: #{tpu_custom_call.1} parent=1 // pred_region
      %4269 = dma.done [#allocation4], 1024
    $region73: #{tpu_custom_call.1} parent=1 // pred_fallthru
      _
    // Predicated region
    $region74: #{tpu_custom_call.1} parent=1 // pred_check
      _
    $region75: #{tpu_custom_call.1} parent=1 // pred_check_branch
      %4271 = sbr.rel (0) target = $region77
    $region76: #{tpu_custom_call.1} parent=1 // pred_region
      %4272 = dma.done [#allocation12], 256
    $region77: #{tpu_custom_call.1} parent=1 // pred_fallthru
      _
    %4273 = vsyncpa [#allocation3], 1
    %4274 = vsyncpa [#allocation6], 1
    %4275 = vsyncpa [#allocation9], 1
    %4276 = vsyncpa [#allocation4], 1
    %4277 = vsyncpa [#allocation12], 1

</llo_original>
